<compile_context>
chip_gen: v7x
topology: tpu7x:2x2x1
jax: 0.10.0
libtpu: 0.0.40
codegen_flags: <defaults>
</compile_context>

<pallas_src>
import functools

import jax
import jax.numpy as jnp
from jax import lax
from jax.experimental import pallas as pl
from jax.experimental.pallas import tpu as pltpu


def _round_up(v: int, m: int) -> int:
    return (v + m - 1) // m * m


def gnn_graphpred_kernel(
    # inputs
    x_ref,        # (tn, F)          node-feature row tile (only valid at l==0, i==0)
    a_ref,        # (tn, tn)         int8 adjacency tile (edge counts + self loop)
    ea_ref,       # (tn, EF)         per-node sum of incoming edge_attr, row tile i
    deg_ref,      # (tn, 1)          (#incoming edges + 1), 0 on padded rows
    p_ref,        # (G_pad, tn)      mean-pool matrix, column slice for row tile i
    w0_ref,       # (F, E_pad)
    b0_ref,       # (1, E_pad)
    we_ref,       # (1, EF, E_pad)   layer-l slices (streamed per layer)
    be_ref,       # (1, 1, E_pad)
    w1_ref,       # (1, E_pad, H_pad)
    b1_ref,       # (1, 1, H_pad)
    w2_ref,       # (1, H_pad, E_pad)
    b2_ref,       # (1, 1, E_pad)
    gamma_ref,    # (1, 1, E_pad)
    beta_ref,     # (1, 1, E_pad)
    wp_ref,       # (E_pad, T_pad)
    bp_ref,       # (1, T_pad)
    # output
    out_ref,      # (G_pad, T_pad)
    # scratch (persist across the whole grid)
    hbuf,         # (2*N_pad, E_pad) bf16 ping-pong node state (slot = layer parity)
    agg_sc,       # (tn, E_pad)      f32 per-row-tile GIN aggregate
    bn_acc,       # (2, E_pad)       f32 masked sum / sum-of-squares
    bn_aff,       # (2, E_pad)       f32 folded BN affine of the previous layer
    pooled_sc,    # (G_pad, E_pad)   f32 pooled pre-BN representation (last layer)
    *,
    num_layer: int,
    n_real: int,
    n_pad: int,
    tn: int,
):
    f32 = jnp.float32
    l = pl.program_id(0)            # layer
    i = pl.program_id(1)            # destination-row tile of A
    k = pl.program_id(2)            # source-column tile of A (contraction)
    last_i = pl.num_programs(1) - 1
    last_k = pl.num_programs(2) - 1

    in_base = (l % 2) * n_pad       # ping-pong slot holding this layer's input
    out_base = ((l + 1) % 2) * n_pad
    col = pl.multiple_of(k * tn, tn)
    row = pl.multiple_of(i * tn, tn)

    # --- one-time init of cross-layer accumulators ---
    @pl.when((l == 0) & (i == 0) & (k == 0))
    def _():
        bn_acc[...] = jnp.zeros_like(bn_acc)
        pooled_sc[...] = jnp.zeros_like(pooled_sc)

    # --- materialize this layer's input column tile k (once per layer, at i == 0) ---
    # layer 0: h0 = x @ W0 + b0 ; layer l>0: ReLU(BN_{l-1}(h_pre)) via folded affine.
    @pl.when((i == 0) & (l == 0))
    def _():
        h0 = jnp.dot(x_ref[...], w0_ref[...], preferred_element_type=f32) + b0_ref[...]
        hbuf[pl.ds(pl.multiple_of(in_base + col, tn), tn), :] = h0.astype(hbuf.dtype)

    @pl.when((i == 0) & (l > 0))
    def _():
        pre = hbuf[pl.ds(pl.multiple_of(in_base + col, tn), tn), :].astype(f32)
        post = jnp.maximum(pre * bn_aff[0:1, :] + bn_aff[1:2, :], 0.0)
        hbuf[pl.ds(pl.multiple_of(in_base + col, tn), tn), :] = post.astype(hbuf.dtype)

    # --- per-row-tile aggregate init at k == 0: GIN edge term for row tile i ---
    @pl.when(k == 0)
    def _():
        agg_sc[...] = (
            jnp.dot(ea_ref[...], we_ref[0], preferred_element_type=f32)
            + deg_ref[...] * be_ref[0]
        )

    # --- neighbor aggregation: agg += A[i, k] @ h_in[k]  (bf16 x bf16 -> f32 MXU) ---
    h_col = hbuf[pl.ds(pl.multiple_of(in_base + col, tn), tn), :]
    agg_sc[...] += jnp.dot(
        a_ref[...].astype(jnp.bfloat16), h_col, preferred_element_type=f32
    )

    # --- row-tile finalize at k == last_k: GIN MLP, BN stats, (last layer) pooling ---
    @pl.when(k == last_k)
    def _():
        agg = agg_sc[...]
        hid = jnp.maximum(
            jnp.dot(agg, w1_ref[0], preferred_element_type=f32) + b1_ref[0], 0.0
        )
        h_new = jnp.dot(hid, w2_ref[0], preferred_element_type=f32) + b2_ref[0]

        # masked BatchNorm batch statistics (exclude zero-padded rows)
        rid = lax.broadcasted_iota(jnp.int32, (tn, 1), 0) + i * tn
        m = (rid < n_real).astype(f32)
        hm = h_new * m
        bn_acc[0:1, :] += jnp.sum(hm, axis=0, keepdims=True)
        bn_acc[1:2, :] += jnp.sum(hm * h_new, axis=0, keepdims=True)

        # stash pre-BN output as the next layer's input (bf16 ping-pong slot)
        hbuf[pl.ds(pl.multiple_of(out_base + row, tn), tn), :] = h_new.astype(hbuf.dtype)

        # last layer: accumulate mean pooling of the pre-BN output (BN folded below)
        @pl.when(l == num_layer - 1)
        def _():
            pooled_sc[...] += jnp.dot(p_ref[...], h_new, preferred_element_type=f32)

    # --- layer finalize: fold BN + gamma/beta into (scale, shift); emit output ---
    @pl.when((i == last_i) & (k == last_k))
    def _():
        inv_n = 1.0 / float(n_real)
        mean = bn_acc[0:1, :] * inv_n
        var = bn_acc[1:2, :] * inv_n - mean * mean           # biased batch variance
        scale = lax.rsqrt(var + 1e-5) * gamma_ref[0]
        shift = beta_ref[0] - mean * scale
        bn_aff[0:1, :] = scale
        bn_aff[1:2, :] = shift
        bn_acc[...] = jnp.zeros_like(bn_acc)                 # ready for the next layer

        # final layer: BN-correct the pooled representation (pool rows sum to 1 for
        # real graphs; padded-graph rows are sliced off in the wrapper) + head.
        @pl.when(l == num_layer - 1)
        def _():
            rep = pooled_sc[...] * scale + shift
            out_ref[...] = (
                jnp.dot(rep, wp_ref[...], preferred_element_type=f32) + bp_ref[...]
            ).astype(out_ref.dtype)


def gnn_graphpred_forward(
    x, edge_index, edge_attr, batch, params, *, num_graphs, tile_n=512
):
    """Builds padded operands and runs the tiled Pallas kernel."""
    f32 = jnp.float32
    N, F = x.shape
    EF = edge_attr.shape[1]
    L, E, H = params["w1"].shape            # (layers, emb, 2*emb)
    T = params["wp"].shape[1]

    tn = max(128, int(tile_n))              # A tile: multiples of (8, 128)
    E_pad = _round_up(E, 128)
    H_pad = _round_up(H, 128)
    T_pad = _round_up(T, 128)
    G_pad = _round_up(max(num_graphs, 1), 8)
    N_pad = _round_up(max(N, 1), tn)
    NT = N_pad // tn

    src = edge_index[0]
    dst = edge_index[1]
    node_mask = (jnp.arange(N_pad) < N).astype(f32)

    # dense adjacency with self loops, int8 edge counts: A[i, j] = #edges j->i (+1 diag)
    A = jnp.zeros((N_pad, N_pad), jnp.int32).at[dst, src].add(1)
    A = A.at[jnp.arange(N), jnp.arange(N)].add(1)
    try:
        max_count = int(jnp.max(A))
    except Exception:                       # under jit / tracing: skip eager check
        max_count = None
    assert max_count is None or max_count <= 127, "edge multiplicity too large for int8 A"
    A = A.astype(jnp.int8)

    # per-node sum of incoming edge_attr (self-loop attrs are zeros -> omitted)
    EA = jnp.zeros((N_pad, EF), f32).at[dst].add(edge_attr.astype(f32))
    # (#incoming edges + 1) per real node; 0 on padded rows
    deg1 = ((jnp.zeros((N_pad,), f32).at[dst].add(1.0) + node_mask) * node_mask).reshape(
        N_pad, 1
    )

    # mean-pool matrix P[g, i] = 1/|graph g| for real nodes of graph g
    batch_pad = jnp.concatenate(
        [batch.astype(jnp.int32), jnp.full((N_pad - N,), -1, jnp.int32)]
    )
    onehot = (batch_pad[None, :] == jnp.arange(G_pad)[:, None]).astype(f32)
    counts = jnp.maximum(onehot.sum(axis=1, keepdims=True), 1.0)
    P = onehot / counts                      # (G_pad, N_pad), rows sum to 1 for real graphs

    # zero-padded parameters (weights pre-transposed to (in, out))
    def pad2(a, r, c):
        return jnp.zeros((r, c), f32).at[: a.shape[0], : a.shape[1]].set(a)

    def pad3(a, r, c):
        return jnp.zeros((a.shape[0], r, c), f32).at[:, : a.shape[1], : a.shape[2]].set(a)

    w0 = pad2(params["w0"], F, E_pad)
    b0 = pad2(params["b0"], 1, E_pad)
    we = pad3(params["we"], EF, E_pad)
    be = pad3(params["be"], 1, E_pad)
    w1 = pad3(params["w1"], E_pad, H_pad)
    b1 = pad3(params["b1"], 1, H_pad)
    w2 = pad3(params["w2"], H_pad, E_pad)
    b2 = pad3(params["b2"], 1, E_pad)
    gamma = pad3(params["gamma"], 1, E_pad)
    beta = pad3(params["beta"], 1, E_pad)
    wp = pad2(params["wp"], E_pad, T_pad)
    bp = pad2(params["bp"], 1, T_pad)

    x_p = jnp.zeros((N_pad, F), f32).at[:N].set(x.astype(f32))

    grid = (L, NT, NT)

    # x is only needed at (l==0, i==0); keep its block index fixed elsewhere so the
    # pipeline skips redundant DMAs.
    def x_index(l, i, k):
        return (jnp.where((l == 0) & (i == 0), k, 0), 0)

    def row_tile(c):
        return pl.BlockSpec((tn, c), lambda l, i, k: (i, 0))

    def const2(r, c):
        return pl.BlockSpec((r, c), lambda l, i, k: (0, 0))

    def per_layer(r, c):
        return pl.BlockSpec((1, r, c), lambda l, i, k: (l, 0, 0))

    in_specs = [
        pl.BlockSpec((tn, F), x_index),                      # x (gated streaming)
        pl.BlockSpec((tn, tn), lambda l, i, k: (i, k)),      # A tiles (int8, pipelined)
        row_tile(EF),                                        # EA
        row_tile(1),                                         # deg + 1
        pl.BlockSpec((G_pad, tn), lambda l, i, k: (0, i)),   # pooling column slice
        const2(F, E_pad),                                    # w0
        const2(1, E_pad),                                    # b0
        per_layer(EF, E_pad),                                # we
        per_layer(1, E_pad),                                 # be
        per_layer(E_pad, H_pad),                             # w1
        per_layer(1, H_pad),                                 # b1
        per_layer(H_pad, E_pad),                             # w2
        per_layer(1, E_pad),                                 # b2
        per_layer(1, E_pad),                                 # gamma
        per_layer(1, E_pad),                                 # beta
        const2(E_pad, T_pad),                                # wp
        const2(1, T_pad),                                    # bp
    ]
    out_spec = pl.BlockSpec((G_pad, T_pad), lambda l, i, k: (0, 0))
    scratch = [
        pltpu.VMEM((2 * N_pad, E_pad), jnp.bfloat16),        # ping-pong node state
        pltpu.VMEM((tn, E_pad), f32),                        # per-row-tile GIN aggregate
        pltpu.VMEM((2, E_pad), f32),                         # BN sum / sumsq
        pltpu.VMEM((2, E_pad), f32),                         # folded BN affine
        pltpu.VMEM((G_pad, E_pad), f32),                     # pooled pre-BN representation
    ]

    # advisory cost estimate for the XLA scheduler
    flops = (
        2 * L * N_pad * N_pad * E_pad
        + 2 * L * N_pad * (EF * E_pad + E_pad * H_pad + H_pad * E_pad)
        + 2 * N_pad * F * E_pad
        + 2 * N_pad * G_pad * E_pad
        + 2 * G_pad * E_pad * T_pad
    )
    param_bytes = 4 * int(
        w0.size + b0.size + we.size + be.size + w1.size + b1.size + w2.size
        + b2.size + gamma.size + beta.size + wp.size + bp.size
    )
    bytes_accessed = (
        L * N_pad * N_pad                                    # int8 A, re-streamed per layer
        + 4 * int(x_p.size + EA.size + deg1.size) + 4 * L * int(P.size)
        + param_bytes
        + 4 * G_pad * T_pad
    )
    cost = pl.CostEstimate(
        flops=int(flops), transcendentals=int(L * E_pad), bytes_accessed=int(bytes_accessed)
    )

    # explicit scoped-VMEM budget: residents + double-buffered tiles + headroom
    per_layer_blk = 4 * (
        EF * E_pad + E_pad + E_pad * H_pad + H_pad + H_pad * E_pad + 3 * E_pad
    )
    vmem_need = (
        2 * N_pad * E_pad * 2                                # bf16 ping-pong node state
        + tn * E_pad * 4                                     # agg accumulator
        + (4 * E_pad + G_pad * E_pad) * 4                    # BN scratches + pooled
        + 2 * tn * tn                                        # int8 A tiles (x2 buffers)
        + 2 * 4 * tn * (F + EF + 1)                          # x / EA / deg tiles
        + 2 * 4 * G_pad * tn                                 # pooling column tiles
        + 2 * 4 * (F * E_pad + E_pad + E_pad * T_pad + T_pad)
        + 2 * per_layer_blk
        + 2 * 4 * G_pad * T_pad
        + tn * H_pad * 4                                     # bounded MLP hidden temp
        + (8 << 20)                                          # compiler scratch headroom
    )
    try:
        vmem_phys = int(pltpu.get_tpu_info().vmem_capacity_bytes)
    except Exception:
        vmem_phys = 64 * 1024 * 1024                         # conservative fallback (v7x)
    vmem_cap = vmem_phys * 7 // 8
    compiler_params = pltpu.CompilerParams(
        # every grid axis carries cross-tile dependencies through the resident
        # node-state scratch (layer chain, BatchNorm over all rows) -> sequential
        dimension_semantics=("arbitrary", "arbitrary", "arbitrary"),
        vmem_limit_bytes=int(min(max(vmem_need, 16 << 20), vmem_cap)),
    )

    out = pl.pallas_call(
        functools.partial(
            gnn_graphpred_kernel, num_layer=L, n_real=N, n_pad=N_pad, tn=tn
        ),
        out_shape=jax.ShapeDtypeStruct((G_pad, T_pad), f32),
        grid_spec=pltpu.PrefetchScalarGridSpec(
            num_scalar_prefetch=0,
            grid=grid,
            in_specs=in_specs,
            out_specs=out_spec,
            scratch_shapes=scratch,
        ),
        compiler_params=compiler_params,
        cost_estimate=cost,
    )(x_p, A, EA, deg1, P, w0, b0, we, be, w1, b1, w2, b2, gamma, beta, wp, bp)

    return out[:num_graphs, :T]


def reference_forward(x, edge_index, edge_attr, batch, params, *, num_graphs):
    """Pure-JAX f32 reference for validation."""
    N = x.shape[0]
    src, dst = edge_index[0], edge_index[1]
    h = x.astype(jnp.float32) @ params["w0"] + params["b0"]
    L = params["w1"].shape[0]
    for l in range(L):
        edge_emb = edge_attr.astype(jnp.float32) @ params["we"][l] + params["be"][l]
        self_loop_emb = (
            jnp.zeros((N, edge_attr.shape[1]), jnp.float32) @ params["we"][l]
            + params["be"][l]
        )
        msg = h[src] + edge_emb
        agg = jnp.zeros_like(h).at[dst].add(msg) + (h + self_loop_emb)   # self loops
        hid = jnp.maximum(agg @ params["w1"][l] + params["b1"][l], 0.0)
        h_new = hid @ params["w2"][l] + params["b2"][l]
        mean = h_new.mean(axis=0, keepdims=True)
        var = ((h_new - mean) ** 2).mean(axis=0, keepdims=True)
        h_bn = (h_new - mean) / jnp.sqrt(var + 1e-5) * params["gamma"][l] + params["beta"][l]
        h = jnp.maximum(h_bn, 0.0) if l < L - 1 else h_bn
    onehot = (batch[None, :] == jnp.arange(num_graphs)[:, None]).astype(jnp.float32)
    pooled = (onehot @ h) / jnp.maximum(onehot.sum(axis=1, keepdims=True), 1.0)
    return pooled @ params["wp"] + params["bp"]


if __name__ == "__main__":
    # small, module-consistent shapes; N > tile so the multi-tile paths are exercised
    NUM_LAYER = 2
    EMB_DIM = 32
    NODE_FEAT_DIM = 16
    EDGE_FEAT_DIM = 8
    NUM_TASKS = 4
    N_NODES = 300
    N_EDGES = 900
    N_GRAPHS = 2

    key = jax.random.PRNGKey(0)
    keys = jax.random.split(key, 16)

    # deterministic synthetic parameters (weights pre-transposed: (in, out))
    params = {
        "w0": jax.random.normal(keys[0], (NODE_FEAT_DIM, EMB_DIM), jnp.float32) * 0.1,
        "b0": jax.random.normal(keys[1], (1, EMB_DIM), jnp.float32) * 0.1,
        "we": jax.random.normal(keys[2], (NUM_LAYER, EDGE_FEAT_DIM, EMB_DIM), jnp.float32) * 0.1,
        "be": jax.random.normal(keys[3], (NUM_LAYER, 1, EMB_DIM), jnp.float32) * 0.1,
        "w1": jax.random.normal(keys[4], (NUM_LAYER, EMB_DIM, 2 * EMB_DIM), jnp.float32) * 0.1,
        "b1": jax.random.normal(keys[5], (NUM_LAYER, 1, 2 * EMB_DIM), jnp.float32) * 0.1,
        "w2": jax.random.normal(keys[6], (NUM_LAYER, 2 * EMB_DIM, EMB_DIM), jnp.float32) * 0.1,
        "b2": jax.random.normal(keys[7], (NUM_LAYER, 1, EMB_DIM), jnp.float32) * 0.1,
        "gamma": jnp.ones((NUM_LAYER, 1, EMB_DIM), jnp.float32),
        "beta": jnp.zeros((NUM_LAYER, 1, EMB_DIM), jnp.float32),
        "wp": jax.random.normal(keys[8], (EMB_DIM, NUM_TASKS), jnp.float32) * 0.1,
        "bp": jax.random.normal(keys[9], (1, NUM_TASKS), jnp.float32) * 0.1,
    }

    # deterministic synthetic graph
    x = jax.random.normal(keys[10], (N_NODES, NODE_FEAT_DIM), jnp.float32)
    src = jax.random.randint(keys[11], (N_EDGES,), 0, N_NODES, jnp.int32)
    dst = jax.random.randint(keys[12], (N_EDGES,), 0, N_NODES, jnp.int32)
    edge_index = jnp.stack([src, dst], axis=0)
    edge_attr = jax.random.normal(keys[13], (N_EDGES, EDGE_FEAT_DIM), jnp.float32)
    batch = jnp.concatenate(
        [jnp.zeros((N_NODES // 2,), jnp.int32), jnp.ones((N_NODES - N_NODES // 2,), jnp.int32)]
    )

    out = gnn_graphpred_forward(
        x, edge_index, edge_attr, batch, params, num_graphs=N_GRAPHS, tile_n=128
    )
    out = jax.block_until_ready(out)

    ref = reference_forward(x, edge_index, edge_attr, batch, params, num_graphs=N_GRAPHS)
    assert out.shape == (N_GRAPHS, NUM_TASKS)
    # bf16 node-state storage + bf16 MXU A@h (f32 accumulation) => ~1e-2-level deviation
    # from the all-f32 reference; this is the intended production precision tradeoff.
    assert jnp.allclose(out, ref, atol=5e-2, rtol=5e-2), (out, ref)
    print("KERNEL_OK")
</pallas_src>

<mosaic_0001>
module attributes {stable_mosaic.version = 11 : i64} {
  func.func @gnn_graphpred_kernel(%arg0: i32, %arg1: i32, %arg2: i32, %arg3: memref<128x16xf32, #tpu.memory_space<vmem>>, %arg4: memref<128x128xi8, #tpu.memory_space<vmem>>, %arg5: memref<128x8xf32, #tpu.memory_space<vmem>>, %arg6: memref<128x1xf32, #tpu.memory_space<vmem>>, %arg7: memref<8x128xf32, #tpu.memory_space<vmem>>, %arg8: memref<16x128xf32, #tpu.memory_space<vmem>>, %arg9: memref<1x128xf32, #tpu.memory_space<vmem>>, %arg10: memref<1x8x128xf32, #tpu.memory_space<vmem>>, %arg11: memref<1x1x128xf32, #tpu.memory_space<vmem>>, %arg12: memref<1x128x128xf32, #tpu.memory_space<vmem>>, %arg13: memref<1x1x128xf32, #tpu.memory_space<vmem>>, %arg14: memref<1x128x128xf32, #tpu.memory_space<vmem>>, %arg15: memref<1x1x128xf32, #tpu.memory_space<vmem>>, %arg16: memref<1x1x128xf32, #tpu.memory_space<vmem>>, %arg17: memref<1x1x128xf32, #tpu.memory_space<vmem>>, %arg18: memref<128x128xf32, #tpu.memory_space<vmem>>, %arg19: memref<1x128xf32, #tpu.memory_space<vmem>>, %arg20: memref<8x128xf32, #tpu.memory_space<vmem>>, %arg21: memref<768x128xbf16, #tpu.memory_space<vmem>>, %arg22: memref<128x128xf32, #tpu.memory_space<vmem>>, %arg23: memref<2x128xf32, #tpu.memory_space<vmem>>, %arg24: memref<2x128xf32, #tpu.memory_space<vmem>>, %arg25: memref<8x128xf32, #tpu.memory_space<vmem>>) attributes {dimension_semantics = [#tpu.dimension_semantics<arbitrary>, #tpu.dimension_semantics<arbitrary>, #tpu.dimension_semantics<arbitrary>], iteration_bounds = array<i64: 2, 3, 3>, scalar_prefetch = 0 : i64, scratch_operands = 5 : i64, tpu.core_type = #tpu.core_type<tc>, window_params = [{transform_indices = @transform_0, window_bounds = array<i64: 128, 16>}, {transform_indices = @transform_1, window_bounds = array<i64: 128, 128>}, {transform_indices = @transform_2, window_bounds = array<i64: 128, 8>}, {transform_indices = @transform_3, window_bounds = array<i64: 128, 1>}, {transform_indices = @transform_4, window_bounds = array<i64: 8, 128>}, {pipeline_mode = #tpu.pipeline_mode<synchronous>, transform_indices = @transform_5, window_bounds = array<i64: 16, 128>}, {pipeline_mode = #tpu.pipeline_mode<synchronous>, transform_indices = @transform_6, window_bounds = array<i64: 1, 128>}, {transform_indices = @transform_7, window_bounds = array<i64: 1, 8, 128>}, {transform_indices = @transform_8, window_bounds = array<i64: 1, 1, 128>}, {transform_indices = @transform_9, window_bounds = array<i64: 1, 128, 128>}, {transform_indices = @transform_10, window_bounds = array<i64: 1, 1, 128>}, {transform_indices = @transform_11, window_bounds = array<i64: 1, 128, 128>}, {transform_indices = @transform_12, window_bounds = array<i64: 1, 1, 128>}, {transform_indices = @transform_13, window_bounds = array<i64: 1, 1, 128>}, {transform_indices = @transform_14, window_bounds = array<i64: 1, 1, 128>}, {pipeline_mode = #tpu.pipeline_mode<synchronous>, transform_indices = @transform_15, window_bounds = array<i64: 128, 128>}, {pipeline_mode = #tpu.pipeline_mode<synchronous>, transform_indices = @transform_16, window_bounds = array<i64: 1, 128>}, {pipeline_mode = #tpu.pipeline_mode<synchronous>, transform_indices = @transform_17, window_bounds = array<i64: 8, 128>}]} {
    %c2_i32 = arith.constant 2 : i32
    %c0_i32 = arith.constant 0 : i32
    %0 = arith.cmpi eq, %c2_i32, %c0_i32 : i32
    %c1_i32 = arith.constant 1 : i32
    %1 = arith.select %0, %c1_i32, %c2_i32 : i32
    %2 = arith.remsi %arg0, %1 : i32
    %c0_i32_0 = arith.constant 0 : i32
    %3 = arith.cmpi ne, %2, %c0_i32_0 : i32
    %c0_i32_1 = arith.constant 0 : i32
    %4 = arith.cmpi slt, %2, %c0_i32_1 : i32
    %c0_i32_2 = arith.constant 0 : i32
    %5 = arith.cmpi slt, %1, %c0_i32_2 : i32
    %6 = arith.xori %4, %5 : i1
    %7 = arith.andi %6, %3 : i1
    %8 = arith.addi %2, %1 : i32
    %9 = arith.select %7, %8, %2 : i32
    %c384_i32 = arith.constant 384 : i32
    %10 = arith.muli %9, %c384_i32 : i32
    %c1_i32_3 = arith.constant 1 : i32
    %11 = arith.addi %arg0, %c1_i32_3 : i32
    %c2_i32_4 = arith.constant 2 : i32
    %c0_i32_5 = arith.constant 0 : i32
    %12 = arith.cmpi eq, %c2_i32_4, %c0_i32_5 : i32
    %c1_i32_6 = arith.constant 1 : i32
    %13 = arith.select %12, %c1_i32_6, %c2_i32_4 : i32
    %14 = arith.remsi %11, %13 : i32
    %c0_i32_7 = arith.constant 0 : i32
    %15 = arith.cmpi ne, %14, %c0_i32_7 : i32
    %c0_i32_8 = arith.constant 0 : i32
    %16 = arith.cmpi slt, %14, %c0_i32_8 : i32
    %c0_i32_9 = arith.constant 0 : i32
    %17 = arith.cmpi slt, %13, %c0_i32_9 : i32
    %18 = arith.xori %16, %17 : i1
    %19 = arith.andi %18, %15 : i1
    %20 = arith.addi %14, %13 : i32
    %21 = arith.select %19, %20, %14 : i32
    %c384_i32_10 = arith.constant 384 : i32
    %22 = arith.muli %21, %c384_i32_10 : i32
    %c128_i32 = arith.constant 128 : i32
    %23 = arith.muli %arg2, %c128_i32 : i32
    %24 = tpu.assume_multiple %23, 128 : i32
    %c128_i32_11 = arith.constant 128 : i32
    %25 = arith.muli %arg1, %c128_i32_11 : i32
    %26 = tpu.assume_multiple %25, 128 : i32
    %c0_i32_12 = arith.constant 0 : i32
    %27 = arith.cmpi eq, %arg0, %c0_i32_12 : i32
    %c0_i32_13 = arith.constant 0 : i32
    %28 = arith.cmpi eq, %arg1, %c0_i32_13 : i32
    %29 = arith.andi %27, %28 : i1
    %c0_i32_14 = arith.constant 0 : i32
    %30 = arith.cmpi eq, %arg2, %c0_i32_14 : i32
    %31 = arith.andi %29, %30 : i1
    %32 = arith.extui %31 : i1 to i32
    %c0_i32_15 = arith.constant 0 : i32
    %33 = arith.cmpi ne, %32, %c0_i32_15 : i32
    scf.if %33 {
      %cst_35 = arith.constant 0.000000e+00 : f32
      %65 = vector.broadcast %cst_35 : f32 to vector<2x128xf32>
      %c0_36 = arith.constant 0 : index
      %c0_37 = arith.constant 0 : index
      %66 = vector.load %arg23[%c0_36, %c0_37] : memref<2x128xf32, #tpu.memory_space<vmem>>, vector<2x128xf32>
      tpu.vector_store %arg23[%c0_36, %c0_37], %65 {strides = array<i32>} : memref<2x128xf32, #tpu.memory_space<vmem>>, vector<2x128xf32>,
      %cst_38 = arith.constant 0.000000e+00 : f32
      %67 = vector.broadcast %cst_38 : f32 to vector<8x128xf32>
      %c0_39 = arith.constant 0 : index
      %c0_40 = arith.constant 0 : index
      %68 = vector.load %arg25[%c0_39, %c0_40] : memref<8x128xf32, #tpu.memory_space<vmem>>, vector<8x128xf32>
      tpu.vector_store %arg25[%c0_39, %c0_40], %67 {strides = array<i32>} : memref<8x128xf32, #tpu.memory_space<vmem>>, vector<8x128xf32>,
    } else {
    }
    %c0_i32_16 = arith.constant 0 : i32
    %34 = arith.cmpi eq, %arg1, %c0_i32_16 : i32
    %c0_i32_17 = arith.constant 0 : i32
    %35 = arith.cmpi eq, %arg0, %c0_i32_17 : i32
    %36 = arith.andi %34, %35 : i1
    %37 = arith.extui %36 : i1 to i32
    %c0_i32_18 = arith.constant 0 : i32
    %38 = arith.cmpi ne, %37, %c0_i32_18 : i32
    scf.if %38 {
      %c0_35 = arith.constant 0 : index
      %c0_36 = arith.constant 0 : index
      %65 = vector.load %arg3[%c0_35, %c0_36] : memref<128x16xf32, #tpu.memory_space<vmem>>, vector<128x16xf32>
      %c0_37 = arith.constant 0 : index
      %c0_38 = arith.constant 0 : index
      %66 = vector.load %arg8[%c0_37, %c0_38] : memref<16x128xf32, #tpu.memory_space<vmem>>, vector<16x128xf32>
      %cst_39 = arith.constant dense<0.000000e+00> : vector<128x128xf32>
      %67 = tpu.matmul %65, %66, %cst_39 {dimension_numbers = #tpu.dot_dimension_numbers<[1], [0], [0], [1], [0, 0, 1, 1], [], []>} : vector<128x16xf32>, vector<16x128xf32>, vector<128x128xf32> -> vector<128x128xf32>
      %c0_40 = arith.constant 0 : index
      %c0_41 = arith.constant 0 : index
      %68 = vector.load %arg9[%c0_40, %c0_41] : memref<1x128xf32, #tpu.memory_space<vmem>>, vector<1x128xf32>
      %69 = vector.broadcast %68 : vector<1x128xf32> to vector<128x128xf32>
      %70 = arith.addf %67, %69 : vector<128x128xf32>
      %71 = arith.truncf %70 : vector<128x128xf32> to vector<128x128xbf16>
      %72 = arith.addi %10, %24 : i32
      %73 = tpu.assume_multiple %72, 128 : i32
      %74 = arith.index_cast %73 : i32 to index
      %c0_42 = arith.constant 0 : index
      %75 = vector.load %arg21[%74, %c0_42] : memref<768x128xbf16, #tpu.memory_space<vmem>>, vector<128x128xbf16>
      tpu.vector_store %arg21[%74, %c0_42], %71 {strides = array<i32>} : memref<768x128xbf16, #tpu.memory_space<vmem>>, vector<128x128xbf16>,
    } else {
    }
    %c0_i32_19 = arith.constant 0 : i32
    %39 = arith.cmpi eq, %arg1, %c0_i32_19 : i32
    %c0_i32_20 = arith.constant 0 : i32
    %40 = arith.cmpi sgt, %arg0, %c0_i32_20 : i32
    %41 = arith.andi %39, %40 : i1
    %42 = arith.extui %41 : i1 to i32
    %c0_i32_21 = arith.constant 0 : i32
    %43 = arith.cmpi ne, %42, %c0_i32_21 : i32
    scf.if %43 {
      %65 = arith.addi %10, %24 : i32
      %66 = tpu.assume_multiple %65, 128 : i32
      %67 = arith.index_cast %66 : i32 to index
      %c0_35 = arith.constant 0 : index
      %68 = vector.load %arg21[%67, %c0_35] : memref<768x128xbf16, #tpu.memory_space<vmem>>, vector<128x128xbf16>
      %69 = arith.extf %68 : vector<128x128xbf16> to vector<128x128xf32>
      %c0_36 = arith.constant 0 : index
      %c0_37 = arith.constant 0 : index
      %70 = vector.load %arg24[%c0_36, %c0_37] : memref<2x128xf32, #tpu.memory_space<vmem>>, vector<1x128xf32>
      %71 = vector.broadcast %70 : vector<1x128xf32> to vector<128x128xf32>
      %72 = arith.mulf %69, %71 : vector<128x128xf32>
      %c1 = arith.constant 1 : index
      %c0_38 = arith.constant 0 : index
      %73 = vector.load %arg24[%c1, %c0_38] : memref<2x128xf32, #tpu.memory_space<vmem>>, vector<1x128xf32>
      %74 = vector.broadcast %73 : vector<1x128xf32> to vector<128x128xf32>
      %75 = arith.addf %72, %74 : vector<128x128xf32>
      %cst_39 = arith.constant 0.000000e+00 : f32
      %76 = vector.broadcast %cst_39 : f32 to vector<128x128xf32>
      %77 = arith.maximumf %75, %76 : vector<128x128xf32>
      %78 = arith.truncf %77 : vector<128x128xf32> to vector<128x128xbf16>
      %79 = arith.addi %10, %24 : i32
      %80 = tpu.assume_multiple %79, 128 : i32
      %81 = arith.index_cast %80 : i32 to index
      %c0_40 = arith.constant 0 : index
      %82 = vector.load %arg21[%81, %c0_40] : memref<768x128xbf16, #tpu.memory_space<vmem>>, vector<128x128xbf16>
      tpu.vector_store %arg21[%81, %c0_40], %78 {strides = array<i32>} : memref<768x128xbf16, #tpu.memory_space<vmem>>, vector<128x128xbf16>,
    } else {
    }
    %c0_i32_22 = arith.constant 0 : i32
    %44 = arith.cmpi eq, %arg2, %c0_i32_22 : i32
    %45 = arith.extui %44 : i1 to i32
    %c0_i32_23 = arith.constant 0 : i32
    %46 = arith.cmpi ne, %45, %c0_i32_23 : i32
    scf.if %46 {
      %c0_35 = arith.constant 0 : index
      %c0_36 = arith.constant 0 : index
      %65 = vector.load %arg5[%c0_35, %c0_36] : memref<128x8xf32, #tpu.memory_space<vmem>>, vector<128x8xf32>
      %c0_37 = arith.constant 0 : index
      %c0_38 = arith.constant 0 : index
      %c0_39 = arith.constant 0 : index
      %66 = vector.load %arg10[%c0_37, %c0_38, %c0_39] : memref<1x8x128xf32, #tpu.memory_space<vmem>>, vector<1x8x128xf32>
      %67 = vector.shape_cast %66 : vector<1x8x128xf32> to vector<8x128xf32>
      %cst_40 = arith.constant dense<0.000000e+00> : vector<128x128xf32>
      %68 = tpu.matmul %65, %67, %cst_40 {dimension_numbers = #tpu.dot_dimension_numbers<[1], [0], [0], [1], [0, 0, 1, 1], [], []>} : vector<128x8xf32>, vector<8x128xf32>, vector<128x128xf32> -> vector<128x128xf32>
      %c0_41 = arith.constant 0 : index
      %c0_42 = arith.constant 0 : index
      %69 = vector.load %arg6[%c0_41, %c0_42] : memref<128x1xf32, #tpu.memory_space<vmem>>, vector<128x1xf32>
      %c0_43 = arith.constant 0 : index
      %c0_44 = arith.constant 0 : index
      %c0_45 = arith.constant 0 : index
      %70 = vector.load %arg11[%c0_43, %c0_44, %c0_45] : memref<1x1x128xf32, #tpu.memory_space<vmem>>, vector<1x1x128xf32>
      %71 = vector.shape_cast %70 : vector<1x1x128xf32> to vector<1x128xf32>
      %72 = vector.broadcast %69 : vector<128x1xf32> to vector<128x128xf32>
      %73 = vector.broadcast %71 : vector<1x128xf32> to vector<128x128xf32>
      %74 = arith.mulf %72, %73 : vector<128x128xf32>
      %75 = arith.addf %68, %74 : vector<128x128xf32>
      %c0_46 = arith.constant 0 : index
      %c0_47 = arith.constant 0 : index
      %76 = vector.load %arg22[%c0_46, %c0_47] : memref<128x128xf32, #tpu.memory_space<vmem>>, vector<128x128xf32>
      tpu.vector_store %arg22[%c0_46, %c0_47], %75 {strides = array<i32>} : memref<128x128xf32, #tpu.memory_space<vmem>>, vector<128x128xf32>,
    } else {
    }
    %47 = arith.addi %10, %24 : i32
    %48 = tpu.assume_multiple %47, 128 : i32
    %49 = arith.index_cast %48 : i32 to index
    %c0 = arith.constant 0 : index
    %50 = vector.load %arg21[%49, %c0] : memref<768x128xbf16, #tpu.memory_space<vmem>>, vector<128x128xbf16>
    %c0_24 = arith.constant 0 : index
    %c0_25 = arith.constant 0 : index
    %51 = vector.load %arg22[%c0_24, %c0_25] : memref<128x128xf32, #tpu.memory_space<vmem>>, vector<128x128xf32>
    %c0_26 = arith.constant 0 : index
    %c0_27 = arith.constant 0 : index
    %52 = vector.load %arg4[%c0_26, %c0_27] : memref<128x128xi8, #tpu.memory_space<vmem>>, vector<128x128xi8>
    %53 = arith.sitofp %52 : vector<128x128xi8> to vector<128x128xbf16>
    %cst = arith.constant dense<0.000000e+00> : vector<128x128xf32>
    %54 = tpu.matmul %53, %50, %cst {dimension_numbers = #tpu.dot_dimension_numbers<[1], [0], [0], [1], [0, 0, 1, 1], [], []>} : vector<128x128xbf16>, vector<128x128xbf16>, vector<128x128xf32> -> vector<128x128xf32>
    %55 = arith.addf %51, %54 : vector<128x128xf32>
    %c0_28 = arith.constant 0 : index
    %c0_29 = arith.constant 0 : index
    %56 = vector.load %arg22[%c0_28, %c0_29] : memref<128x128xf32, #tpu.memory_space<vmem>>, vector<128x128xf32>
    tpu.vector_store %arg22[%c0_28, %c0_29], %55 {strides = array<i32>} : memref<128x128xf32, #tpu.memory_space<vmem>>, vector<128x128xf32>,
    %c2_i32_30 = arith.constant 2 : i32
    %57 = arith.cmpi eq, %arg2, %c2_i32_30 : i32
    %58 = arith.extui %57 : i1 to i32
    %c0_i32_31 = arith.constant 0 : i32
    %59 = arith.cmpi ne, %58, %c0_i32_31 : i32
    scf.if %59 {
      %c0_35 = arith.constant 0 : index
      %c0_36 = arith.constant 0 : index
      %65 = vector.load %arg22[%c0_35, %c0_36] : memref<128x128xf32, #tpu.memory_space<vmem>>, vector<128x128xf32>
      %c0_37 = arith.constant 0 : index
      %c0_38 = arith.constant 0 : index
      %c0_39 = arith.constant 0 : index
      %66 = vector.load %arg12[%c0_37, %c0_38, %c0_39] : memref<1x128x128xf32, #tpu.memory_space<vmem>>, vector<1x128x128xf32>
      %67 = vector.shape_cast %66 : vector<1x128x128xf32> to vector<128x128xf32>
      %cst_40 = arith.constant dense<0.000000e+00> : vector<128x128xf32>
      %68 = tpu.matmul %65, %67, %cst_40 {dimension_numbers = #tpu.dot_dimension_numbers<[1], [0], [0], [1], [0, 0, 1, 1], [], []>} : vector<128x128xf32>, vector<128x128xf32>, vector<128x128xf32> -> vector<128x128xf32>
      %c0_41 = arith.constant 0 : index
      %c0_42 = arith.constant 0 : index
      %c0_43 = arith.constant 0 : index
      %69 = vector.load %arg13[%c0_41, %c0_42, %c0_43] : memref<1x1x128xf32, #tpu.memory_space<vmem>>, vector<1x1x128xf32>
      %70 = vector.shape_cast %69 : vector<1x1x128xf32> to vector<1x128xf32>
      %71 = vector.broadcast %70 : vector<1x128xf32> to vector<128x128xf32>
      %72 = arith.addf %68, %71 : vector<128x128xf32>
      %cst_44 = arith.constant 0.000000e+00 : f32
      %73 = vector.broadcast %cst_44 : f32 to vector<128x128xf32>
      %74 = arith.maximumf %72, %73 : vector<128x128xf32>
      %c0_45 = arith.constant 0 : index
      %c0_46 = arith.constant 0 : index
      %c0_47 = arith.constant 0 : index
      %75 = vector.load %arg14[%c0_45, %c0_46, %c0_47] : memref<1x128x128xf32, #tpu.memory_space<vmem>>, vector<1x128x128xf32>
      %76 = vector.shape_cast %75 : vector<1x128x128xf32> to vector<128x128xf32>
      %cst_48 = arith.constant dense<0.000000e+00> : vector<128x128xf32>
      %77 = tpu.matmul %74, %76, %cst_48 {dimension_numbers = #tpu.dot_dimension_numbers<[1], [0], [0], [1], [0, 0, 1, 1], [], []>} : vector<128x128xf32>, vector<128x128xf32>, vector<128x128xf32> -> vector<128x128xf32>
      %c0_49 = arith.constant 0 : index
      %c0_50 = arith.constant 0 : index
      %c0_51 = arith.constant 0 : index
      %78 = vector.load %arg15[%c0_49, %c0_50, %c0_51] : memref<1x1x128xf32, #tpu.memory_space<vmem>>, vector<1x1x128xf32>
      %79 = vector.shape_cast %78 : vector<1x1x128xf32> to vector<1x128xf32>
      %80 = vector.broadcast %79 : vector<1x128xf32> to vector<128x128xf32>
      %81 = arith.addf %77, %80 : vector<128x128xf32>
      %82 = tpu.iota {dimensions = array<i32: 0>} : vector<128x1xi32>
      %c128_i32_52 = arith.constant 128 : i32
      %83 = arith.muli %arg1, %c128_i32_52 : i32
      %84 = vector.broadcast %83 : i32 to vector<128x1xi32>
      %85 = arith.addi %82, %84 : vector<128x1xi32>
      %c300_i32 = arith.constant 300 : i32
      %86 = vector.broadcast %c300_i32 : i32 to vector<128x1xi32>
      %87 = arith.cmpi slt, %85, %86 : vector<128x1xi32>
      %88 = arith.extui %87 : vector<128x1xi1> to vector<128x1xi32>
      %89 = arith.sitofp %88 : vector<128x1xi32> to vector<128x1xf32>
      %90 = vector.broadcast %89 : vector<128x1xf32> to vector<128x128xf32>
      %91 = arith.mulf %81, %90 : vector<128x128xf32>
      %c0_53 = arith.constant 0 : index
      %c0_54 = arith.constant 0 : index
      %92 = vector.load %arg23[%c0_53, %c0_54] : memref<2x128xf32, #tpu.memory_space<vmem>>, vector<1x128xf32>
      %cst_55 = arith.constant dense<0.000000e+00> : vector<128xf32>
      %93 = vector.multi_reduction <add>, %91, %cst_55 [0] : vector<128x128xf32> to vector<128xf32>
      %94 = vector.shape_cast %93 : vector<128xf32> to vector<1x128xf32>
      %95 = arith.addf %92, %94 : vector<1x128xf32>
      %c0_56 = arith.constant 0 : index
      %c0_57 = arith.constant 0 : index
      %96 = vector.load %arg23[%c0_56, %c0_57] : memref<2x128xf32, #tpu.memory_space<vmem>>, vector<1x128xf32>
      tpu.vector_store %arg23[%c0_56, %c0_57], %95 {strides = array<i32>} : memref<2x128xf32, #tpu.memory_space<vmem>>, vector<1x128xf32>,
      %c1 = arith.constant 1 : index
      %c0_58 = arith.constant 0 : index
      %97 = vector.load %arg23[%c1, %c0_58] : memref<2x128xf32, #tpu.memory_space<vmem>>, vector<1x128xf32>
      %98 = arith.mulf %91, %81 : vector<128x128xf32>
      %cst_59 = arith.constant dense<0.000000e+00> : vector<128xf32>
      %99 = vector.multi_reduction <add>, %98, %cst_59 [0] : vector<128x128xf32> to vector<128xf32>
      %100 = vector.shape_cast %99 : vector<128xf32> to vector<1x128xf32>
      %101 = arith.addf %97, %100 : vector<1x128xf32>
      %c1_60 = arith.constant 1 : index
      %c0_61 = arith.constant 0 : index
      %102 = vector.load %arg23[%c1_60, %c0_61] : memref<2x128xf32, #tpu.memory_space<vmem>>, vector<1x128xf32>
      tpu.vector_store %arg23[%c1_60, %c0_61], %101 {strides = array<i32>} : memref<2x128xf32, #tpu.memory_space<vmem>>, vector<1x128xf32>,
      %103 = arith.truncf %81 : vector<128x128xf32> to vector<128x128xbf16>
      %104 = arith.addi %22, %26 : i32
      %105 = tpu.assume_multiple %104, 128 : i32
      %106 = arith.index_cast %105 : i32 to index
      %c0_62 = arith.constant 0 : index
      %107 = vector.load %arg21[%106, %c0_62] : memref<768x128xbf16, #tpu.memory_space<vmem>>, vector<128x128xbf16>
      tpu.vector_store %arg21[%106, %c0_62], %103 {strides = array<i32>} : memref<768x128xbf16, #tpu.memory_space<vmem>>, vector<128x128xbf16>,
      %c1_i32_63 = arith.constant 1 : i32
      %108 = arith.cmpi eq, %arg0, %c1_i32_63 : i32
      %109 = arith.extui %108 : i1 to i32
      %c0_i32_64 = arith.constant 0 : i32
      %110 = arith.cmpi ne, %109, %c0_i32_64 : i32
      scf.if %110 {
        %c0_65 = arith.constant 0 : index
        %c0_66 = arith.constant 0 : index
        %111 = vector.load %arg25[%c0_65, %c0_66] : memref<8x128xf32, #tpu.memory_space<vmem>>, vector<8x128xf32>
        %c0_67 = arith.constant 0 : index
        %c0_68 = arith.constant 0 : index
        %112 = vector.load %arg7[%c0_67, %c0_68] : memref<8x128xf32, #tpu.memory_space<vmem>>, vector<8x128xf32>
        %cst_69 = arith.constant dense<0.000000e+00> : vector<8x128xf32>
        %113 = tpu.matmul %112, %81, %cst_69 {dimension_numbers = #tpu.dot_dimension_numbers<[1], [0], [0], [1], [0, 0, 1, 1], [], []>} : vector<8x128xf32>, vector<128x128xf32>, vector<8x128xf32> -> vector<8x128xf32>
        %114 = arith.addf %111, %113 : vector<8x128xf32>
        %c0_70 = arith.constant 0 : index
        %c0_71 = arith.constant 0 : index
        %115 = vector.load %arg25[%c0_70, %c0_71] : memref<8x128xf32, #tpu.memory_space<vmem>>, vector<8x128xf32>
        tpu.vector_store %arg25[%c0_70, %c0_71], %114 {strides = array<i32>} : memref<8x128xf32, #tpu.memory_space<vmem>>, vector<8x128xf32>,
      } else {
      }
    } else {
    }
    %c2_i32_32 = arith.constant 2 : i32
    %60 = arith.cmpi eq, %arg1, %c2_i32_32 : i32
    %c2_i32_33 = arith.constant 2 : i32
    %61 = arith.cmpi eq, %arg2, %c2_i32_33 : i32
    %62 = arith.andi %60, %61 : i1
    %63 = arith.extui %62 : i1 to i32
    %c0_i32_34 = arith.constant 0 : i32
    %64 = arith.cmpi ne, %63, %c0_i32_34 : i32
    scf.if %64 {
      %c0_35 = arith.constant 0 : index
      %c0_36 = arith.constant 0 : index
      %65 = vector.load %arg23[%c0_35, %c0_36] : memref<2x128xf32, #tpu.memory_space<vmem>>, vector<1x128xf32>
      %cst_37 = arith.constant 0.00333333341 : f32
      %66 = vector.broadcast %cst_37 : f32 to vector<1x128xf32>
      %67 = arith.mulf %65, %66 : vector<1x128xf32>
      %c1 = arith.constant 1 : index
      %c0_38 = arith.constant 0 : index
      %68 = vector.load %arg23[%c1, %c0_38] : memref<2x128xf32, #tpu.memory_space<vmem>>, vector<1x128xf32>
      %cst_39 = arith.constant 0.00333333341 : f32
      %69 = vector.broadcast %cst_39 : f32 to vector<1x128xf32>
      %70 = arith.mulf %68, %69 : vector<1x128xf32>
      %71 = arith.mulf %67, %67 : vector<1x128xf32>
      %72 = arith.subf %70, %71 : vector<1x128xf32>
      %cst_40 = arith.constant 9.99999974E-6 : f32
      %73 = vector.broadcast %cst_40 : f32 to vector<1x128xf32>
      %74 = arith.addf %72, %73 : vector<1x128xf32>
      %75 = math.rsqrt %74 : vector<1x128xf32>
      %c0_41 = arith.constant 0 : index
      %c0_42 = arith.constant 0 : index
      %c0_43 = arith.constant 0 : index
      %76 = vector.load %arg16[%c0_41, %c0_42, %c0_43] : memref<1x1x128xf32, #tpu.memory_space<vmem>>, vector<1x1x128xf32>
      %77 = vector.shape_cast %76 : vector<1x1x128xf32> to vector<1x128xf32>
      %78 = arith.mulf %75, %77 : vector<1x128xf32>
      %c0_44 = arith.constant 0 : index
      %c0_45 = arith.constant 0 : index
      %c0_46 = arith.constant 0 : index
      %79 = vector.load %arg17[%c0_44, %c0_45, %c0_46] : memref<1x1x128xf32, #tpu.memory_space<vmem>>, vector<1x1x128xf32>
      %80 = vector.shape_cast %79 : vector<1x1x128xf32> to vector<1x128xf32>
      %81 = arith.mulf %67, %78 : vector<1x128xf32>
      %82 = arith.subf %80, %81 : vector<1x128xf32>
      %c0_47 = arith.constant 0 : index
      %c0_48 = arith.constant 0 : index
      %83 = vector.load %arg24[%c0_47, %c0_48] : memref<2x128xf32, #tpu.memory_space<vmem>>, vector<1x128xf32>
      tpu.vector_store %arg24[%c0_47, %c0_48], %78 {strides = array<i32>} : memref<2x128xf32, #tpu.memory_space<vmem>>, vector<1x128xf32>,
      %c1_49 = arith.constant 1 : index
      %c0_50 = arith.constant 0 : index
      %84 = vector.load %arg24[%c1_49, %c0_50] : memref<2x128xf32, #tpu.memory_space<vmem>>, vector<1x128xf32>
      tpu.vector_store %arg24[%c1_49, %c0_50], %82 {strides = array<i32>} : memref<2x128xf32, #tpu.memory_space<vmem>>, vector<1x128xf32>,
      %cst_51 = arith.constant 0.000000e+00 : f32
      %85 = vector.broadcast %cst_51 : f32 to vector<2x128xf32>
      %c0_52 = arith.constant 0 : index
      %c0_53 = arith.constant 0 : index
      %86 = vector.load %arg23[%c0_52, %c0_53] : memref<2x128xf32, #tpu.memory_space<vmem>>, vector<2x128xf32>
      tpu.vector_store %arg23[%c0_52, %c0_53], %85 {strides = array<i32>} : memref<2x128xf32, #tpu.memory_space<vmem>>, vector<2x128xf32>,
      %c1_i32_54 = arith.constant 1 : i32
      %87 = arith.cmpi eq, %arg0, %c1_i32_54 : i32
      %88 = arith.extui %87 : i1 to i32
      %c0_i32_55 = arith.constant 0 : i32
      %89 = arith.cmpi ne, %88, %c0_i32_55 : i32
      scf.if %89 {
        %c0_56 = arith.constant 0 : index
        %c0_57 = arith.constant 0 : index
        %90 = vector.load %arg25[%c0_56, %c0_57] : memref<8x128xf32, #tpu.memory_space<vmem>>, vector<8x128xf32>
        %91 = vector.broadcast %78 : vector<1x128xf32> to vector<8x128xf32>
        %92 = arith.mulf %90, %91 : vector<8x128xf32>
        %93 = vector.broadcast %82 : vector<1x128xf32> to vector<8x128xf32>
        %94 = arith.addf %92, %93 : vector<8x128xf32>
        %c0_58 = arith.constant 0 : index
        %c0_59 = arith.constant 0 : index
        %95 = vector.load %arg18[%c0_58, %c0_59] : memref<128x128xf32, #tpu.memory_space<vmem>>, vector<128x128xf32>
        %cst_60 = arith.constant dense<0.000000e+00> : vector<8x128xf32>
        %96 = tpu.matmul %94, %95, %cst_60 {dimension_numbers = #tpu.dot_dimension_numbers<[1], [0], [0], [1], [0, 0, 1, 1], [], []>} : vector<8x128xf32>, vector<128x128xf32>, vector<8x128xf32> -> vector<8x128xf32>
        %c0_61 = arith.constant 0 : index
        %c0_62 = arith.constant 0 : index
        %97 = vector.load %arg19[%c0_61, %c0_62] : memref<1x128xf32, #tpu.memory_space<vmem>>, vector<1x128xf32>
        %98 = vector.broadcast %97 : vector<1x128xf32> to vector<8x128xf32>
        %99 = arith.addf %96, %98 : vector<8x128xf32>
        %c0_63 = arith.constant 0 : index
        %c0_64 = arith.constant 0 : index
        %100 = vector.load %arg20[%c0_63, %c0_64] : memref<8x128xf32, #tpu.memory_space<vmem>>, vector<8x128xf32>
        tpu.vector_store %arg20[%c0_63, %c0_64], %99 {strides = array<i32>} : memref<8x128xf32, #tpu.memory_space<vmem>>, vector<8x128xf32>,
      } else {
      }
    } else {
    }
    return
  }
  func.func @transform_0(%arg0: i32, %arg1: i32, %arg2: i32) -> (i32, i32) {
    %c0_i32 = arith.constant 0 : i32
    %0 = arith.cmpi eq, %arg0, %c0_i32 : i32
    %c0_i32_0 = arith.constant 0 : i32
    %1 = arith.cmpi eq, %arg1, %c0_i32_0 : i32
    %2 = arith.andi %0, %1 : i1
    %c0_i32_1 = arith.constant 0 : i32
    %3 = arith.select %2, %arg2, %c0_i32_1 : i32
    %c0_i32_2 = arith.constant 0 : i32
    %c0_i32_3 = arith.constant 0 : i32
    return %3, %c0_i32_2 : i32, i32
  }
  func.func @transform_1(%arg0: i32, %arg1: i32, %arg2: i32) -> (i32, i32) {
    %c0_i32 = arith.constant 0 : i32
    return %arg1, %arg2 : i32, i32
  }
  func.func @transform_2(%arg0: i32, %arg1: i32, %arg2: i32) -> (i32, i32) {
    %c0_i32 = arith.constant 0 : i32
    %c0_i32_0 = arith.constant 0 : i32
    return %arg1, %c0_i32 : i32, i32
  }
  func.func @transform_3(%arg0: i32, %arg1: i32, %arg2: i32) -> (i32, i32) {
    %c0_i32 = arith.constant 0 : i32
    %c0_i32_0 = arith.constant 0 : i32
    return %arg1, %c0_i32 : i32, i32
  }
  func.func @transform_4(%arg0: i32, %arg1: i32, %arg2: i32) -> (i32, i32) {
    %c0_i32 = arith.constant 0 : i32
    %c0_i32_0 = arith.constant 0 : i32
    return %c0_i32, %arg1 : i32, i32
  }
  func.func @transform_5(%arg0: i32, %arg1: i32, %arg2: i32) -> (i32, i32) {
    %c0_i32 = arith.constant 0 : i32
    %c0_i32_0 = arith.constant 0 : i32
    %c0_i32_1 = arith.constant 0 : i32
    return %c0_i32, %c0_i32_0 : i32, i32
  }
  func.func @transform_6(%arg0: i32, %arg1: i32, %arg2: i32) -> (i32, i32) {
    %c0_i32 = arith.constant 0 : i32
    %c0_i32_0 = arith.constant 0 : i32
    %c0_i32_1 = arith.constant 0 : i32
    return %c0_i32, %c0_i32_0 : i32, i32
  }
  func.func @transform_7(%arg0: i32, %arg1: i32, %arg2: i32) -> (i32, i32, i32) {
    %c0_i32 = arith.constant 0 : i32
    %c0_i32_0 = arith.constant 0 : i32
    %c0_i32_1 = arith.constant 0 : i32
    return %arg0, %c0_i32, %c0_i32_0 : i32, i32, i32
  }
  func.func @transform_8(%arg0: i32, %arg1: i32, %arg2: i32) -> (i32, i32, i32) {
    %c0_i32 = arith.constant 0 : i32
    %c0_i32_0 = arith.constant 0 : i32
    %c0_i32_1 = arith.constant 0 : i32
    return %arg0, %c0_i32, %c0_i32_0 : i32, i32, i32
  }
  func.func @transform_9(%arg0: i32, %arg1: i32, %arg2: i32) -> (i32, i32, i32) {
    %c0_i32 = arith.constant 0 : i32
    %c0_i32_0 = arith.constant 0 : i32
    %c0_i32_1 = arith.constant 0 : i32
    return %arg0, %c0_i32, %c0_i32_0 : i32, i32, i32
  }
  func.func @transform_10(%arg0: i32, %arg1: i32, %arg2: i32) -> (i32, i32, i32) {
    %c0_i32 = arith.constant 0 : i32
    %c0_i32_0 = arith.constant 0 : i32
    %c0_i32_1 = arith.constant 0 : i32
    return %arg0, %c0_i32, %c0_i32_0 : i32, i32, i32
  }
  func.func @transform_11(%arg0: i32, %arg1: i32, %arg2: i32) -> (i32, i32, i32) {
    %c0_i32 = arith.constant 0 : i32
    %c0_i32_0 = arith.constant 0 : i32
    %c0_i32_1 = arith.constant 0 : i32
    return %arg0, %c0_i32, %c0_i32_0 : i32, i32, i32
  }
  func.func @transform_12(%arg0: i32, %arg1: i32, %arg2: i32) -> (i32, i32, i32) {
    %c0_i32 = arith.constant 0 : i32
    %c0_i32_0 = arith.constant 0 : i32
    %c0_i32_1 = arith.constant 0 : i32
    return %arg0, %c0_i32, %c0_i32_0 : i32, i32, i32
  }
  func.func @transform_13(%arg0: i32, %arg1: i32, %arg2: i32) -> (i32, i32, i32) {
    %c0_i32 = arith.constant 0 : i32
    %c0_i32_0 = arith.constant 0 : i32
    %c0_i32_1 = arith.constant 0 : i32
    return %arg0, %c0_i32, %c0_i32_0 : i32, i32, i32
  }
  func.func @transform_14(%arg0: i32, %arg1: i32, %arg2: i32) -> (i32, i32, i32) {
    %c0_i32 = arith.constant 0 : i32
    %c0_i32_0 = arith.constant 0 : i32
    %c0_i32_1 = arith.constant 0 : i32
    return %arg0, %c0_i32, %c0_i32_0 : i32, i32, i32
  }
  func.func @transform_15(%arg0: i32, %arg1: i32, %arg2: i32) -> (i32, i32) {
    %c0_i32 = arith.constant 0 : i32
    %c0_i32_0 = arith.constant 0 : i32
    %c0_i32_1 = arith.constant 0 : i32
    return %c0_i32, %c0_i32_0 : i32, i32
  }
  func.func @transform_16(%arg0: i32, %arg1: i32, %arg2: i32) -> (i32, i32) {
    %c0_i32 = arith.constant 0 : i32
    %c0_i32_0 = arith.constant 0 : i32
    %c0_i32_1 = arith.constant 0 : i32
    return %c0_i32, %c0_i32_0 : i32, i32
  }
  func.func @transform_17(%arg0: i32, %arg1: i32, %arg2: i32) -> (i32, i32) {
    %c0_i32 = arith.constant 0 : i32
    %c0_i32_0 = arith.constant 0 : i32
    %c0_i32_1 = arith.constant 0 : i32
    return %c0_i32, %c0_i32_0 : i32, i32
  }
}

</mosaic_0001>

<llo_original>
// kernel: tpu_custom_call.1
$region0: #{tpu_custom_call.1}
  #allocation0 [shape = 'u32[]', space=smem, size = 0x4, offset = 0x4, fixed_abs, tag = 'smem constant byte address 0x4 - core index']
  #allocation1 [shape = 'u32[144,128]{1,0:T(1,128)}', space=vmem, size = 0x12000, scoped, tag = 'internal scratch']
  #allocation2 [shape = 'bf16[768,128]{1,0:T(16,128)(2,1)}', space=vmem, size = 0x30000, scoped, tag = 'scratch operand']
  #allocation3 [shape = 'f32[128,128]{1,0:T(8,128)}', space=vmem, size = 0x10000, scoped, tag = 'scratch operand']
  #allocation4 [shape = 'f32[2,128]{1,0:T(2,128)}', space=vmem, size = 0x400, scoped, tag = 'scratch operand']
  #allocation5 [shape = 'f32[2,128]{1,0:T(2,128)}', space=vmem, size = 0x400, scoped, tag = 'scratch operand']
  #allocation6 [shape = 'f32[8,128]{1,0:T(8,128)}', space=vmem, size = 0x1000, scoped, tag = 'scratch operand']
  %s0 = inlined_call_operand.vmem [shape: f32[384,16], index: 0, kind: input, shape index: {}]
  %s1 = inlined_call_operand.vmem [shape: s8[384,384], index: 1, kind: input, shape index: {}]
  %s2 = inlined_call_operand.vmem [shape: f32[384,8], index: 2, kind: input, shape index: {}]
  %s3 = inlined_call_operand.vmem [shape: f32[384,1], index: 3, kind: input, shape index: {}]
  %s4 = inlined_call_operand.vmem [shape: f32[8,384], index: 4, kind: input, shape index: {}]
  %s5 = inlined_call_operand.vmem [shape: f32[16,128], index: 5, kind: input, shape index: {}]
  %s6 = inlined_call_operand.vmem [shape: f32[1,128], index: 6, kind: input, shape index: {}]
  %s7 = inlined_call_operand.vmem [shape: f32[2,8,128], index: 7, kind: input, shape index: {}]
  %s8 = inlined_call_operand.vmem [shape: f32[2,1,128], index: 8, kind: input, shape index: {}]
  %s9 = inlined_call_operand.vmem [shape: f32[2,128,128], index: 9, kind: input, shape index: {}]
  %s10 = inlined_call_operand.vmem [shape: f32[2,1,128], index: 10, kind: input, shape index: {}]
  %s11 = inlined_call_operand.vmem [shape: f32[2,128,128], index: 11, kind: input, shape index: {}]
  %s12 = inlined_call_operand.vmem [shape: f32[2,1,128], index: 12, kind: input, shape index: {}]
  %s13 = inlined_call_operand.vmem [shape: f32[2,1,128], index: 13, kind: input, shape index: {}]
  %s14 = inlined_call_operand.vmem [shape: f32[2,1,128], index: 14, kind: input, shape index: {}]
  %s15 = inlined_call_operand.vmem [shape: f32[128,128], index: 15, kind: input, shape index: {}]
  %s16 = inlined_call_operand.vmem [shape: f32[1,128], index: 16, kind: input, shape index: {}]
  %s17 = inlined_call_operand.hbm [shape: f32[8,128], index: 17, kind: output, shape index: {}]
  %s18 = sld [smem:[#allocation0]]
  $region171: #{tpu_custom_call.1} parent=0
    _
  %s20 = ssub.s32 1, %s18
  %s21 = scalar_select 0, %s20, %s18
  $region1: #{tpu_custom_call.1} parent=0
    #allocation7 [shape = 'u8[32768]{0}', space=vmem, size = 0x8000, scoped, tag = 'input window, operand 1']
    #allocation8 [shape = 'u8[4096]{0}', space=vmem, size = 0x1000, scoped, tag = 'output window, operand 0, single buffered']
    #allocation9 [shape = 's32[2]{0}', space=sflag, size = 0x8, scoped, tag = 'scoped memory for tpu_custom_call.1']
    %22 = vsyncpa [#allocation9], 0
    loop: start=0, step=1, limit=20
    $region2: #{tpu_custom_call.1} parent=1 // loop_pre_header
      _
    $region3: #{tpu_custom_call.1} parent=1 // loop_header
      %s24 = sphi 0, %s28
      %p25 = scmp.ge.s32.totalorder %s24, 20
      %s31 = sphi 0, %s50
      %s32 = sphi 0, %s46
      %s33 = sphi 0, %s42
      %s34 = sphi 0, %s31
      %s35 = sphi 0, %s32
      %s36 = sphi 0, %s33
      %s37 = sphi 0, %s34
      %s38 = sphi 0, %s35
      %s39 = sphi 0, %s36
      %s63 = sphi 0, %s65
      %s66 = sphi 0, %s63
      %s67 = sphi 0, %s66
      %s83 = sphi 0, %s67
      %s91 = sphi 0, %s93
      %s94 = sphi 0, %s91
      %s95 = sphi 0, %s94
      %s111 = sphi 0, %s95
      %s117 = sphi 0, %s119
      %s120 = sphi 0, %s117
      %s121 = sphi 0, %s120
      %s137 = sphi 0, %s121
      %s143 = sphi 0, %s145
      %s146 = sphi 0, %s143
      %s147 = sphi 0, %s146
      %s163 = sphi 0, %s147
      %s169 = sphi 0, %s171
      %s172 = sphi 0, %s169
      %s173 = sphi 0, %s172
      %s189 = sphi 0, %s173
      %s193 = sphi 0, %s193
      %s195 = sphi 0, %s193
      %s196 = sphi 0, %s195
      %s210 = sphi 0, %s196
      %s214 = sphi 0, %s214
      %s216 = sphi 0, %s214
      %s217 = sphi 0, %s216
      %s231 = sphi 0, %s217
      %s237 = sphi 0, %s239
      %s240 = sphi 0, %s237
      %s241 = sphi 0, %s240
      %s257 = sphi 0, %s241
      %s263 = sphi 0, %s265
      %s266 = sphi 0, %s263
      %s267 = sphi 0, %s266
      %s283 = sphi 0, %s267
      %s289 = sphi 0, %s291
      %s292 = sphi 0, %s289
      %s293 = sphi 0, %s292
      %s309 = sphi 0, %s293
      %s315 = sphi 0, %s317
      %s318 = sphi 0, %s315
      %s319 = sphi 0, %s318
      %s335 = sphi 0, %s319
      %s341 = sphi 0, %s343
      %s344 = sphi 0, %s341
      %s345 = sphi 0, %s344
      %s361 = sphi 0, %s345
      %s367 = sphi 0, %s369
      %s370 = sphi 0, %s367
      %s371 = sphi 0, %s370
      %s387 = sphi 0, %s371
      %s393 = sphi 0, %s395
      %s396 = sphi 0, %s393
      %s397 = sphi 0, %s396
      %s413 = sphi 0, %s397
      %s419 = sphi 0, %s421
      %s422 = sphi 0, %s419
      %s423 = sphi 0, %s422
      %s439 = sphi 0, %s423
      %s443 = sphi 0, %s443
      %s445 = sphi 0, %s443
      %s446 = sphi 0, %s445
      %s460 = sphi 0, %s446
      %s464 = sphi 0, %s464
      %s466 = sphi 0, %s464
      %s467 = sphi 0, %s466
      %s481 = sphi 0, %s467
      %s485 = sphi 0, %s485
      %s487 = sphi 0, %s485
      %s488 = sphi 0, %s487
      %s502 = sphi 0, %s488
    $region4: #{tpu_custom_call.1} parent=1 // loop_header_branch
      %27 = sbr.rel (%p25) target = $region8
    $region5: #{tpu_custom_call.1} parent=1 // loop_body
      %s29 = ssub.s32 %s24, 1
      %s30 = ssub.s32 %s24, 2
      %s40 = sadd.s32 1, %s33
      %p41 = scmp.ge.s32.totalorder %s40, 3
      %s42 = scalar_select %p41, 0, %s40
      %s43 = sadd.s32 1, %s32
      %s44 = scalar_select %p41, %s43, %s32
      %p45 = scmp.ge.s32.totalorder %s44, 3
      %s46 = scalar_select %p45, 0, %s44
      %s47 = sadd.s32 1, %s31
      %s48 = scalar_select %p45, %s47, %s31
      %p49 = scmp.ge.s32.totalorder %s48, 2
      %s50 = scalar_select %p49, 0, %s48
      %p51 = scmp.eq.s32.totalorder %s31, 0
      %p52 = scmp.eq.s32.totalorder %s32, 0
      %p53 = pnand %p51, %p52
      %p54 = pneg %p53
      %s55 = scalar_select %p54, %s33, 0
      %p56 = scmp.eq.s32.totalorder %s50, 0
      %p57 = scmp.eq.s32.totalorder %s46, 0
      %p58 = pnand %p56, %p57
      %p59 = pneg %p58
      %s60 = scalar_select %p59, %s42, 0
      %s61 = ssub.s32 %s55, %s60
      %p62 = scmp.eq.s32.totalorder %s61, 0
      %s64 = sadd.s32 %s63, 1
      %s65 = scalar_select %p62, %s63, %s64
      %p68 = pneg %p62
      %p69 = scmp.eq.s32.totalorder %s24, 17
      %p70 = por %p68, %p69
      %p71 = scmp.ne.s32.totalorder %s63, %s66
      %p72 = scmp.eq.s32.totalorder %s24, 0
      %p73 = por %p71, %p72
      %p74 = scmp.ne.s32.totalorder %s63, %s66
      %p75 = scmp.eq.s32.totalorder %s29, 17
      %p76 = por %p74, %p75
      %p77 = scmp.ne.s32.totalorder %s66, %s67
      %p78 = scmp.eq.s32.totalorder %s29, 0
      %p79 = por %p77, %p78
      %p80 = scmp.ne.s32.totalorder %s66, %s67
      %p81 = scmp.eq.s32.totalorder %s30, 17
      %p82 = por %p80, %p81
      %p84 = scmp.ne.s32.totalorder %s67, %s83
      %p85 = scmp.eq.s32.totalorder %s30, 0
      %p86 = por %p84, %p85
      %s87 = ssub.s32 %s32, %s46
      %s88 = ssub.s32 %s33, %s42
      %s89 = sor.u32 %s87, %s88
      %p90 = scmp.eq.s32.totalorder %s89, 0
      %s92 = sadd.s32 %s91, 1
      %s93 = scalar_select %p90, %s91, %s92
      %p96 = pneg %p90
      %p97 = scmp.eq.s32.totalorder %s24, 17
      %p98 = por %p96, %p97
      %p99 = scmp.ne.s32.totalorder %s91, %s94
      %p100 = scmp.eq.s32.totalorder %s24, 0
      %p101 = por %p99, %p100
      %p102 = scmp.ne.s32.totalorder %s91, %s94
      %p103 = scmp.eq.s32.totalorder %s29, 17
      %p104 = por %p102, %p103
      %p105 = scmp.ne.s32.totalorder %s94, %s95
      %p106 = scmp.eq.s32.totalorder %s29, 0
      %p107 = por %p105, %p106
      %p108 = scmp.ne.s32.totalorder %s94, %s95
      %p109 = scmp.eq.s32.totalorder %s30, 17
      %p110 = por %p108, %p109
      %p112 = scmp.ne.s32.totalorder %s95, %s111
      %p113 = scmp.eq.s32.totalorder %s30, 0
      %p114 = por %p112, %p113
      %s115 = ssub.s32 %s32, %s46
      %p116 = scmp.eq.s32.totalorder %s115, 0
      %s118 = sadd.s32 %s117, 1
      %s119 = scalar_select %p116, %s117, %s118
      %p122 = pneg %p116
      %p123 = scmp.eq.s32.totalorder %s24, 17
      %p124 = por %p122, %p123
      %p125 = scmp.ne.s32.totalorder %s117, %s120
      %p126 = scmp.eq.s32.totalorder %s24, 0
      %p127 = por %p125, %p126
      %p128 = scmp.ne.s32.totalorder %s117, %s120
      %p129 = scmp.eq.s32.totalorder %s29, 17
      %p130 = por %p128, %p129
      %p131 = scmp.ne.s32.totalorder %s120, %s121
      %p132 = scmp.eq.s32.totalorder %s29, 0
      %p133 = por %p131, %p132
      %p134 = scmp.ne.s32.totalorder %s120, %s121
      %p135 = scmp.eq.s32.totalorder %s30, 17
      %p136 = por %p134, %p135
      %p138 = scmp.ne.s32.totalorder %s121, %s137
      %p139 = scmp.eq.s32.totalorder %s30, 0
      %p140 = por %p138, %p139
      %s141 = ssub.s32 %s32, %s46
      %p142 = scmp.eq.s32.totalorder %s141, 0
      %s144 = sadd.s32 %s143, 1
      %s145 = scalar_select %p142, %s143, %s144
      %p148 = pneg %p142
      %p149 = scmp.eq.s32.totalorder %s24, 17
      %p150 = por %p148, %p149
      %p151 = scmp.ne.s32.totalorder %s143, %s146
      %p152 = scmp.eq.s32.totalorder %s24, 0
      %p153 = por %p151, %p152
      %p154 = scmp.ne.s32.totalorder %s143, %s146
      %p155 = scmp.eq.s32.totalorder %s29, 17
      %p156 = por %p154, %p155
      %p157 = scmp.ne.s32.totalorder %s146, %s147
      %p158 = scmp.eq.s32.totalorder %s29, 0
      %p159 = por %p157, %p158
      %p160 = scmp.ne.s32.totalorder %s146, %s147
      %p161 = scmp.eq.s32.totalorder %s30, 17
      %p162 = por %p160, %p161
      %p164 = scmp.ne.s32.totalorder %s147, %s163
      %p165 = scmp.eq.s32.totalorder %s30, 0
      %p166 = por %p164, %p165
      %s167 = ssub.s32 %s32, %s46
      %p168 = scmp.eq.s32.totalorder %s167, 0
      %s170 = sadd.s32 %s169, 1
      %s171 = scalar_select %p168, %s169, %s170
      %p174 = pneg %p168
      %p175 = scmp.eq.s32.totalorder %s24, 17
      %p176 = por %p174, %p175
      %p177 = scmp.ne.s32.totalorder %s169, %s172
      %p178 = scmp.eq.s32.totalorder %s24, 0
      %p179 = por %p177, %p178
      %p180 = scmp.ne.s32.totalorder %s169, %s172
      %p181 = scmp.eq.s32.totalorder %s29, 17
      %p182 = por %p180, %p181
      %p183 = scmp.ne.s32.totalorder %s172, %s173
      %p184 = scmp.eq.s32.totalorder %s29, 0
      %p185 = por %p183, %p184
      %p186 = scmp.ne.s32.totalorder %s172, %s173
      %p187 = scmp.eq.s32.totalorder %s30, 17
      %p188 = por %p186, %p187
      %p190 = scmp.ne.s32.totalorder %s173, %s189
      %p191 = scmp.eq.s32.totalorder %s30, 0
      %p192 = por %p190, %p191
      %s194 = sadd.s32 %s193, 1
      %p197 = scmp.eq.s32.totalorder %s24, 17
      %p198 = scmp.ne.s32.totalorder %s193, %s195
      %p199 = scmp.eq.s32.totalorder %s24, 0
      %p200 = por %p198, %p199
      %p201 = scmp.ne.s32.totalorder %s193, %s195
      %p202 = scmp.eq.s32.totalorder %s29, 17
      %p203 = por %p201, %p202
      %p204 = scmp.ne.s32.totalorder %s195, %s196
      %p205 = scmp.eq.s32.totalorder %s29, 0
      %p206 = por %p204, %p205
      %p207 = scmp.ne.s32.totalorder %s195, %s196
      %p208 = scmp.eq.s32.totalorder %s30, 17
      %p209 = por %p207, %p208
      %p211 = scmp.ne.s32.totalorder %s196, %s210
      %p212 = scmp.eq.s32.totalorder %s30, 0
      %p213 = por %p211, %p212
      %s215 = sadd.s32 %s214, 1
      %p218 = scmp.eq.s32.totalorder %s24, 17
      %p219 = scmp.ne.s32.totalorder %s214, %s216
      %p220 = scmp.eq.s32.totalorder %s24, 0
      %p221 = por %p219, %p220
      %p222 = scmp.ne.s32.totalorder %s214, %s216
      %p223 = scmp.eq.s32.totalorder %s29, 17
      %p224 = por %p222, %p223
      %p225 = scmp.ne.s32.totalorder %s216, %s217
      %p226 = scmp.eq.s32.totalorder %s29, 0
      %p227 = por %p225, %p226
      %p228 = scmp.ne.s32.totalorder %s216, %s217
      %p229 = scmp.eq.s32.totalorder %s30, 17
      %p230 = por %p228, %p229
      %p232 = scmp.ne.s32.totalorder %s217, %s231
      %p233 = scmp.eq.s32.totalorder %s30, 0
      %p234 = por %p232, %p233
      %s235 = ssub.s32 %s31, %s50
      %p236 = scmp.eq.s32.totalorder %s235, 0
      %s238 = sadd.s32 %s237, 1
      %s239 = scalar_select %p236, %s237, %s238
      %p242 = pneg %p236
      %p243 = scmp.eq.s32.totalorder %s24, 17
      %p244 = por %p242, %p243
      %p245 = scmp.ne.s32.totalorder %s237, %s240
      %p246 = scmp.eq.s32.totalorder %s24, 0
      %p247 = por %p245, %p246
      %p248 = scmp.ne.s32.totalorder %s237, %s240
      %p249 = scmp.eq.s32.totalorder %s29, 17
      %p250 = por %p248, %p249
      %p251 = scmp.ne.s32.totalorder %s240, %s241
      %p252 = scmp.eq.s32.totalorder %s29, 0
      %p253 = por %p251, %p252
      %p254 = scmp.ne.s32.totalorder %s240, %s241
      %p255 = scmp.eq.s32.totalorder %s30, 17
      %p256 = por %p254, %p255
      %p258 = scmp.ne.s32.totalorder %s241, %s257
      %p259 = scmp.eq.s32.totalorder %s30, 0
      %p260 = por %p258, %p259
      %s261 = ssub.s32 %s31, %s50
      %p262 = scmp.eq.s32.totalorder %s261, 0
      %s264 = sadd.s32 %s263, 1
      %s265 = scalar_select %p262, %s263, %s264
      %p268 = pneg %p262
      %p269 = scmp.eq.s32.totalorder %s24, 17
      %p270 = por %p268, %p269
      %p271 = scmp.ne.s32.totalorder %s263, %s266
      %p272 = scmp.eq.s32.totalorder %s24, 0
      %p273 = por %p271, %p272
      %p274 = scmp.ne.s32.totalorder %s263, %s266
      %p275 = scmp.eq.s32.totalorder %s29, 17
      %p276 = por %p274, %p275
      %p277 = scmp.ne.s32.totalorder %s266, %s267
      %p278 = scmp.eq.s32.totalorder %s29, 0
      %p279 = por %p277, %p278
      %p280 = scmp.ne.s32.totalorder %s266, %s267
      %p281 = scmp.eq.s32.totalorder %s30, 17
      %p282 = por %p280, %p281
      %p284 = scmp.ne.s32.totalorder %s267, %s283
      %p285 = scmp.eq.s32.totalorder %s30, 0
      %p286 = por %p284, %p285
      %s287 = ssub.s32 %s31, %s50
      %p288 = scmp.eq.s32.totalorder %s287, 0
      %s290 = sadd.s32 %s289, 1
      %s291 = scalar_select %p288, %s289, %s290
      %p294 = pneg %p288
      %p295 = scmp.eq.s32.totalorder %s24, 17
      %p296 = por %p294, %p295
      %p297 = scmp.ne.s32.totalorder %s289, %s292
      %p298 = scmp.eq.s32.totalorder %s24, 0
      %p299 = por %p297, %p298
      %p300 = scmp.ne.s32.totalorder %s289, %s292
      %p301 = scmp.eq.s32.totalorder %s29, 17
      %p302 = por %p300, %p301
      %p303 = scmp.ne.s32.totalorder %s292, %s293
      %p304 = scmp.eq.s32.totalorder %s29, 0
      %p305 = por %p303, %p304
      %p306 = scmp.ne.s32.totalorder %s292, %s293
      %p307 = scmp.eq.s32.totalorder %s30, 17
      %p308 = por %p306, %p307
      %p310 = scmp.ne.s32.totalorder %s293, %s309
      %p311 = scmp.eq.s32.totalorder %s30, 0
      %p312 = por %p310, %p311
      %s313 = ssub.s32 %s31, %s50
      %p314 = scmp.eq.s32.totalorder %s313, 0
      %s316 = sadd.s32 %s315, 1
      %s317 = scalar_select %p314, %s315, %s316
      %p320 = pneg %p314
      %p321 = scmp.eq.s32.totalorder %s24, 17
      %p322 = por %p320, %p321
      %p323 = scmp.ne.s32.totalorder %s315, %s318
      %p324 = scmp.eq.s32.totalorder %s24, 0
      %p325 = por %p323, %p324
      %p326 = scmp.ne.s32.totalorder %s315, %s318
      %p327 = scmp.eq.s32.totalorder %s29, 17
      %p328 = por %p326, %p327
      %p329 = scmp.ne.s32.totalorder %s318, %s319
      %p330 = scmp.eq.s32.totalorder %s29, 0
      %p331 = por %p329, %p330
      %p332 = scmp.ne.s32.totalorder %s318, %s319
      %p333 = scmp.eq.s32.totalorder %s30, 17
      %p334 = por %p332, %p333
      %p336 = scmp.ne.s32.totalorder %s319, %s335
      %p337 = scmp.eq.s32.totalorder %s30, 0
      %p338 = por %p336, %p337
      %s339 = ssub.s32 %s31, %s50
      %p340 = scmp.eq.s32.totalorder %s339, 0
      %s342 = sadd.s32 %s341, 1
      %s343 = scalar_select %p340, %s341, %s342
      %p346 = pneg %p340
      %p347 = scmp.eq.s32.totalorder %s24, 17
      %p348 = por %p346, %p347
      %p349 = scmp.ne.s32.totalorder %s341, %s344
      %p350 = scmp.eq.s32.totalorder %s24, 0
      %p351 = por %p349, %p350
      %p352 = scmp.ne.s32.totalorder %s341, %s344
      %p353 = scmp.eq.s32.totalorder %s29, 17
      %p354 = por %p352, %p353
      %p355 = scmp.ne.s32.totalorder %s344, %s345
      %p356 = scmp.eq.s32.totalorder %s29, 0
      %p357 = por %p355, %p356
      %p358 = scmp.ne.s32.totalorder %s344, %s345
      %p359 = scmp.eq.s32.totalorder %s30, 17
      %p360 = por %p358, %p359
      %p362 = scmp.ne.s32.totalorder %s345, %s361
      %p363 = scmp.eq.s32.totalorder %s30, 0
      %p364 = por %p362, %p363
      %s365 = ssub.s32 %s31, %s50
      %p366 = scmp.eq.s32.totalorder %s365, 0
      %s368 = sadd.s32 %s367, 1
      %s369 = scalar_select %p366, %s367, %s368
      %p372 = pneg %p366
      %p373 = scmp.eq.s32.totalorder %s24, 17
      %p374 = por %p372, %p373
      %p375 = scmp.ne.s32.totalorder %s367, %s370
      %p376 = scmp.eq.s32.totalorder %s24, 0
      %p377 = por %p375, %p376
      %p378 = scmp.ne.s32.totalorder %s367, %s370
      %p379 = scmp.eq.s32.totalorder %s29, 17
      %p380 = por %p378, %p379
      %p381 = scmp.ne.s32.totalorder %s370, %s371
      %p382 = scmp.eq.s32.totalorder %s29, 0
      %p383 = por %p381, %p382
      %p384 = scmp.ne.s32.totalorder %s370, %s371
      %p385 = scmp.eq.s32.totalorder %s30, 17
      %p386 = por %p384, %p385
      %p388 = scmp.ne.s32.totalorder %s371, %s387
      %p389 = scmp.eq.s32.totalorder %s30, 0
      %p390 = por %p388, %p389
      %s391 = ssub.s32 %s31, %s50
      %p392 = scmp.eq.s32.totalorder %s391, 0
      %s394 = sadd.s32 %s393, 1
      %s395 = scalar_select %p392, %s393, %s394
      %p398 = pneg %p392
      %p399 = scmp.eq.s32.totalorder %s24, 17
      %p400 = por %p398, %p399
      %p401 = scmp.ne.s32.totalorder %s393, %s396
      %p402 = scmp.eq.s32.totalorder %s24, 0
      %p403 = por %p401, %p402
      %p404 = scmp.ne.s32.totalorder %s393, %s396
      %p405 = scmp.eq.s32.totalorder %s29, 17
      %p406 = por %p404, %p405
      %p407 = scmp.ne.s32.totalorder %s396, %s397
      %p408 = scmp.eq.s32.totalorder %s29, 0
      %p409 = por %p407, %p408
      %p410 = scmp.ne.s32.totalorder %s396, %s397
      %p411 = scmp.eq.s32.totalorder %s30, 17
      %p412 = por %p410, %p411
      %p414 = scmp.ne.s32.totalorder %s397, %s413
      %p415 = scmp.eq.s32.totalorder %s30, 0
      %p416 = por %p414, %p415
      %s417 = ssub.s32 %s31, %s50
      %p418 = scmp.eq.s32.totalorder %s417, 0
      %s420 = sadd.s32 %s419, 1
      %s421 = scalar_select %p418, %s419, %s420
      %p424 = pneg %p418
      %p425 = scmp.eq.s32.totalorder %s24, 17
      %p426 = por %p424, %p425
      %p427 = scmp.ne.s32.totalorder %s419, %s422
      %p428 = scmp.eq.s32.totalorder %s24, 0
      %p429 = por %p427, %p428
      %p430 = scmp.ne.s32.totalorder %s419, %s422
      %p431 = scmp.eq.s32.totalorder %s29, 17
      %p432 = por %p430, %p431
      %p433 = scmp.ne.s32.totalorder %s422, %s423
      %p434 = scmp.eq.s32.totalorder %s29, 0
      %p435 = por %p433, %p434
      %p436 = scmp.ne.s32.totalorder %s422, %s423
      %p437 = scmp.eq.s32.totalorder %s30, 17
      %p438 = por %p436, %p437
      %p440 = scmp.ne.s32.totalorder %s423, %s439
      %p441 = scmp.eq.s32.totalorder %s30, 0
      %p442 = por %p440, %p441
      %s444 = sadd.s32 %s443, 1
      %p447 = scmp.eq.s32.totalorder %s24, 17
      %p448 = scmp.ne.s32.totalorder %s443, %s445
      %p449 = scmp.eq.s32.totalorder %s24, 0
      %p450 = por %p448, %p449
      %p451 = scmp.ne.s32.totalorder %s443, %s445
      %p452 = scmp.eq.s32.totalorder %s29, 17
      %p453 = por %p451, %p452
      %p454 = scmp.ne.s32.totalorder %s445, %s446
      %p455 = scmp.eq.s32.totalorder %s29, 0
      %p456 = por %p454, %p455
      %p457 = scmp.ne.s32.totalorder %s445, %s446
      %p458 = scmp.eq.s32.totalorder %s30, 17
      %p459 = por %p457, %p458
      %p461 = scmp.ne.s32.totalorder %s446, %s460
      %p462 = scmp.eq.s32.totalorder %s30, 0
      %p463 = por %p461, %p462
      %s465 = sadd.s32 %s464, 1
      %p468 = scmp.eq.s32.totalorder %s24, 17
      %p469 = scmp.ne.s32.totalorder %s464, %s466
      %p470 = scmp.eq.s32.totalorder %s24, 0
      %p471 = por %p469, %p470
      %p472 = scmp.ne.s32.totalorder %s464, %s466
      %p473 = scmp.eq.s32.totalorder %s29, 17
      %p474 = por %p472, %p473
      %p475 = scmp.ne.s32.totalorder %s466, %s467
      %p476 = scmp.eq.s32.totalorder %s29, 0
      %p477 = por %p475, %p476
      %p478 = scmp.ne.s32.totalorder %s466, %s467
      %p479 = scmp.eq.s32.totalorder %s30, 17
      %p480 = por %p478, %p479
      %p482 = scmp.ne.s32.totalorder %s467, %s481
      %p483 = scmp.eq.s32.totalorder %s30, 0
      %p484 = por %p482, %p483
      %s486 = sadd.s32 %s485, 1
      %p489 = scmp.eq.s32.totalorder %s24, 17
      %p490 = scmp.ne.s32.totalorder %s485, %s487
      %p491 = scmp.eq.s32.totalorder %s24, 0
      %p492 = por %p490, %p491
      %p493 = scmp.ne.s32.totalorder %s485, %s487
      %p494 = scmp.eq.s32.totalorder %s29, 17
      %p495 = por %p493, %p494
      %p496 = scmp.ne.s32.totalorder %s487, %s488
      %p497 = scmp.eq.s32.totalorder %s29, 0
      %p498 = por %p496, %p497
      %p499 = scmp.ne.s32.totalorder %s487, %s488
      %p500 = scmp.eq.s32.totalorder %s30, 17
      %p501 = por %p499, %p500
      %p503 = scmp.ne.s32.totalorder %s488, %s502
      %p504 = scmp.eq.s32.totalorder %s30, 0
      %p505 = por %p503, %p504
      %p506 = scmp.le.s32.totalorder 1, %s24
      %p507 = scmp.lt.s32.totalorder %s24, 19
      %p508 = pnand %p506, %p507
      %p509 = pneg %p508
      // Predicated region
      $region9: #{tpu_custom_call.1} parent=5 // pred_check
        _
      $region10: #{tpu_custom_call.1} parent=5 // pred_check_branch
        %511 = sbr.rel (%p508) target = $region12
      $region11: #{tpu_custom_call.1} parent=5 // pred_region
        %s512 = ssub.s32 %s24, 1
        // Predicated region
        $region13: #{tpu_custom_call.1} parent=11 // pred_check
          %p513 = pneg %p206
        $region14: #{tpu_custom_call.1} parent=11 // pred_check_branch
          %515 = sbr.rel (%p513) target = $region16
        $region15: #{tpu_custom_call.1} parent=11 // pred_region
          _
        $region16: #{tpu_custom_call.1} parent=11 // pred_fallthru
          _
        // Predicated region
        $region17: #{tpu_custom_call.1} parent=11 // pred_check
          %p516 = pneg %p227
        $region18: #{tpu_custom_call.1} parent=11 // pred_check_branch
          %518 = sbr.rel (%p516) target = $region20
        $region19: #{tpu_custom_call.1} parent=11 // pred_region
          _
        $region20: #{tpu_custom_call.1} parent=11 // pred_fallthru
          _
        // Predicated region
        $region21: #{tpu_custom_call.1} parent=11 // pred_check
          %p519 = pneg %p456
        $region22: #{tpu_custom_call.1} parent=11 // pred_check_branch
          %521 = sbr.rel (%p519) target = $region24
        $region23: #{tpu_custom_call.1} parent=11 // pred_region
          _
        $region24: #{tpu_custom_call.1} parent=11 // pred_fallthru
          _
        // Predicated region
        $region25: #{tpu_custom_call.1} parent=11 // pred_check
          %p522 = pneg %p477
        $region26: #{tpu_custom_call.1} parent=11 // pred_check_branch
          %524 = sbr.rel (%p522) target = $region28
        $region27: #{tpu_custom_call.1} parent=11 // pred_region
          _
        $region28: #{tpu_custom_call.1} parent=11 // pred_fallthru
          _
      $region12: #{tpu_custom_call.1} parent=5 // pred_fallthru
        _
      %p525 = scmp.lt.s32.totalorder %s24, 18
      // Predicated region
      $region29: #{tpu_custom_call.1} parent=5 // pred_check
        %p526 = pneg %p525
      $region30: #{tpu_custom_call.1} parent=5 // pred_check_branch
        %528 = sbr.rel (%p526) target = $region32
      $region31: #{tpu_custom_call.1} parent=5 // pred_region
        // Predicated region
        $region33: #{tpu_custom_call.1} parent=31 // pred_check
          %p529 = pneg %p73
        $region34: #{tpu_custom_call.1} parent=31 // pred_check_branch
          %531 = sbr.rel (%p529) target = $region36
        $region35: #{tpu_custom_call.1} parent=31 // pred_region
          %p532 = scmp.eq.s32.totalorder %s31, 0
          %p533 = scmp.eq.s32.totalorder %s32, 0
          %p534 = pnand %p532, %p533
          %p535 = pneg %p534
          %s536 = scalar_select %p535, %s33, 0
          %s537 = smul.u32 16, %s536
          %p538 = scmp.lt.s32.totalorder %s537, 47
          %s539 = scalar_select %p538, %s537, 47
          %s540 = smul.addr %s539, 8
          %s541 = scalar_lea.vmem %s0, %s540
          %p542 = scmp.eq.s32.totalorder %s31, 0
          %p543 = scmp.eq.s32.totalorder %s32, 0
          %p544 = pnand %p542, %p543
          %p545 = pneg %p544
          %s546 = scalar_select %p545, %s33, 0
          %s547 = smul.u32 16, %s546
        $region36: #{tpu_custom_call.1} parent=31 // pred_fallthru
          _
        // Predicated region
        $region37: #{tpu_custom_call.1} parent=31 // pred_check
          %p548 = pneg %p101
        $region38: #{tpu_custom_call.1} parent=31 // pred_check_branch
          %550 = sbr.rel (%p548) target = $region40
        $region39: #{tpu_custom_call.1} parent=31 // pred_region
          %s551 = sand.u32 %s91, 1
          %s552 = sand.u32 %s91, 1
          %s553 = smul.addr %s552, 32
          %s554 = scalar_lea.vmem [#allocation7], %s553
          %s555 = smul.u32 4, %s32
          %s556 = smul.addr %s555, 3
          %s557 = sadd.s32 %s33, %s556
          %s558 = smul.addr %s557, 8
          %s559 = scalar_lea.vmem %s1, %s558
          // Predicated region
          $region41: #{tpu_custom_call.1} parent=39 // pred_check
            _
          $region42: #{tpu_custom_call.1} parent=39 // pred_check_branch
            %561 = sbr.rel (0) target = $region44
          $region43: #{tpu_custom_call.1} parent=39 // pred_region
            // Predicated region
            $region45: #{tpu_custom_call.1} parent=43 // pred_check
              _
            $region46: #{tpu_custom_call.1} parent=43 // pred_check_branch
              %563 = sbr.rel (0) target = $region48
            $region47: #{tpu_custom_call.1} parent=43 // pred_region
              // Predicated region
              $region60: #{tpu_custom_call.1} parent=47 // pred_check
                _
              $region61: #{tpu_custom_call.1} parent=47 // pred_check_branch
                %584 = sbr.rel (0) target = $region63
              $region62: #{tpu_custom_call.1} parent=47 // pred_region
                loop: start=0, step=1, limit=1
                $region64: #{tpu_custom_call.1} parent=62 // loop_pre_header
                  _
                $region65: #{tpu_custom_call.1} parent=62 // loop_header
                  %s586 = sphi 0, %s590
                  %p587 = scmp.ge.s32.totalorder %s586, 1
                  %s591 = sphi %s559, %s559
                  %s592 = sphi %s554, %s554
                $region66: #{tpu_custom_call.1} parent=62 // loop_header_branch
                  %589 = sbr.rel (%p587) target = $region70
                $region67: #{tpu_custom_call.1} parent=62 // loop_body
                  %v593 = vld [vmem:[%s591] sm:$0xff]
                  %594 = vst [vmem:[%s592] sm:$0xff] %v593
                  %v595 = vld [vmem:[%s591 + $0x18] sm:$0xff]
                  %596 = vst [vmem:[%s592 + $0x8] sm:$0xff] %v595
                  %v597 = vld [vmem:[%s591 + $0x30] sm:$0xff]
                  %598 = vst [vmem:[%s592 + $0x10] sm:$0xff] %v597
                  %v599 = vld [vmem:[%s591 + $0x48] sm:$0xff]
                  %600 = vst [vmem:[%s592 + $0x18] sm:$0xff] %v599
                $region68: #{tpu_custom_call.1} parent=62 // loop_footer
                  %s590 = sadd.s32 1, %s586
                $region69: #{tpu_custom_call.1} parent=62 // loop_footer_branch
                  %585 = sbr.rel target = $region65
                $region70: #{tpu_custom_call.1} parent=62 // loop_exit
                  _
              $region63: #{tpu_custom_call.1} parent=47 // pred_fallthru
                _
              // Predicated region
              $region71: #{tpu_custom_call.1} parent=47 // pred_check
                _
              $region72: #{tpu_custom_call.1} parent=47 // pred_check_branch
                %602 = sbr.rel target = $region74
              $region73: #{tpu_custom_call.1} parent=47 // pred_region
                _
              $region74: #{tpu_custom_call.1} parent=47 // pred_fallthru
                _
            $region48: #{tpu_custom_call.1} parent=43 // pred_fallthru
              _
            // Predicated region
            $region49: #{tpu_custom_call.1} parent=43 // pred_check
              _
            $region50: #{tpu_custom_call.1} parent=43 // pred_check_branch
              %565 = sbr.rel target = $region52
            $region51: #{tpu_custom_call.1} parent=43 // pred_region
              loop: start=0, step=1, limit=1
              $region53: #{tpu_custom_call.1} parent=51 // loop_pre_header
                _
              $region54: #{tpu_custom_call.1} parent=51 // loop_header
                %s568 = sphi 0, %s572
                %p569 = scmp.ge.s32.totalorder %s568, 1
                %s573 = sphi %s559, %s559
                %s574 = sphi %s554, %s554
              $region55: #{tpu_custom_call.1} parent=51 // loop_header_branch
                %571 = sbr.rel (%p569) target = $region59
              $region56: #{tpu_custom_call.1} parent=51 // loop_body
                %v575 = vld [vmem:[%s573] sm:$0xff]
                %576 = vst [vmem:[%s574] sm:$0xff] %v575
                %v577 = vld [vmem:[%s573 + $0x18] sm:$0xff]
                %578 = vst [vmem:[%s574 + $0x8] sm:$0xff] %v577
                %v579 = vld [vmem:[%s573 + $0x30] sm:$0xff]
                %580 = vst [vmem:[%s574 + $0x10] sm:$0xff] %v579
                %v581 = vld [vmem:[%s573 + $0x48] sm:$0xff]
                %582 = vst [vmem:[%s574 + $0x18] sm:$0xff] %v581
              $region57: #{tpu_custom_call.1} parent=51 // loop_footer
                %s572 = sadd.s32 1, %s568
              $region58: #{tpu_custom_call.1} parent=51 // loop_footer_branch
                %567 = sbr.rel target = $region54
              $region59: #{tpu_custom_call.1} parent=51 // loop_exit
                _
            $region52: #{tpu_custom_call.1} parent=43 // pred_fallthru
              _
          $region44: #{tpu_custom_call.1} parent=39 // pred_fallthru
            _
          %603 = vnop
        $region40: #{tpu_custom_call.1} parent=31 // pred_fallthru
          _
        // Predicated region
        $region75: #{tpu_custom_call.1} parent=31 // pred_check
          %p604 = pneg %p127
        $region76: #{tpu_custom_call.1} parent=31 // pred_check_branch
          %606 = sbr.rel (%p604) target = $region78
        $region77: #{tpu_custom_call.1} parent=31 // pred_region
          %s607 = smul.u32 16, %s32
          %p608 = scmp.lt.s32.totalorder %s607, 47
          %s609 = scalar_select %p608, %s607, 47
          %s610 = smul.addr %s609, 8
          %s611 = scalar_lea.vmem %s2, %s610
          %s612 = smul.u32 16, %s32
        $region78: #{tpu_custom_call.1} parent=31 // pred_fallthru
          _
        // Predicated region
        $region79: #{tpu_custom_call.1} parent=31 // pred_check
          %p613 = pneg %p153
        $region80: #{tpu_custom_call.1} parent=31 // pred_check_branch
          %615 = sbr.rel (%p613) target = $region82
        $region81: #{tpu_custom_call.1} parent=31 // pred_region
          %s616 = smul.u32 16, %s32
          %p617 = scmp.lt.s32.totalorder %s616, 47
          %s618 = scalar_select %p617, %s616, 47
          %s619 = smul.addr %s618, 8
          %s620 = scalar_lea.vmem %s3, %s619
          %s621 = smul.u32 16, %s32
        $region82: #{tpu_custom_call.1} parent=31 // pred_fallthru
          _
        // Predicated region
        $region83: #{tpu_custom_call.1} parent=31 // pred_check
          %p622 = pneg %p179
        $region84: #{tpu_custom_call.1} parent=31 // pred_check_branch
          %624 = sbr.rel (%p622) target = $region86
        $region85: #{tpu_custom_call.1} parent=31 // pred_region
          %p625 = scmp.lt.s32.totalorder %s32, 2
          %s626 = scalar_select %p625, %s32, 2
          %s627 = smul.addr %s626, 8
          %s628 = scalar_lea.vmem %s4, %s627
        $region86: #{tpu_custom_call.1} parent=31 // pred_fallthru
          _
        // Predicated region
        $region87: #{tpu_custom_call.1} parent=31 // pred_check
          %p629 = pneg %p247
        $region88: #{tpu_custom_call.1} parent=31 // pred_check_branch
          %631 = sbr.rel (%p629) target = $region90
        $region89: #{tpu_custom_call.1} parent=31 // pred_region
          %p632 = scmp.lt.s32.totalorder %s31, 1
          %s633 = scalar_select %p632, %s31, 1
          %s634 = smul.addr %s633, 8
          %s635 = scalar_lea.vmem %s7, %s634
        $region90: #{tpu_custom_call.1} parent=31 // pred_fallthru
          _
        // Predicated region
        $region91: #{tpu_custom_call.1} parent=31 // pred_check
          %p636 = pneg %p273
        $region92: #{tpu_custom_call.1} parent=31 // pred_check_branch
          %638 = sbr.rel (%p636) target = $region94
        $region93: #{tpu_custom_call.1} parent=31 // pred_region
          %p639 = scmp.lt.s32.totalorder %s31, 1
          %s640 = scalar_select %p639, %s31, 1
          %s641 = scalar_lea.vmem %s8, %s640
        $region94: #{tpu_custom_call.1} parent=31 // pred_fallthru
          _
        // Predicated region
        $region95: #{tpu_custom_call.1} parent=31 // pred_check
          %p642 = pneg %p299
        $region96: #{tpu_custom_call.1} parent=31 // pred_check_branch
          %644 = sbr.rel (%p642) target = $region98
        $region97: #{tpu_custom_call.1} parent=31 // pred_region
          %p645 = scmp.lt.s32.totalorder %s31, 1
          %s646 = scalar_select %p645, %s31, 1
          %s647 = smul.addr %s646, 16
          %s648 = smul.addr %s647, 8
          %s649 = scalar_lea.vmem %s9, %s648
        $region98: #{tpu_custom_call.1} parent=31 // pred_fallthru
          _
        // Predicated region
        $region99: #{tpu_custom_call.1} parent=31 // pred_check
          %p650 = pneg %p325
        $region100: #{tpu_custom_call.1} parent=31 // pred_check_branch
          %652 = sbr.rel (%p650) target = $region102
        $region101: #{tpu_custom_call.1} parent=31 // pred_region
          %p653 = scmp.lt.s32.totalorder %s31, 1
          %s654 = scalar_select %p653, %s31, 1
          %s655 = scalar_lea.vmem %s10, %s654
        $region102: #{tpu_custom_call.1} parent=31 // pred_fallthru
          _
        // Predicated region
        $region103: #{tpu_custom_call.1} parent=31 // pred_check
          %p656 = pneg %p351
        $region104: #{tpu_custom_call.1} parent=31 // pred_check_branch
          %658 = sbr.rel (%p656) target = $region106
        $region105: #{tpu_custom_call.1} parent=31 // pred_region
          %p659 = scmp.lt.s32.totalorder %s31, 1
          %s660 = scalar_select %p659, %s31, 1
          %s661 = smul.addr %s660, 16
          %s662 = smul.addr %s661, 8
          %s663 = scalar_lea.vmem %s11, %s662
        $region106: #{tpu_custom_call.1} parent=31 // pred_fallthru
          _
        // Predicated region
        $region107: #{tpu_custom_call.1} parent=31 // pred_check
          %p664 = pneg %p377
        $region108: #{tpu_custom_call.1} parent=31 // pred_check_branch
          %666 = sbr.rel (%p664) target = $region110
        $region109: #{tpu_custom_call.1} parent=31 // pred_region
          %p667 = scmp.lt.s32.totalorder %s31, 1
          %s668 = scalar_select %p667, %s31, 1
          %s669 = scalar_lea.vmem %s12, %s668
        $region110: #{tpu_custom_call.1} parent=31 // pred_fallthru
          _
        // Predicated region
        $region111: #{tpu_custom_call.1} parent=31 // pred_check
          %p670 = pneg %p403
        $region112: #{tpu_custom_call.1} parent=31 // pred_check_branch
          %672 = sbr.rel (%p670) target = $region114
        $region113: #{tpu_custom_call.1} parent=31 // pred_region
          %p673 = scmp.lt.s32.totalorder %s31, 1
          %s674 = scalar_select %p673, %s31, 1
          %s675 = scalar_lea.vmem %s13, %s674
        $region114: #{tpu_custom_call.1} parent=31 // pred_fallthru
          _
        // Predicated region
        $region115: #{tpu_custom_call.1} parent=31 // pred_check
          %p676 = pneg %p429
        $region116: #{tpu_custom_call.1} parent=31 // pred_check_branch
          %678 = sbr.rel (%p676) target = $region118
        $region117: #{tpu_custom_call.1} parent=31 // pred_region
          %p679 = scmp.lt.s32.totalorder %s31, 1
          %s680 = scalar_select %p679, %s31, 1
          %s681 = scalar_lea.vmem %s14, %s680
        $region118: #{tpu_custom_call.1} parent=31 // pred_fallthru
          _
      $region32: #{tpu_custom_call.1} parent=5 // pred_fallthru
        _
      %p682 = scmp.le.s32.totalorder 1, %s24
      %p683 = scmp.lt.s32.totalorder %s24, 19
      %p684 = pnand %p682, %p683
      %p685 = pneg %p684
      // Predicated region
      $region119: #{tpu_custom_call.1} parent=5 // pred_check
        _
      $region120: #{tpu_custom_call.1} parent=5 // pred_check_branch
        %687 = sbr.rel (%p684) target = $region122
      $region121: #{tpu_custom_call.1} parent=5 // pred_region
        %s688 = ssub.s32 %s24, 1
        %s689 = sand.u32 %s94, 1
        %s690 = sand.u32 %s94, 1
        %s691 = smul.addr %s690, 32
        %s692 = scalar_lea.vmem [#allocation7], %s691
        // Predicated region
        $region123: #{tpu_custom_call.1} parent=121 // pred_check
          %p693 = pneg %p107
        $region124: #{tpu_custom_call.1} parent=121 // pred_check_branch
          %695 = sbr.rel (%p693) target = $region126
        $region125: #{tpu_custom_call.1} parent=121 // pred_region
          _
        $region126: #{tpu_custom_call.1} parent=121 // pred_fallthru
          _
        %p696 = scmp.eq.s32.totalorder %s34, 0
        %p697 = scmp.eq.s32.totalorder %s35, 0
        %p698 = pnand %p696, %p697
        %p699 = pneg %p698
        %s700 = scalar_select %p699, %s36, 0
        %s701 = smul.u32 16, %s700
        %p702 = scmp.lt.s32.totalorder %s701, 47
        %s703 = scalar_select %p702, %s701, 47
        %s704 = smul.addr %s703, 8
        %s705 = scalar_lea.vmem %s0, %s704
        %p706 = pneg %p79
        %p707 = pneg %p76
        %s708 = sand.u32 %s94, 1
        %s709 = sand.u32 %s94, 1
        %s710 = smul.addr %s709, 32
        %s711 = scalar_lea.vmem [#allocation7], %s710
        %p712 = pneg %p107
        %p713 = pneg %p104
        %s714 = smul.u32 16, %s35
        %p715 = scmp.lt.s32.totalorder %s714, 47
        %s716 = scalar_select %p715, %s714, 47
        %s717 = smul.addr %s716, 8
        %s718 = scalar_lea.vmem %s2, %s717
        %p719 = pneg %p133
        %p720 = pneg %p130
        %s721 = smul.u32 16, %s35
        %p722 = scmp.lt.s32.totalorder %s721, 47
        %s723 = scalar_select %p722, %s721, 47
        %s724 = smul.addr %s723, 8
        %s725 = scalar_lea.vmem %s3, %s724
        %p726 = pneg %p159
        %p727 = pneg %p156
        %p728 = scmp.lt.s32.totalorder %s35, 2
        %s729 = scalar_select %p728, %s35, 2
        %s730 = smul.addr %s729, 8
        %s731 = scalar_lea.vmem %s4, %s730
        %p732 = pneg %p185
        %p733 = pneg %p182
        %p734 = pneg %p206
        %p735 = pneg %p203
        %p736 = pneg %p227
        %p737 = pneg %p224
        %p738 = scmp.lt.s32.totalorder %s34, 1
        %s739 = scalar_select %p738, %s34, 1
        %s740 = smul.addr %s739, 8
        %s741 = scalar_lea.vmem %s7, %s740
        %p742 = pneg %p253
        %p743 = pneg %p250
        %p744 = scmp.lt.s32.totalorder %s34, 1
        %s745 = scalar_select %p744, %s34, 1
        %s746 = scalar_lea.vmem %s8, %s745
        %p747 = pneg %p279
        %p748 = pneg %p276
        %p749 = scmp.lt.s32.totalorder %s34, 1
        %s750 = scalar_select %p749, %s34, 1
        %s751 = smul.addr %s750, 16
        %s752 = smul.addr %s751, 8
        %s753 = scalar_lea.vmem %s9, %s752
        %p754 = pneg %p305
        %p755 = pneg %p302
        %p756 = scmp.lt.s32.totalorder %s34, 1
        %s757 = scalar_select %p756, %s34, 1
        %s758 = scalar_lea.vmem %s10, %s757
        %p759 = pneg %p331
        %p760 = pneg %p328
        %p761 = scmp.lt.s32.totalorder %s34, 1
        %s762 = scalar_select %p761, %s34, 1
        %s763 = smul.addr %s762, 16
        %s764 = smul.addr %s763, 8
        %s765 = scalar_lea.vmem %s11, %s764
        %p766 = pneg %p357
        %p767 = pneg %p354
        %p768 = scmp.lt.s32.totalorder %s34, 1
        %s769 = scalar_select %p768, %s34, 1
        %s770 = scalar_lea.vmem %s12, %s769
        %p771 = pneg %p383
        %p772 = pneg %p380
        %p773 = scmp.lt.s32.totalorder %s34, 1
        %s774 = scalar_select %p773, %s34, 1
        %s775 = scalar_lea.vmem %s13, %s774
        %p776 = pneg %p409
        %p777 = pneg %p406
        %p778 = scmp.lt.s32.totalorder %s34, 1
        %s779 = scalar_select %p778, %s34, 1
        %s780 = scalar_lea.vmem %s14, %s779
        %p781 = pneg %p435
        %p782 = pneg %p432
        %p783 = pneg %p456
        %p784 = pneg %p453
        %p785 = pneg %p477
        %p786 = pneg %p474
        %p787 = pneg %p498
        %p788 = pneg %p495
        %p789 = scmp.eq.s32.totalorder %s34, 0
        %p790 = scmp.eq.s32.totalorder %s35, 0
        %p791 = pnand %p789, %p790
        %p792 = pneg %p791
        %s793 = scalar_select %p792, %s36, 0
        %s794 = smul.u32 16, %s793
        %p795 = scmp.lt.s32.totalorder %s794, 47
        %s796 = scalar_select %p795, %s794, 47
        %s797 = smul.addr %s796, 8
        %s798 = scalar_lea.vmem %s0, %s797
        %p799 = scmp.eq.s32.totalorder %s34, 0
        %p800 = scmp.eq.s32.totalorder %s35, 0
        %p801 = pnand %p799, %p800
        %p802 = pneg %p801
        %s803 = scalar_select %p802, %s36, 0
        %s804 = smul.u32 16, %s803
        %s805 = smul.u32 4, %s35
        %s806 = smul.u32 16, %s35
        %p807 = scmp.lt.s32.totalorder %s806, 47
        %s808 = scalar_select %p807, %s806, 47
        %s809 = smul.addr %s808, 8
        %s810 = scalar_lea.vmem %s2, %s809
        %s811 = smul.u32 16, %s35
        %s812 = smul.u32 16, %s35
        %p813 = scmp.lt.s32.totalorder %s812, 47
        %s814 = scalar_select %p813, %s812, 47
        %s815 = smul.addr %s814, 8
        %s816 = scalar_lea.vmem %s3, %s815
        %s817 = smul.u32 16, %s35
        %p818 = scmp.lt.s32.totalorder %s35, 2
        %s819 = scalar_select %p818, %s35, 2
        %s820 = smul.addr %s819, 8
        %s821 = scalar_lea.vmem %s4, %s820
        %p822 = scmp.lt.s32.totalorder %s34, 1
        %s823 = scalar_select %p822, %s34, 1
        %s824 = smul.addr %s823, 8
        %s825 = scalar_lea.vmem %s7, %s824
        %p826 = scmp.lt.s32.totalorder %s34, 1
        %s827 = scalar_select %p826, %s34, 1
        %s828 = scalar_lea.vmem %s8, %s827
        %p829 = scmp.lt.s32.totalorder %s34, 1
        %s830 = scalar_select %p829, %s34, 1
        %s831 = smul.addr %s830, 16
        %s832 = smul.addr %s831, 8
        %s833 = scalar_lea.vmem %s9, %s832
        %p834 = scmp.lt.s32.totalorder %s34, 1
        %s835 = scalar_select %p834, %s34, 1
        %s836 = scalar_lea.vmem %s10, %s835
        %p837 = scmp.lt.s32.totalorder %s34, 1
        %s838 = scalar_select %p837, %s34, 1
        %s839 = smul.addr %s838, 16
        %s840 = smul.addr %s839, 8
        %s841 = scalar_lea.vmem %s11, %s840
        %p842 = scmp.lt.s32.totalorder %s34, 1
        %s843 = scalar_select %p842, %s34, 1
        %s844 = scalar_lea.vmem %s12, %s843
        %p845 = scmp.lt.s32.totalorder %s34, 1
        %s846 = scalar_select %p845, %s34, 1
        %s847 = scalar_lea.vmem %s13, %s846
        %p848 = scmp.lt.s32.totalorder %s34, 1
        %s849 = scalar_select %p848, %s34, 1
        %s850 = scalar_lea.vmem %s14, %s849
        %p852 = scmp.lt.s32.totalorder %s34, 0
        %s853 = ssub.s32 0, %s34
        %s854 = scalar_select %p852, %s853, %s34
        %s855 = sand.u32 %s854, 1
        %s856 = ssub.s32 0, %s855
        %s857 = scalar_select %p852, %s856, %s855
        %p858 = scmp.ne.s32.totalorder %s857, 0
        %p859 = scmp.lt.s32.totalorder %s857, 0
        %p860 = pnand %p859, %p858
        %p861 = pneg %p860
        %s862 = sadd.s32 %s857, 2
        %s863 = scalar_select %p861, %s862, %s857
        %s864 = smul.u32 %s863, 384
        %s865 = sadd.s32 %s34, 1
        %p866 = scmp.lt.s32.totalorder %s865, 0
        %s867 = ssub.s32 0, %s865
        %s868 = scalar_select %p866, %s867, %s865
        %s869 = sand.u32 %s868, 1
        %s870 = ssub.s32 0, %s869
        %s871 = scalar_select %p866, %s870, %s869
        %p872 = scmp.ne.s32.totalorder %s871, 0
        %p873 = scmp.lt.s32.totalorder %s871, 0
        %p874 = pnand %p873, %p872
        %p875 = pneg %p874
        %s876 = sadd.s32 %s871, 2
        %s877 = scalar_select %p875, %s876, %s871
        %s878 = smul.u32 %s877, 384
        %s879 = smul.u32 %s36, 128
        %s880 = smul.u32 %s35, 128
        %p881 = scmp.eq.s32.totalorder %s34, 0
        %p882 = scmp.eq.s32.totalorder %s35, 0
        %p883 = pnand %p881, %p882
        %p884 = pneg %p883
        %p885 = scmp.eq.s32.totalorder %s36, 0
        %p886 = pnand %p884, %p885
        %p887 = pneg %p886
        // Predicated region
        $region127: #{tpu_custom_call.1} parent=121 // pred_check
          _
        $region128: #{tpu_custom_call.1} parent=121 // pred_check_branch
          %889 = sbr.rel (%p886) target = $region130
        $region129: #{tpu_custom_call.1} parent=121 // pred_region
          %890 = vst [vmem:[#allocation4] sm:$0x3] 0.0
          %891 = vst [vmem:[#allocation6] sm:$0xff] 0.0
        $region130: #{tpu_custom_call.1} parent=121 // pred_fallthru
          _
        // Predicated region
        $region131: #{tpu_custom_call.1} parent=121 // pred_check
          _
        $region132: #{tpu_custom_call.1} parent=121 // pred_check_branch
          %893 = sbr.rel (%p883) target = $region134
        $region133: #{tpu_custom_call.1} parent=121 // pred_region
          %v894 = vld [vmem:[%s798] sm:$0xff]
          %v895 = vld [vmem:[%s798 + $0x8] sm:$0xff]
          %v896 = vld [vmem:[%s798 + $0x10] sm:$0xff]
          %v897 = vld [vmem:[%s798 + $0x18] sm:$0xff]
          %v898 = vld [vmem:[%s798 + $0x20] sm:$0xff]
          %v899 = vld [vmem:[%s798 + $0x28] sm:$0xff]
          %v900 = vld [vmem:[%s798 + $0x30] sm:$0xff]
          %v901 = vld [vmem:[%s798 + $0x38] sm:$0xff]
          %v902 = vld [vmem:[%s798 + $0x40] sm:$0xff]
          %v903 = vld [vmem:[%s798 + $0x48] sm:$0xff]
          %v904 = vld [vmem:[%s798 + $0x50] sm:$0xff]
          %v905 = vld [vmem:[%s798 + $0x58] sm:$0xff]
          %v906 = vld [vmem:[%s798 + $0x60] sm:$0xff]
          %v907 = vld [vmem:[%s798 + $0x68] sm:$0xff]
          %v908 = vld [vmem:[%s798 + $0x70] sm:$0xff]
          %v909 = vld [vmem:[%s798 + $0x78] sm:$0xff]
          %v910 = vld [vmem:[%s5] sm:$0xff]
          %v911 = vld [vmem:[%s5 + $0x8] sm:$0xff]
          %v912 = vld [vmem:[%s6] sm:$0x1]
          %v914 = vlaneseq
          %v915 = vshrl.u32 %v914, 7
          %v916 = vsub.s32 0, %v915
          %v917 = vrot.slane %v912, %v916
          %vm919 = vcmask 130048
          %v921 = vsel %vm919, %v894, 0
          %v924 = vsel %vm919, %v895, 0
          %v927 = vsel %vm919, %v896, 0
          %v930 = vsel %vm919, %v897, 0
          %v933 = vsel %vm919, %v898, 0
          %v936 = vsel %vm919, %v899, 0
          %v939 = vsel %vm919, %v900, 0
          %v942 = vsel %vm919, %v901, 0
          %v945 = vsel %vm919, %v902, 0
          %v948 = vsel %vm919, %v903, 0
          %v951 = vsel %vm919, %v904, 0
          %v954 = vsel %vm919, %v905, 0
          %v957 = vsel %vm919, %v906, 0
          %v960 = vsel %vm919, %v907, 0
          %v963 = vsel %vm919, %v908, 0
          %v966 = vsel %vm919, %v909, 0
          %968 = vmatprep.subr.mxu0 0.0
          %969 = vmatpush1.msra.mxu0 %v910
          %970 = vmatprep.subr.mxu0 0.0
          %971 = vmatpush1.msra.mxu0 %v911
          %972 = vmatprep.subr.mxu0 0.0
          %973 = vmatpush1.msra.mxu0 0.0
          %974 = vmatprep.subr.mxu0 0.0
          %975 = vmatpush1.msra.mxu0 0.0
          %976 = vmatprep.subr.mxu0 0.0
          %977 = vmatpush1.msra.mxu0 0.0
          %978 = vmatprep.subr.mxu0 0.0
          %979 = vmatpush1.msra.mxu0 0.0
          %980 = vmatprep.subr.mxu0 0.0
          %981 = vmatpush1.msra.mxu0 0.0
          %982 = vmatprep.subr.mxu0 0.0
          %983 = vmatpush1.msra.mxu0 0.0
          %984 = vmatprep.subr.mxu0 0.0
          %985 = vmatpush1.msra.mxu0 0.0
          %986 = vmatprep.subr.mxu0 0.0
          %987 = vmatpush1.msra.mxu0 0.0
          %988 = vmatprep.subr.mxu0 0.0
          %989 = vmatpush1.msra.mxu0 0.0
          %990 = vmatprep.subr.mxu0 0.0
          %991 = vmatpush1.msra.mxu0 0.0
          %992 = vmatprep.subr.mxu0 0.0
          %993 = vmatpush1.msra.mxu0 0.0
          %994 = vmatprep.subr.mxu0 0.0
          %995 = vmatpush1.msra.mxu0 0.0
          %996 = vmatprep.subr.mxu0 0.0
          %997 = vmatpush1.msra.mxu0 0.0
          %998 = vmatprep.subr.mxu0 0.0
          %999 = vmatpush1.msra.mxu0 0.0
          %1000 = vmatprep.subr.mxu0 0.0
          %1001 = vmatpush1.msra.mxu0 0.0
          %1002 = vmatprep.subr.mxu0 0.0
          %1003 = vmatpush1.msra.mxu0 0.0
          %1004 = vmatprep.subr.mxu0 0.0
          %1005 = vmatpush1.msra.mxu0 0.0
          %1006 = vmatprep.subr.mxu0 0.0
          %1007 = vmatpush1.msra.mxu0 0.0
          %1008 = vmatprep.subr.mxu0 0.0
          %1009 = vmatpush1.msra.mxu0 0.0
          %1010 = vmatprep.subr.mxu0 0.0
          %1011 = vmatpush1.msra.mxu0 0.0
          %1012 = vmatprep.subr.mxu0 0.0
          %1013 = vmatpush1.msra.mxu0 0.0
          %1014 = vmatprep.subr.mxu0 0.0
          %1015 = vmatpush1.msra.mxu0 0.0
          %1016 = vmatprep.subr.mxu0 0.0
          %1017 = vmatpush1.msra.mxu0 0.0
          %1018 = vmatprep.subr.mxu0 0.0
          %1019 = vmatpush1.msra.mxu0 0.0
          %1020 = vmatprep.subr.mxu0 0.0
          %1021 = vmatpush1.msra.mxu0 0.0
          %1022 = vmatprep.subr.mxu0 0.0
          %1023 = vmatpush1.msra.mxu0 0.0
          %1024 = vmatprep.subr.mxu0 0.0
          %1025 = vmatpush1.msra.mxu0 0.0
          %1026 = vmatprep.subr.mxu0 0.0
          %1027 = vmatpush1.msra.mxu0 0.0
          %1028 = vmatprep.subr.mxu0 0.0
          %1029 = vmatpush1.msra.mxu0 0.0
          %1030 = vmatprep.subr.mxu0 0.0
          %1031 = vmatpush1.msra.mxu0 0.0
          %1032 = vmatprep.mubr.f32.mxu0 0.0
          %1033 = vmatmul.mubr.f32.gmra.mrb[0].mxu0 %v921
          %v1034 = vpop.f32.mrb[0].mxu0
          %v1035 = vadd.f32 %v917, %v1034
          %v1036 = vpop.f32.mrb[0].mxu0
          %1037 = vmatprep.mubr.f32.mxu0 0.0
          %1038 = vmatmul.mubr.f32.gmra.mrb[0].mxu0 %v924
          %v1039 = vpop.f32.mrb[0].mxu0
          %v1040 = vadd.f32 %v917, %v1039
          %v1041 = vpop.f32.mrb[0].mxu0
          %1042 = vmatprep.mubr.f32.mxu0 0.0
          %1043 = vmatmul.mubr.f32.gmra.mrb[0].mxu0 %v927
          %v1044 = vpop.f32.mrb[0].mxu0
          %v1045 = vadd.f32 %v917, %v1044
          %v1046 = vpop.f32.mrb[0].mxu0
          %1047 = vmatprep.mubr.f32.mxu0 0.0
          %1048 = vmatmul.mubr.f32.gmra.mrb[0].mxu0 %v930
          %v1049 = vpop.f32.mrb[0].mxu0
          %v1050 = vadd.f32 %v917, %v1049
          %v1051 = vpop.f32.mrb[0].mxu0
          %1052 = vmatprep.mubr.f32.mxu0 0.0
          %1053 = vmatmul.mubr.f32.gmra.mrb[0].mxu0 %v933
          %v1054 = vpop.f32.mrb[0].mxu0
          %v1055 = vadd.f32 %v917, %v1054
          %v1056 = vpop.f32.mrb[0].mxu0
          %1057 = vmatprep.mubr.f32.mxu0 0.0
          %1058 = vmatmul.mubr.f32.gmra.mrb[0].mxu0 %v936
          %v1059 = vpop.f32.mrb[0].mxu0
          %v1060 = vadd.f32 %v917, %v1059
          %v1061 = vpop.f32.mrb[0].mxu0
          %1062 = vmatprep.mubr.f32.mxu0 0.0
          %1063 = vmatmul.mubr.f32.gmra.mrb[0].mxu0 %v939
          %v1064 = vpop.f32.mrb[0].mxu0
          %v1065 = vadd.f32 %v917, %v1064
          %v1066 = vpop.f32.mrb[0].mxu0
          %1067 = vmatprep.mubr.f32.mxu0 0.0
          %1068 = vmatmul.mubr.f32.gmra.mrb[0].mxu0 %v942
          %v1069 = vpop.f32.mrb[0].mxu0
          %v1070 = vadd.f32 %v917, %v1069
          %v1071 = vpop.f32.mrb[0].mxu0
          %1072 = vmatprep.mubr.f32.mxu0 0.0
          %1073 = vmatmul.mubr.f32.gmra.mrb[0].mxu0 %v945
          %v1074 = vpop.f32.mrb[0].mxu0
          %v1075 = vadd.f32 %v917, %v1074
          %v1076 = vpop.f32.mrb[0].mxu0
          %1077 = vmatprep.mubr.f32.mxu0 0.0
          %1078 = vmatmul.mubr.f32.gmra.mrb[0].mxu0 %v948
          %v1079 = vpop.f32.mrb[0].mxu0
          %v1080 = vadd.f32 %v917, %v1079
          %v1081 = vpop.f32.mrb[0].mxu0
          %1082 = vmatprep.mubr.f32.mxu0 0.0
          %1083 = vmatmul.mubr.f32.gmra.mrb[0].mxu0 %v951
          %v1084 = vpop.f32.mrb[0].mxu0
          %v1085 = vadd.f32 %v917, %v1084
          %v1086 = vpop.f32.mrb[0].mxu0
          %1087 = vmatprep.mubr.f32.mxu0 0.0
          %1088 = vmatmul.mubr.f32.gmra.mrb[0].mxu0 %v954
          %v1089 = vpop.f32.mrb[0].mxu0
          %v1090 = vadd.f32 %v917, %v1089
          %v1091 = vpop.f32.mrb[0].mxu0
          %1092 = vmatprep.mubr.f32.mxu0 0.0
          %1093 = vmatmul.mubr.f32.gmra.mrb[0].mxu0 %v957
          %v1094 = vpop.f32.mrb[0].mxu0
          %v1095 = vadd.f32 %v917, %v1094
          %v1096 = vpop.f32.mrb[0].mxu0
          %1097 = vmatprep.mubr.f32.mxu0 0.0
          %1098 = vmatmul.mubr.f32.gmra.mrb[0].mxu0 %v960
          %v1099 = vpop.f32.mrb[0].mxu0
          %v1100 = vadd.f32 %v917, %v1099
          %v1101 = vpop.f32.mrb[0].mxu0
          %1102 = vmatprep.mubr.f32.mxu0 0.0
          %1103 = vmatmul.mubr.f32.gmra.mrb[0].mxu0 %v963
          %v1104 = vpop.f32.mrb[0].mxu0
          %v1105 = vadd.f32 %v917, %v1104
          %v1106 = vpop.f32.mrb[0].mxu0
          %1107 = vmatprep.mubr.f32.mxu0 0.0
          %1108 = vmatmul.mubr.f32.gmra.mrb[0].mxu0 %v966
          %v1109 = vpop.f32.mrb[0].mxu0
          %v1110 = vadd.f32 %v917, %v1109
          %v1111 = vpop.f32.mrb[0].mxu0
          %1112 = vdwg.mxu0
          %v1113 = vpack.c.bf16 %v1040, %v1035
          %v1114 = vpack.c.bf16 %v1050, %v1045
          %v1115 = vpack.c.bf16 %v1060, %v1055
          %v1116 = vpack.c.bf16 %v1070, %v1065
          %v1117 = vpack.c.bf16 %v1080, %v1075
          %v1118 = vpack.c.bf16 %v1090, %v1085
          %v1119 = vpack.c.bf16 %v1100, %v1095
          %v1120 = vpack.c.bf16 %v1110, %v1105
          %s1121 = sadd.s32 %s864, %s879
          %s1122 = sshra.s32 %s1121, 4
          %s1123 = sand.u32 %s1121, 15
          %s1124 = smul.addr %s1122, 8
          %s1125 = scalar_lea.vmem [#allocation2], %s1124
          %1126 = vst [vmem:[%s1125] sm:$0xff] %v1113
          %1127 = vst [vmem:[%s1125 + $0x8] sm:$0xff] %v1114
          %1128 = vst [vmem:[%s1125 + $0x10] sm:$0xff] %v1115
          %1129 = vst [vmem:[%s1125 + $0x18] sm:$0xff] %v1116
          %1130 = vst [vmem:[%s1125 + $0x20] sm:$0xff] %v1117
          %1131 = vst [vmem:[%s1125 + $0x28] sm:$0xff] %v1118
          %1132 = vst [vmem:[%s1125 + $0x30] sm:$0xff] %v1119
          %1133 = vst [vmem:[%s1125 + $0x38] sm:$0xff] %v1120
        $region134: #{tpu_custom_call.1} parent=121 // pred_fallthru
          _
        %p1134 = scmp.gt.s32.totalorder %s34, 0
        %p1135 = pnand %p882, %p1134
        %p1136 = pneg %p1135
        // Predicated region
        $region135: #{tpu_custom_call.1} parent=121 // pred_check
          _
        $region136: #{tpu_custom_call.1} parent=121 // pred_check_branch
          %1138 = sbr.rel (%p1135) target = $region138
        $region137: #{tpu_custom_call.1} parent=121 // pred_region
          %s1139 = sadd.s32 %s864, %s879
          %s1140 = sshra.s32 %s1139, 4
          %s1141 = sand.u32 %s1139, 15
          %s1142 = smul.addr %s1140, 8
          %s1143 = scalar_lea.vmem [#allocation2], %s1142
          %v1144 = vld [vmem:[%s1143] sm:$0xff]
          %v1145 = vld [vmem:[%s1143 + $0x8] sm:$0xff]
          %v1146 = vld [vmem:[%s1143 + $0x10] sm:$0xff]
          %v1147 = vld [vmem:[%s1143 + $0x18] sm:$0xff]
          %v1148 = vld [vmem:[%s1143 + $0x20] sm:$0xff]
          %v1149 = vld [vmem:[%s1143 + $0x28] sm:$0xff]
          %v1150 = vld [vmem:[%s1143 + $0x30] sm:$0xff]
          %v1151 = vld [vmem:[%s1143 + $0x38] sm:$0xff]
          %v1152 = vunpack.c.l.bf16 %v1144
          %v1153 = vunpack.c.h.bf16 %v1144
          %v1154 = vunpack.c.l.bf16 %v1145
          %v1155 = vunpack.c.h.bf16 %v1145
          %v1156 = vunpack.c.l.bf16 %v1146
          %v1157 = vunpack.c.h.bf16 %v1146
          %v1158 = vunpack.c.l.bf16 %v1147
          %v1159 = vunpack.c.h.bf16 %v1147
          %v1160 = vunpack.c.l.bf16 %v1148
          %v1161 = vunpack.c.h.bf16 %v1148
          %v1162 = vunpack.c.l.bf16 %v1149
          %v1163 = vunpack.c.h.bf16 %v1149
          %v1164 = vunpack.c.l.bf16 %v1150
          %v1165 = vunpack.c.h.bf16 %v1150
          %v1166 = vunpack.c.l.bf16 %v1151
          %v1167 = vunpack.c.h.bf16 %v1151
          %v1168 = vld [vmem:[#allocation5] sm:$0x1]
          %v1169 = vlaneseq
          %v1170 = vshrl.u32 %v1169, 7
          %v1171 = vsub.s32 0, %v1170
          %v1172 = vrot.slane %v1168, %v1171
          %v1173 = vmul.f32 %v1152, %v1172
          %v1174 = vmul.f32 %v1153, %v1172
          %v1175 = vmul.f32 %v1154, %v1172
          %v1176 = vmul.f32 %v1155, %v1172
          %v1177 = vmul.f32 %v1156, %v1172
          %v1178 = vmul.f32 %v1157, %v1172
          %v1179 = vmul.f32 %v1158, %v1172
          %v1180 = vmul.f32 %v1159, %v1172
          %v1181 = vmul.f32 %v1160, %v1172
          %v1182 = vmul.f32 %v1161, %v1172
          %v1183 = vmul.f32 %v1162, %v1172
          %v1184 = vmul.f32 %v1163, %v1172
          %v1185 = vmul.f32 %v1164, %v1172
          %v1186 = vmul.f32 %v1165, %v1172
          %v1187 = vmul.f32 %v1166, %v1172
          %v1188 = vmul.f32 %v1167, %v1172
          %v1189 = vld [vmem:[#allocation5 + $0x1] sm:$0x1]
          %v1190 = vlaneseq
          %v1191 = vshrl.u32 %v1190, 7
          %v1192 = vsub.s32 0, %v1191
          %v1193 = vrot.slane %v1189, %v1192
          %v1194 = vadd.f32 %v1173, %v1193
          %v1195 = vadd.f32 %v1174, %v1193
          %v1196 = vadd.f32 %v1175, %v1193
          %v1197 = vadd.f32 %v1176, %v1193
          %v1198 = vadd.f32 %v1177, %v1193
          %v1199 = vadd.f32 %v1178, %v1193
          %v1200 = vadd.f32 %v1179, %v1193
          %v1201 = vadd.f32 %v1180, %v1193
          %v1202 = vadd.f32 %v1181, %v1193
          %v1203 = vadd.f32 %v1182, %v1193
          %v1204 = vadd.f32 %v1183, %v1193
          %v1205 = vadd.f32 %v1184, %v1193
          %v1206 = vadd.f32 %v1185, %v1193
          %v1207 = vadd.f32 %v1186, %v1193
          %v1208 = vadd.f32 %v1187, %v1193
          %v1209 = vadd.f32 %v1188, %v1193
          %v1210 = vmax.f32 %v1194, 0.0
          %v1211 = vmax.f32 %v1195, 0.0
          %v1212 = vmax.f32 %v1196, 0.0
          %v1213 = vmax.f32 %v1197, 0.0
          %v1214 = vmax.f32 %v1198, 0.0
          %v1215 = vmax.f32 %v1199, 0.0
          %v1216 = vmax.f32 %v1200, 0.0
          %v1217 = vmax.f32 %v1201, 0.0
          %v1218 = vmax.f32 %v1202, 0.0
          %v1219 = vmax.f32 %v1203, 0.0
          %v1220 = vmax.f32 %v1204, 0.0
          %v1221 = vmax.f32 %v1205, 0.0
          %v1222 = vmax.f32 %v1206, 0.0
          %v1223 = vmax.f32 %v1207, 0.0
          %v1224 = vmax.f32 %v1208, 0.0
          %v1225 = vmax.f32 %v1209, 0.0
          %v1226 = vpack.c.bf16 %v1211, %v1210
          %v1227 = vpack.c.bf16 %v1213, %v1212
          %v1228 = vpack.c.bf16 %v1215, %v1214
          %v1229 = vpack.c.bf16 %v1217, %v1216
          %v1230 = vpack.c.bf16 %v1219, %v1218
          %v1231 = vpack.c.bf16 %v1221, %v1220
          %v1232 = vpack.c.bf16 %v1223, %v1222
          %v1233 = vpack.c.bf16 %v1225, %v1224
          %1234 = vst [vmem:[%s1143] sm:$0xff] %v1226
          %1235 = vst [vmem:[%s1143 + $0x8] sm:$0xff] %v1227
          %1236 = vst [vmem:[%s1143 + $0x10] sm:$0xff] %v1228
          %1237 = vst [vmem:[%s1143 + $0x18] sm:$0xff] %v1229
          %1238 = vst [vmem:[%s1143 + $0x20] sm:$0xff] %v1230
          %1239 = vst [vmem:[%s1143 + $0x28] sm:$0xff] %v1231
          %1240 = vst [vmem:[%s1143 + $0x30] sm:$0xff] %v1232
          %1241 = vst [vmem:[%s1143 + $0x38] sm:$0xff] %v1233
        $region138: #{tpu_custom_call.1} parent=121 // pred_fallthru
          _
        // Predicated region
        $region139: #{tpu_custom_call.1} parent=121 // pred_check
          %p1242 = pneg %p885
        $region140: #{tpu_custom_call.1} parent=121 // pred_check_branch
          %1244 = sbr.rel (%p1242) target = $region142
        $region141: #{tpu_custom_call.1} parent=121 // pred_region
          %v1245 = vld [vmem:[%s810] sm:$0xff]
          %v1246 = vld [vmem:[%s810 + $0x8] sm:$0xff]
          %v1247 = vld [vmem:[%s810 + $0x10] sm:$0xff]
          %v1248 = vld [vmem:[%s810 + $0x18] sm:$0xff]
          %v1249 = vld [vmem:[%s810 + $0x20] sm:$0xff]
          %v1250 = vld [vmem:[%s810 + $0x28] sm:$0xff]
          %v1251 = vld [vmem:[%s810 + $0x30] sm:$0xff]
          %v1252 = vld [vmem:[%s810 + $0x38] sm:$0xff]
          %v1253 = vld [vmem:[%s810 + $0x40] sm:$0xff]
          %v1254 = vld [vmem:[%s810 + $0x48] sm:$0xff]
          %v1255 = vld [vmem:[%s810 + $0x50] sm:$0xff]
          %v1256 = vld [vmem:[%s810 + $0x58] sm:$0xff]
          %v1257 = vld [vmem:[%s810 + $0x60] sm:$0xff]
          %v1258 = vld [vmem:[%s810 + $0x68] sm:$0xff]
          %v1259 = vld [vmem:[%s810 + $0x70] sm:$0xff]
          %v1260 = vld [vmem:[%s810 + $0x78] sm:$0xff]
          %v1261 = vld [vmem:[%s825] sm:$0xff]
          %v1262 = vld [vmem:[%s816] sm:$0xff]
          %v1263 = vld [vmem:[%s816 + $0x8] sm:$0xff]
          %v1264 = vld [vmem:[%s816 + $0x10] sm:$0xff]
          %v1265 = vld [vmem:[%s816 + $0x18] sm:$0xff]
          %v1266 = vld [vmem:[%s816 + $0x20] sm:$0xff]
          %v1267 = vld [vmem:[%s816 + $0x28] sm:$0xff]
          %v1268 = vld [vmem:[%s816 + $0x30] sm:$0xff]
          %v1269 = vld [vmem:[%s816 + $0x38] sm:$0xff]
          %v1270 = vld [vmem:[%s816 + $0x40] sm:$0xff]
          %v1271 = vld [vmem:[%s816 + $0x48] sm:$0xff]
          %v1272 = vld [vmem:[%s816 + $0x50] sm:$0xff]
          %v1273 = vld [vmem:[%s816 + $0x58] sm:$0xff]
          %v1274 = vld [vmem:[%s816 + $0x60] sm:$0xff]
          %v1275 = vld [vmem:[%s816 + $0x68] sm:$0xff]
          %v1276 = vld [vmem:[%s816 + $0x70] sm:$0xff]
          %v1277 = vld [vmem:[%s816 + $0x78] sm:$0xff]
          %v1278 = vld [vmem:[%s828] sm:$0x1]
          %1280 = vset.pattern.permute.xlu0 0
          %1281 = vperm.xlu0 %1280, %v1262
          %v1282 = vpop.permute.xlu0 %1281
          %1285 = vset.pattern.permute.xlu0 0
          %1286 = vperm.xlu0 %1285, %v1263
          %v1287 = vpop.permute.xlu0 %1286
          %1290 = vset.pattern.permute.xlu0 0
          %1291 = vperm.xlu0 %1290, %v1264
          %v1292 = vpop.permute.xlu0 %1291
          %1295 = vset.pattern.permute.xlu0 0
          %1296 = vperm.xlu0 %1295, %v1265
          %v1297 = vpop.permute.xlu0 %1296
          %1300 = vset.pattern.permute.xlu0 0
          %1301 = vperm.xlu0 %1300, %v1266
          %v1302 = vpop.permute.xlu0 %1301
          %1305 = vset.pattern.permute.xlu0 0
          %1306 = vperm.xlu0 %1305, %v1267
          %v1307 = vpop.permute.xlu0 %1306
          %1310 = vset.pattern.permute.xlu0 0
          %1311 = vperm.xlu0 %1310, %v1268
          %v1312 = vpop.permute.xlu0 %1311
          %1315 = vset.pattern.permute.xlu0 0
          %1316 = vperm.xlu0 %1315, %v1269
          %v1317 = vpop.permute.xlu0 %1316
          %1320 = vset.pattern.permute.xlu0 0
          %1321 = vperm.xlu0 %1320, %v1270
          %v1322 = vpop.permute.xlu0 %1321
          %1325 = vset.pattern.permute.xlu0 0
          %1326 = vperm.xlu0 %1325, %v1271
          %v1327 = vpop.permute.xlu0 %1326
          %1330 = vset.pattern.permute.xlu0 0
          %1331 = vperm.xlu0 %1330, %v1272
          %v1332 = vpop.permute.xlu0 %1331
          %1335 = vset.pattern.permute.xlu0 0
          %1336 = vperm.xlu0 %1335, %v1273
          %v1337 = vpop.permute.xlu0 %1336
          %1340 = vset.pattern.permute.xlu0 0
          %1341 = vperm.xlu0 %1340, %v1274
          %v1342 = vpop.permute.xlu0 %1341
          %1345 = vset.pattern.permute.xlu0 0
          %1346 = vperm.xlu0 %1345, %v1275
          %v1347 = vpop.permute.xlu0 %1346
          %1350 = vset.pattern.permute.xlu0 0
          %1351 = vperm.xlu0 %1350, %v1276
          %v1352 = vpop.permute.xlu0 %1351
          %1355 = vset.pattern.permute.xlu0 0
          %1356 = vperm.xlu0 %1355, %v1277
          %v1357 = vpop.permute.xlu0 %1356
          %v1360 = vlaneseq
          %v1361 = vshrl.u32 %v1360, 7
          %v1362 = vsub.s32 0, %v1361
          %v1363 = vrot.slane %v1278, %v1362
          %v1365 = vmul.f32 %v1282, %v1363
          %v1366 = vmul.f32 %v1287, %v1363
          %v1367 = vmul.f32 %v1292, %v1363
          %v1368 = vmul.f32 %v1297, %v1363
          %v1369 = vmul.f32 %v1302, %v1363
          %v1370 = vmul.f32 %v1307, %v1363
          %v1371 = vmul.f32 %v1312, %v1363
          %v1372 = vmul.f32 %v1317, %v1363
          %v1373 = vmul.f32 %v1322, %v1363
          %v1374 = vmul.f32 %v1327, %v1363
          %v1375 = vmul.f32 %v1332, %v1363
          %v1376 = vmul.f32 %v1337, %v1363
          %v1377 = vmul.f32 %v1342, %v1363
          %v1378 = vmul.f32 %v1347, %v1363
          %v1379 = vmul.f32 %v1352, %v1363
          %v1380 = vmul.f32 %v1357, %v1363
          %vm1381 = vcmask 64512
          %v1383 = vsel %vm1381, %v1245, 0
          %v1386 = vsel %vm1381, %v1246, 0
          %v1389 = vsel %vm1381, %v1247, 0
          %v1392 = vsel %vm1381, %v1248, 0
          %v1395 = vsel %vm1381, %v1249, 0
          %v1398 = vsel %vm1381, %v1250, 0
          %v1401 = vsel %vm1381, %v1251, 0
          %v1404 = vsel %vm1381, %v1252, 0
          %v1407 = vsel %vm1381, %v1253, 0
          %v1410 = vsel %vm1381, %v1254, 0
          %v1413 = vsel %vm1381, %v1255, 0
          %v1416 = vsel %vm1381, %v1256, 0
          %v1419 = vsel %vm1381, %v1257, 0
          %v1422 = vsel %vm1381, %v1258, 0
          %v1425 = vsel %vm1381, %v1259, 0
          %v1428 = vsel %vm1381, %v1260, 0
          %1430 = vmatprep.subr.mxu0 0.0
          %1431 = vmatpush1.msra.mxu0 %v1261
          %1432 = vmatprep.subr.mxu0 0.0
          %1433 = vmatpush1.msra.mxu0 0.0
          %1434 = vmatprep.subr.mxu0 0.0
          %1435 = vmatpush1.msra.mxu0 0.0
          %1436 = vmatprep.subr.mxu0 0.0
          %1437 = vmatpush1.msra.mxu0 0.0
          %1438 = vmatprep.subr.mxu0 0.0
          %1439 = vmatpush1.msra.mxu0 0.0
          %1440 = vmatprep.subr.mxu0 0.0
          %1441 = vmatpush1.msra.mxu0 0.0
          %1442 = vmatprep.subr.mxu0 0.0
          %1443 = vmatpush1.msra.mxu0 0.0
          %1444 = vmatprep.subr.mxu0 0.0
          %1445 = vmatpush1.msra.mxu0 0.0
          %1446 = vmatprep.subr.mxu0 0.0
          %1447 = vmatpush1.msra.mxu0 0.0
          %1448 = vmatprep.subr.mxu0 0.0
          %1449 = vmatpush1.msra.mxu0 0.0
          %1450 = vmatprep.subr.mxu0 0.0
          %1451 = vmatpush1.msra.mxu0 0.0
          %1452 = vmatprep.subr.mxu0 0.0
          %1453 = vmatpush1.msra.mxu0 0.0
          %1454 = vmatprep.subr.mxu0 0.0
          %1455 = vmatpush1.msra.mxu0 0.0
          %1456 = vmatprep.subr.mxu0 0.0
          %1457 = vmatpush1.msra.mxu0 0.0
          %1458 = vmatprep.subr.mxu0 0.0
          %1459 = vmatpush1.msra.mxu0 0.0
          %1460 = vmatprep.subr.mxu0 0.0
          %1461 = vmatpush1.msra.mxu0 0.0
          %1462 = vmatprep.subr.mxu0 0.0
          %1463 = vmatpush1.msra.mxu0 0.0
          %1464 = vmatprep.subr.mxu0 0.0
          %1465 = vmatpush1.msra.mxu0 0.0
          %1466 = vmatprep.subr.mxu0 0.0
          %1467 = vmatpush1.msra.mxu0 0.0
          %1468 = vmatprep.subr.mxu0 0.0
          %1469 = vmatpush1.msra.mxu0 0.0
          %1470 = vmatprep.subr.mxu0 0.0
          %1471 = vmatpush1.msra.mxu0 0.0
          %1472 = vmatprep.subr.mxu0 0.0
          %1473 = vmatpush1.msra.mxu0 0.0
          %1474 = vmatprep.subr.mxu0 0.0
          %1475 = vmatpush1.msra.mxu0 0.0
          %1476 = vmatprep.subr.mxu0 0.0
          %1477 = vmatpush1.msra.mxu0 0.0
          %1478 = vmatprep.subr.mxu0 0.0
          %1479 = vmatpush1.msra.mxu0 0.0
          %1480 = vmatprep.subr.mxu0 0.0
          %1481 = vmatpush1.msra.mxu0 0.0
          %1482 = vmatprep.subr.mxu0 0.0
          %1483 = vmatpush1.msra.mxu0 0.0
          %1484 = vmatprep.subr.mxu0 0.0
          %1485 = vmatpush1.msra.mxu0 0.0
          %1486 = vmatprep.subr.mxu0 0.0
          %1487 = vmatpush1.msra.mxu0 0.0
          %1488 = vmatprep.subr.mxu0 0.0
          %1489 = vmatpush1.msra.mxu0 0.0
          %1490 = vmatprep.subr.mxu0 0.0
          %1491 = vmatpush1.msra.mxu0 0.0
          %1492 = vmatprep.subr.mxu0 0.0
          %1493 = vmatpush1.msra.mxu0 0.0
          %1494 = vmatprep.mubr.f32.mxu0 0.0
          %1495 = vmatmul.mubr.f32.gmra.mrb[0].mxu0 %v1383
          %v1496 = vpop.f32.mrb[0].mxu0
          %v1497 = vadd.f32 %v1365, %v1496
          %v1498 = vpop.f32.mrb[0].mxu0
          %1499 = vmatprep.mubr.f32.mxu0 0.0
          %1500 = vmatmul.mubr.f32.gmra.mrb[0].mxu0 %v1386
          %v1501 = vpop.f32.mrb[0].mxu0
          %v1502 = vadd.f32 %v1366, %v1501
          %v1503 = vpop.f32.mrb[0].mxu0
          %1504 = vmatprep.mubr.f32.mxu0 0.0
          %1505 = vmatmul.mubr.f32.gmra.mrb[0].mxu0 %v1389
          %v1506 = vpop.f32.mrb[0].mxu0
          %v1507 = vadd.f32 %v1367, %v1506
          %v1508 = vpop.f32.mrb[0].mxu0
          %1509 = vmatprep.mubr.f32.mxu0 0.0
          %1510 = vmatmul.mubr.f32.gmra.mrb[0].mxu0 %v1392
          %v1511 = vpop.f32.mrb[0].mxu0
          %v1512 = vadd.f32 %v1368, %v1511
          %v1513 = vpop.f32.mrb[0].mxu0
          %1514 = vmatprep.mubr.f32.mxu0 0.0
          %1515 = vmatmul.mubr.f32.gmra.mrb[0].mxu0 %v1395
          %v1516 = vpop.f32.mrb[0].mxu0
          %v1517 = vadd.f32 %v1369, %v1516
          %v1518 = vpop.f32.mrb[0].mxu0
          %1519 = vmatprep.mubr.f32.mxu0 0.0
          %1520 = vmatmul.mubr.f32.gmra.mrb[0].mxu0 %v1398
          %v1521 = vpop.f32.mrb[0].mxu0
          %v1522 = vadd.f32 %v1370, %v1521
          %v1523 = vpop.f32.mrb[0].mxu0
          %1524 = vmatprep.mubr.f32.mxu0 0.0
          %1525 = vmatmul.mubr.f32.gmra.mrb[0].mxu0 %v1401
          %v1526 = vpop.f32.mrb[0].mxu0
          %v1527 = vadd.f32 %v1371, %v1526
          %v1528 = vpop.f32.mrb[0].mxu0
          %1529 = vmatprep.mubr.f32.mxu0 0.0
          %1530 = vmatmul.mubr.f32.gmra.mrb[0].mxu0 %v1404
          %v1531 = vpop.f32.mrb[0].mxu0
          %v1532 = vadd.f32 %v1372, %v1531
          %v1533 = vpop.f32.mrb[0].mxu0
          %1534 = vmatprep.mubr.f32.mxu0 0.0
          %1535 = vmatmul.mubr.f32.gmra.mrb[0].mxu0 %v1407
          %v1536 = vpop.f32.mrb[0].mxu0
          %v1537 = vadd.f32 %v1373, %v1536
          %v1538 = vpop.f32.mrb[0].mxu0
          %1539 = vmatprep.mubr.f32.mxu0 0.0
          %1540 = vmatmul.mubr.f32.gmra.mrb[0].mxu0 %v1410
          %v1541 = vpop.f32.mrb[0].mxu0
          %v1542 = vadd.f32 %v1374, %v1541
          %v1543 = vpop.f32.mrb[0].mxu0
          %1544 = vmatprep.mubr.f32.mxu0 0.0
          %1545 = vmatmul.mubr.f32.gmra.mrb[0].mxu0 %v1413
          %v1546 = vpop.f32.mrb[0].mxu0
          %v1547 = vadd.f32 %v1375, %v1546
          %v1548 = vpop.f32.mrb[0].mxu0
          %1549 = vmatprep.mubr.f32.mxu0 0.0
          %1550 = vmatmul.mubr.f32.gmra.mrb[0].mxu0 %v1416
          %v1551 = vpop.f32.mrb[0].mxu0
          %v1552 = vadd.f32 %v1376, %v1551
          %v1553 = vpop.f32.mrb[0].mxu0
          %1554 = vmatprep.mubr.f32.mxu0 0.0
          %1555 = vmatmul.mubr.f32.gmra.mrb[0].mxu0 %v1419
          %v1556 = vpop.f32.mrb[0].mxu0
          %v1557 = vadd.f32 %v1377, %v1556
          %v1558 = vpop.f32.mrb[0].mxu0
          %1559 = vmatprep.mubr.f32.mxu0 0.0
          %1560 = vmatmul.mubr.f32.gmra.mrb[0].mxu0 %v1422
          %v1561 = vpop.f32.mrb[0].mxu0
          %v1562 = vadd.f32 %v1378, %v1561
          %v1563 = vpop.f32.mrb[0].mxu0
          %1564 = vmatprep.mubr.f32.mxu0 0.0
          %1565 = vmatmul.mubr.f32.gmra.mrb[0].mxu0 %v1425
          %v1566 = vpop.f32.mrb[0].mxu0
          %v1567 = vadd.f32 %v1379, %v1566
          %v1568 = vpop.f32.mrb[0].mxu0
          %1569 = vmatprep.mubr.f32.mxu0 0.0
          %1570 = vmatmul.mubr.f32.gmra.mrb[0].mxu0 %v1428
          %v1571 = vpop.f32.mrb[0].mxu0
          %v1572 = vadd.f32 %v1380, %v1571
          %v1573 = vpop.f32.mrb[0].mxu0
          %1574 = vdwg.mxu0
          %1575 = vst [vmem:[#allocation3] sm:$0xff] %v1497
          %1576 = vst [vmem:[#allocation3 + $0x8] sm:$0xff] %v1502
          %1577 = vst [vmem:[#allocation3 + $0x10] sm:$0xff] %v1507
          %1578 = vst [vmem:[#allocation3 + $0x18] sm:$0xff] %v1512
          %1579 = vst [vmem:[#allocation3 + $0x20] sm:$0xff] %v1517
          %1580 = vst [vmem:[#allocation3 + $0x28] sm:$0xff] %v1522
          %1581 = vst [vmem:[#allocation3 + $0x30] sm:$0xff] %v1527
          %1582 = vst [vmem:[#allocation3 + $0x38] sm:$0xff] %v1532
          %1583 = vst [vmem:[#allocation3 + $0x40] sm:$0xff] %v1537
          %1584 = vst [vmem:[#allocation3 + $0x48] sm:$0xff] %v1542
          %1585 = vst [vmem:[#allocation3 + $0x50] sm:$0xff] %v1547
          %1586 = vst [vmem:[#allocation3 + $0x58] sm:$0xff] %v1552
          %1587 = vst [vmem:[#allocation3 + $0x60] sm:$0xff] %v1557
          %1588 = vst [vmem:[#allocation3 + $0x68] sm:$0xff] %v1562
          %1589 = vst [vmem:[#allocation3 + $0x70] sm:$0xff] %v1567
          %1590 = vst [vmem:[#allocation3 + $0x78] sm:$0xff] %v1572
        $region142: #{tpu_custom_call.1} parent=121 // pred_fallthru
          _
        %s1591 = sadd.s32 %s864, %s879
        %s1592 = sshra.s32 %s1591, 4
        %s1593 = sand.u32 %s1591, 15
        %s1594 = smul.addr %s1592, 8
        %s1595 = scalar_lea.vmem [#allocation2], %s1594
        %v1596 = vld [vmem:[%s1595] sm:$0xff]
        %v1597 = vld [vmem:[%s1595 + $0x8] sm:$0xff]
        %v1598 = vld [vmem:[%s1595 + $0x10] sm:$0xff]
        %v1599 = vld [vmem:[%s1595 + $0x18] sm:$0xff]
        %v1600 = vld [vmem:[%s1595 + $0x20] sm:$0xff]
        %v1601 = vld [vmem:[%s1595 + $0x28] sm:$0xff]
        %v1602 = vld [vmem:[%s1595 + $0x30] sm:$0xff]
        %v1603 = vld [vmem:[%s1595 + $0x38] sm:$0xff]
        %v1604 = vld [vmem:[#allocation3] sm:$0xff]
        %v1605 = vld [vmem:[#allocation3 + $0x8] sm:$0xff]
        %v1606 = vld [vmem:[#allocation3 + $0x10] sm:$0xff]
        %v1607 = vld [vmem:[#allocation3 + $0x18] sm:$0xff]
        %v1608 = vld [vmem:[#allocation3 + $0x20] sm:$0xff]
        %v1609 = vld [vmem:[#allocation3 + $0x28] sm:$0xff]
        %v1610 = vld [vmem:[#allocation3 + $0x30] sm:$0xff]
        %v1611 = vld [vmem:[#allocation3 + $0x38] sm:$0xff]
        %v1612 = vld [vmem:[#allocation3 + $0x40] sm:$0xff]
        %v1613 = vld [vmem:[#allocation3 + $0x48] sm:$0xff]
        %v1614 = vld [vmem:[#allocation3 + $0x50] sm:$0xff]
        %v1615 = vld [vmem:[#allocation3 + $0x58] sm:$0xff]
        %v1616 = vld [vmem:[#allocation3 + $0x60] sm:$0xff]
        %v1617 = vld [vmem:[#allocation3 + $0x68] sm:$0xff]
        %v1618 = vld [vmem:[#allocation3 + $0x70] sm:$0xff]
        %v1619 = vld [vmem:[#allocation3 + $0x78] sm:$0xff]
        %v1620 = vld [vmem:[%s692] sm:$0xff]
        %v1621 = vld [vmem:[%s692 + $0x8] sm:$0xff]
        %v1622 = vld [vmem:[%s692 + $0x10] sm:$0xff]
        %v1623 = vld [vmem:[%s692 + $0x18] sm:$0xff]
        %v1624 = vunpack.c.l.s8.bf16 %v1620
        %v1625 = vunpack.c.h.s8.bf16 %v1620
        %v1626 = vunpack.c.l.s8.bf16 %v1621
        %v1627 = vunpack.c.h.s8.bf16 %v1621
        %v1628 = vunpack.c.l.s8.bf16 %v1622
        %v1629 = vunpack.c.h.s8.bf16 %v1622
        %v1630 = vunpack.c.l.s8.bf16 %v1623
        %v1631 = vunpack.c.h.s8.bf16 %v1623
        %1632 = vmatprep.subr.bf16.mxu0 0
        %1633 = vmatpush1.bf16.msra.mxu0 %v1596
        %1634 = vmatprep.subr.bf16.mxu0 0
        %1635 = vmatpush1.bf16.msra.mxu0 %v1597
        %1636 = vmatprep.subr.bf16.mxu0 0
        %1637 = vmatpush1.bf16.msra.mxu0 %v1598
        %1638 = vmatprep.subr.bf16.mxu0 0
        %1639 = vmatpush1.bf16.msra.mxu0 %v1599
        %1640 = vmatprep.subr.bf16.mxu0 0
        %1641 = vmatpush1.bf16.msra.mxu0 %v1600
        %1642 = vmatprep.subr.bf16.mxu0 0
        %1643 = vmatpush1.bf16.msra.mxu0 %v1601
        %1644 = vmatprep.subr.bf16.mxu0 0
        %1645 = vmatpush1.bf16.msra.mxu0 %v1602
        %1646 = vmatprep.subr.bf16.mxu0 0
        %1647 = vmatpush1.bf16.msra.mxu0 %v1603
        %1648 = vmatprep.subr.bf16.mxu0 0
        %1649 = vmatpush1.bf16.msra.mxu0 0
        %1650 = vmatprep.subr.bf16.mxu0 0
        %1651 = vmatpush1.bf16.msra.mxu0 0
        %1652 = vmatprep.subr.bf16.mxu0 0
        %1653 = vmatpush1.bf16.msra.mxu0 0
        %1654 = vmatprep.subr.bf16.mxu0 0
        %1655 = vmatpush1.bf16.msra.mxu0 0
        %1656 = vmatprep.subr.bf16.mxu0 0
        %1657 = vmatpush1.bf16.msra.mxu0 0
        %1658 = vmatprep.subr.bf16.mxu0 0
        %1659 = vmatpush1.bf16.msra.mxu0 0
        %1660 = vmatprep.subr.bf16.mxu0 0
        %1661 = vmatpush1.bf16.msra.mxu0 0
        %1662 = vmatprep.subr.bf16.mxu0 0
        %1663 = vmatpush1.bf16.msra.mxu0 0
        %1664 = vmatprep.mubr.bf16.mxu0 0
        %1665 = vmatmul.mubr.bf16.gmra.mrb[0].mxu0 %v1624
        %v1666 = vpop.f32.mrb[0].mxu0
        %v1667 = vadd.f32 0.0, %v1666
        %v1668 = vpop.f32.mrb[0].mxu0
        %v1669 = vpop.f32.mrb[0].mxu0
        %v1670 = vadd.f32 0.0, %v1669
        %v1671 = vpop.f32.mrb[0].mxu0
        %1672 = vmatprep.mubr.bf16.mxu0 0
        %1673 = vmatmul.mubr.bf16.gmra.mrb[0].mxu0 %v1625
        %v1674 = vpop.f32.mrb[0].mxu0
        %v1675 = vadd.f32 0.0, %v1674
        %v1676 = vpop.f32.mrb[0].mxu0
        %v1677 = vpop.f32.mrb[0].mxu0
        %v1678 = vadd.f32 0.0, %v1677
        %v1679 = vpop.f32.mrb[0].mxu0
        %1680 = vmatprep.mubr.bf16.mxu0 0
        %1681 = vmatmul.mubr.bf16.gmra.mrb[0].mxu0 %v1626
        %v1682 = vpop.f32.mrb[0].mxu0
        %v1683 = vadd.f32 0.0, %v1682
        %v1684 = vpop.f32.mrb[0].mxu0
        %v1685 = vpop.f32.mrb[0].mxu0
        %v1686 = vadd.f32 0.0, %v1685
        %v1687 = vpop.f32.mrb[0].mxu0
        %1688 = vmatprep.mubr.bf16.mxu0 0
        %1689 = vmatmul.mubr.bf16.gmra.mrb[0].mxu0 %v1627
        %v1690 = vpop.f32.mrb[0].mxu0
        %v1691 = vadd.f32 0.0, %v1690
        %v1692 = vpop.f32.mrb[0].mxu0
        %v1693 = vpop.f32.mrb[0].mxu0
        %v1694 = vadd.f32 0.0, %v1693
        %v1695 = vpop.f32.mrb[0].mxu0
        %1696 = vmatprep.mubr.bf16.mxu0 0
        %1697 = vmatmul.mubr.bf16.gmra.mrb[0].mxu0 %v1628
        %v1698 = vpop.f32.mrb[0].mxu0
        %v1699 = vadd.f32 0.0, %v1698
        %v1700 = vpop.f32.mrb[0].mxu0
        %v1701 = vpop.f32.mrb[0].mxu0
        %v1702 = vadd.f32 0.0, %v1701
        %v1703 = vpop.f32.mrb[0].mxu0
        %1704 = vmatprep.mubr.bf16.mxu0 0
        %1705 = vmatmul.mubr.bf16.gmra.mrb[0].mxu0 %v1629
        %v1706 = vpop.f32.mrb[0].mxu0
        %v1707 = vadd.f32 0.0, %v1706
        %v1708 = vpop.f32.mrb[0].mxu0
        %v1709 = vpop.f32.mrb[0].mxu0
        %v1710 = vadd.f32 0.0, %v1709
        %v1711 = vpop.f32.mrb[0].mxu0
        %1712 = vmatprep.mubr.bf16.mxu0 0
        %1713 = vmatmul.mubr.bf16.gmra.mrb[0].mxu0 %v1630
        %v1714 = vpop.f32.mrb[0].mxu0
        %v1715 = vadd.f32 0.0, %v1714
        %v1716 = vpop.f32.mrb[0].mxu0
        %v1717 = vpop.f32.mrb[0].mxu0
        %v1718 = vadd.f32 0.0, %v1717
        %v1719 = vpop.f32.mrb[0].mxu0
        %1720 = vmatprep.mubr.bf16.mxu0 0
        %1721 = vmatmul.mubr.bf16.gmra.mrb[0].mxu0 %v1631
        %v1722 = vpop.f32.mrb[0].mxu0
        %v1723 = vadd.f32 0.0, %v1722
        %v1724 = vpop.f32.mrb[0].mxu0
        %v1725 = vpop.f32.mrb[0].mxu0
        %v1726 = vadd.f32 0.0, %v1725
        %v1727 = vpop.f32.mrb[0].mxu0
        %1728 = vdwg.mxu0
        %v1729 = vadd.f32 %v1604, %v1667
        %v1730 = vadd.f32 %v1605, %v1670
        %v1731 = vadd.f32 %v1606, %v1675
        %v1732 = vadd.f32 %v1607, %v1678
        %v1733 = vadd.f32 %v1608, %v1683
        %v1734 = vadd.f32 %v1609, %v1686
        %v1735 = vadd.f32 %v1610, %v1691
        %v1736 = vadd.f32 %v1611, %v1694
        %v1737 = vadd.f32 %v1612, %v1699
        %v1738 = vadd.f32 %v1613, %v1702
        %v1739 = vadd.f32 %v1614, %v1707
        %v1740 = vadd.f32 %v1615, %v1710
        %v1741 = vadd.f32 %v1616, %v1715
        %v1742 = vadd.f32 %v1617, %v1718
        %v1743 = vadd.f32 %v1618, %v1723
        %v1744 = vadd.f32 %v1619, %v1726
        %1745 = vst [vmem:[#allocation3] sm:$0xff] %v1729
        %1746 = vst [vmem:[#allocation3 + $0x8] sm:$0xff] %v1730
        %1747 = vst [vmem:[#allocation3 + $0x10] sm:$0xff] %v1731
        %1748 = vst [vmem:[#allocation3 + $0x18] sm:$0xff] %v1732
        %1749 = vst [vmem:[#allocation3 + $0x20] sm:$0xff] %v1733
        %1750 = vst [vmem:[#allocation3 + $0x28] sm:$0xff] %v1734
        %1751 = vst [vmem:[#allocation3 + $0x30] sm:$0xff] %v1735
        %1752 = vst [vmem:[#allocation3 + $0x38] sm:$0xff] %v1736
        %1753 = vst [vmem:[#allocation3 + $0x40] sm:$0xff] %v1737
        %1754 = vst [vmem:[#allocation3 + $0x48] sm:$0xff] %v1738
        %1755 = vst [vmem:[#allocation3 + $0x50] sm:$0xff] %v1739
        %1756 = vst [vmem:[#allocation3 + $0x58] sm:$0xff] %v1740
        %1757 = vst [vmem:[#allocation3 + $0x60] sm:$0xff] %v1741
        %1758 = vst [vmem:[#allocation3 + $0x68] sm:$0xff] %v1742
        %1759 = vst [vmem:[#allocation3 + $0x70] sm:$0xff] %v1743
        %1760 = vst [vmem:[#allocation3 + $0x78] sm:$0xff] %v1744
        %p1761 = scmp.eq.s32.totalorder %s36, 2
        // Predicated region
        $region143: #{tpu_custom_call.1} parent=121 // pred_check
          %p1762 = pneg %p1761
        $region144: #{tpu_custom_call.1} parent=121 // pred_check_branch
          %1764 = sbr.rel (%p1762) target = $region146
        $region145: #{tpu_custom_call.1} parent=121 // pred_region
          %v1765 = vld [vmem:[#allocation3] sm:$0xff]
          %v1766 = vld [vmem:[#allocation3 + $0x8] sm:$0xff]
          %v1767 = vld [vmem:[#allocation3 + $0x10] sm:$0xff]
          %v1768 = vld [vmem:[#allocation3 + $0x18] sm:$0xff]
          %v1769 = vld [vmem:[#allocation3 + $0x20] sm:$0xff]
          %v1770 = vld [vmem:[#allocation3 + $0x28] sm:$0xff]
          %v1771 = vld [vmem:[#allocation3 + $0x30] sm:$0xff]
          %v1772 = vld [vmem:[#allocation3 + $0x38] sm:$0xff]
          %v1773 = vld [vmem:[#allocation3 + $0x40] sm:$0xff]
          %v1774 = vld [vmem:[#allocation3 + $0x48] sm:$0xff]
          %v1775 = vld [vmem:[#allocation3 + $0x50] sm:$0xff]
          %v1776 = vld [vmem:[#allocation3 + $0x58] sm:$0xff]
          %v1777 = vld [vmem:[#allocation3 + $0x60] sm:$0xff]
          %v1778 = vld [vmem:[#allocation3 + $0x68] sm:$0xff]
          %v1779 = vld [vmem:[#allocation3 + $0x70] sm:$0xff]
          %v1780 = vld [vmem:[#allocation3 + $0x78] sm:$0xff]
          %v1781 = vld [vmem:[%s833] sm:$0xff]
          %v1782 = vld [vmem:[%s833 + $0x8] sm:$0xff]
          %v1783 = vld [vmem:[%s833 + $0x10] sm:$0xff]
          %v1784 = vld [vmem:[%s833 + $0x18] sm:$0xff]
          %v1785 = vld [vmem:[%s833 + $0x20] sm:$0xff]
          %v1786 = vld [vmem:[%s833 + $0x28] sm:$0xff]
          %v1787 = vld [vmem:[%s833 + $0x30] sm:$0xff]
          %v1788 = vld [vmem:[%s833 + $0x38] sm:$0xff]
          %v1789 = vld [vmem:[%s833 + $0x40] sm:$0xff]
          %v1790 = vld [vmem:[%s833 + $0x48] sm:$0xff]
          %v1791 = vld [vmem:[%s833 + $0x50] sm:$0xff]
          %v1792 = vld [vmem:[%s833 + $0x58] sm:$0xff]
          %v1793 = vld [vmem:[%s833 + $0x60] sm:$0xff]
          %v1794 = vld [vmem:[%s833 + $0x68] sm:$0xff]
          %v1795 = vld [vmem:[%s833 + $0x70] sm:$0xff]
          %v1796 = vld [vmem:[%s833 + $0x78] sm:$0xff]
          %v1797 = vld [vmem:[%s836] sm:$0x1]
          %v1799 = vlaneseq
          %v1800 = vshrl.u32 %v1799, 7
          %v1801 = vsub.s32 0, %v1800
          %v1802 = vrot.slane %v1797, %v1801
          %1804 = vmatprep.subr.mxu0 0.0
          %1805 = vmatpush1.msra.mxu0 %v1781
          %1806 = vmatprep.subr.mxu0 0.0
          %1807 = vmatpush1.msra.mxu0 %v1782
          %1808 = vmatprep.subr.mxu0 0.0
          %1809 = vmatpush1.msra.mxu0 %v1783
          %1810 = vmatprep.subr.mxu0 0.0
          %1811 = vmatpush1.msra.mxu0 %v1784
          %1812 = vmatprep.subr.mxu0 0.0
          %1813 = vmatpush1.msra.mxu0 %v1785
          %1814 = vmatprep.subr.mxu0 0.0
          %1815 = vmatpush1.msra.mxu0 %v1786
          %1816 = vmatprep.subr.mxu0 0.0
          %1817 = vmatpush1.msra.mxu0 %v1787
          %1818 = vmatprep.subr.mxu0 0.0
          %1819 = vmatpush1.msra.mxu0 %v1788
          %1820 = vmatprep.subr.mxu0 0.0
          %1821 = vmatpush1.msra.mxu0 %v1789
          %1822 = vmatprep.subr.mxu0 0.0
          %1823 = vmatpush1.msra.mxu0 %v1790
          %1824 = vmatprep.subr.mxu0 0.0
          %1825 = vmatpush1.msra.mxu0 %v1791
          %1826 = vmatprep.subr.mxu0 0.0
          %1827 = vmatpush1.msra.mxu0 %v1792
          %1828 = vmatprep.subr.mxu0 0.0
          %1829 = vmatpush1.msra.mxu0 %v1793
          %1830 = vmatprep.subr.mxu0 0.0
          %1831 = vmatpush1.msra.mxu0 %v1794
          %1832 = vmatprep.subr.mxu0 0.0
          %1833 = vmatpush1.msra.mxu0 %v1795
          %1834 = vmatprep.subr.mxu0 0.0
          %1835 = vmatpush1.msra.mxu0 %v1796
          %1836 = vmatprep.subr.mxu0 0.0
          %1837 = vmatpush1.msra.mxu0 0.0
          %1838 = vmatprep.subr.mxu0 0.0
          %1839 = vmatpush1.msra.mxu0 0.0
          %1840 = vmatprep.subr.mxu0 0.0
          %1841 = vmatpush1.msra.mxu0 0.0
          %1842 = vmatprep.subr.mxu0 0.0
          %1843 = vmatpush1.msra.mxu0 0.0
          %1844 = vmatprep.subr.mxu0 0.0
          %1845 = vmatpush1.msra.mxu0 0.0
          %1846 = vmatprep.subr.mxu0 0.0
          %1847 = vmatpush1.msra.mxu0 0.0
          %1848 = vmatprep.subr.mxu0 0.0
          %1849 = vmatpush1.msra.mxu0 0.0
          %1850 = vmatprep.subr.mxu0 0.0
          %1851 = vmatpush1.msra.mxu0 0.0
          %1852 = vmatprep.subr.mxu0 0.0
          %1853 = vmatpush1.msra.mxu0 0.0
          %1854 = vmatprep.subr.mxu0 0.0
          %1855 = vmatpush1.msra.mxu0 0.0
          %1856 = vmatprep.subr.mxu0 0.0
          %1857 = vmatpush1.msra.mxu0 0.0
          %1858 = vmatprep.subr.mxu0 0.0
          %1859 = vmatpush1.msra.mxu0 0.0
          %1860 = vmatprep.subr.mxu0 0.0
          %1861 = vmatpush1.msra.mxu0 0.0
          %1862 = vmatprep.subr.mxu0 0.0
          %1863 = vmatpush1.msra.mxu0 0.0
          %1864 = vmatprep.subr.mxu0 0.0
          %1865 = vmatpush1.msra.mxu0 0.0
          %1866 = vmatprep.subr.mxu0 0.0
          %1867 = vmatpush1.msra.mxu0 0.0
          %1868 = vmatprep.mubr.f32.mxu0 0.0
          %1869 = vmatmul.mubr.f32.gmra.mrb[0].mxu0 %v1765
          %v1870 = vpop.f32.mrb[0].mxu0
          %v1871 = vadd.f32 %v1802, %v1870
          %v1872 = vpop.f32.mrb[0].mxu0
          %1873 = vmatprep.mubr.f32.mxu0 0.0
          %1874 = vmatmul.mubr.f32.gmra.mrb[0].mxu0 %v1766
          %v1875 = vpop.f32.mrb[0].mxu0
          %v1876 = vadd.f32 %v1802, %v1875
          %v1877 = vpop.f32.mrb[0].mxu0
          %1878 = vmatprep.mubr.f32.mxu0 0.0
          %1879 = vmatmul.mubr.f32.gmra.mrb[0].mxu0 %v1767
          %v1880 = vpop.f32.mrb[0].mxu0
          %v1881 = vadd.f32 %v1802, %v1880
          %v1882 = vpop.f32.mrb[0].mxu0
          %1883 = vmatprep.mubr.f32.mxu0 0.0
          %1884 = vmatmul.mubr.f32.gmra.mrb[0].mxu0 %v1768
          %v1885 = vpop.f32.mrb[0].mxu0
          %v1886 = vadd.f32 %v1802, %v1885
          %v1887 = vpop.f32.mrb[0].mxu0
          %1888 = vmatprep.mubr.f32.mxu0 0.0
          %1889 = vmatmul.mubr.f32.gmra.mrb[0].mxu0 %v1769
          %v1890 = vpop.f32.mrb[0].mxu0
          %v1891 = vadd.f32 %v1802, %v1890
          %v1892 = vpop.f32.mrb[0].mxu0
          %1893 = vmatprep.mubr.f32.mxu0 0.0
          %1894 = vmatmul.mubr.f32.gmra.mrb[0].mxu0 %v1770
          %v1895 = vpop.f32.mrb[0].mxu0
          %v1896 = vadd.f32 %v1802, %v1895
          %v1897 = vpop.f32.mrb[0].mxu0
          %1898 = vmatprep.mubr.f32.mxu0 0.0
          %1899 = vmatmul.mubr.f32.gmra.mrb[0].mxu0 %v1771
          %v1900 = vpop.f32.mrb[0].mxu0
          %v1901 = vadd.f32 %v1802, %v1900
          %v1902 = vpop.f32.mrb[0].mxu0
          %1903 = vmatprep.mubr.f32.mxu0 0.0
          %1904 = vmatmul.mubr.f32.gmra.mrb[0].mxu0 %v1772
          %v1905 = vpop.f32.mrb[0].mxu0
          %v1906 = vadd.f32 %v1802, %v1905
          %v1907 = vpop.f32.mrb[0].mxu0
          %1908 = vmatprep.mubr.f32.mxu0 0.0
          %1909 = vmatmul.mubr.f32.gmra.mrb[0].mxu0 %v1773
          %v1910 = vpop.f32.mrb[0].mxu0
          %v1911 = vadd.f32 %v1802, %v1910
          %v1912 = vpop.f32.mrb[0].mxu0
          %1913 = vmatprep.mubr.f32.mxu0 0.0
          %1914 = vmatmul.mubr.f32.gmra.mrb[0].mxu0 %v1774
          %v1915 = vpop.f32.mrb[0].mxu0
          %v1916 = vadd.f32 %v1802, %v1915
          %v1917 = vpop.f32.mrb[0].mxu0
          %1918 = vmatprep.mubr.f32.mxu0 0.0
          %1919 = vmatmul.mubr.f32.gmra.mrb[0].mxu0 %v1775
          %v1920 = vpop.f32.mrb[0].mxu0
          %v1921 = vadd.f32 %v1802, %v1920
          %v1922 = vpop.f32.mrb[0].mxu0
          %1923 = vmatprep.mubr.f32.mxu0 0.0
          %1924 = vmatmul.mubr.f32.gmra.mrb[0].mxu0 %v1776
          %v1925 = vpop.f32.mrb[0].mxu0
          %v1926 = vadd.f32 %v1802, %v1925
          %v1927 = vpop.f32.mrb[0].mxu0
          %1928 = vmatprep.mubr.f32.mxu0 0.0
          %1929 = vmatmul.mubr.f32.gmra.mrb[0].mxu0 %v1777
          %v1930 = vpop.f32.mrb[0].mxu0
          %v1931 = vadd.f32 %v1802, %v1930
          %v1932 = vpop.f32.mrb[0].mxu0
          %1933 = vmatprep.mubr.f32.mxu0 0.0
          %1934 = vmatmul.mubr.f32.gmra.mrb[0].mxu0 %v1778
          %v1935 = vpop.f32.mrb[0].mxu0
          %v1936 = vadd.f32 %v1802, %v1935
          %v1937 = vpop.f32.mrb[0].mxu0
          %1938 = vmatprep.mubr.f32.mxu0 0.0
          %1939 = vmatmul.mubr.f32.gmra.mrb[0].mxu0 %v1779
          %v1940 = vpop.f32.mrb[0].mxu0
          %v1941 = vadd.f32 %v1802, %v1940
          %v1942 = vpop.f32.mrb[0].mxu0
          %1943 = vmatprep.mubr.f32.mxu0 0.0
          %1944 = vmatmul.mubr.f32.gmra.mrb[0].mxu0 %v1780
          %v1945 = vpop.f32.mrb[0].mxu0
          %v1946 = vadd.f32 %v1802, %v1945
          %v1947 = vpop.f32.mrb[0].mxu0
          %1948 = vdwg.mxu0
          %v1949 = vmax.f32 %v1871, 0.0
          %v1950 = vmax.f32 %v1876, 0.0
          %v1951 = vmax.f32 %v1881, 0.0
          %v1952 = vmax.f32 %v1886, 0.0
          %v1953 = vmax.f32 %v1891, 0.0
          %v1954 = vmax.f32 %v1896, 0.0
          %v1955 = vmax.f32 %v1901, 0.0
          %v1956 = vmax.f32 %v1906, 0.0
          %v1957 = vmax.f32 %v1911, 0.0
          %v1958 = vmax.f32 %v1916, 0.0
          %v1959 = vmax.f32 %v1921, 0.0
          %v1960 = vmax.f32 %v1926, 0.0
          %v1961 = vmax.f32 %v1931, 0.0
          %v1962 = vmax.f32 %v1936, 0.0
          %v1963 = vmax.f32 %v1941, 0.0
          %v1964 = vmax.f32 %v1946, 0.0
          %v1965 = vld [vmem:[%s841] sm:$0xff]
          %v1966 = vld [vmem:[%s841 + $0x8] sm:$0xff]
          %v1967 = vld [vmem:[%s841 + $0x10] sm:$0xff]
          %v1968 = vld [vmem:[%s841 + $0x18] sm:$0xff]
          %v1969 = vld [vmem:[%s841 + $0x20] sm:$0xff]
          %v1970 = vld [vmem:[%s841 + $0x28] sm:$0xff]
          %v1971 = vld [vmem:[%s841 + $0x30] sm:$0xff]
          %v1972 = vld [vmem:[%s841 + $0x38] sm:$0xff]
          %v1973 = vld [vmem:[%s841 + $0x40] sm:$0xff]
          %v1974 = vld [vmem:[%s841 + $0x48] sm:$0xff]
          %v1975 = vld [vmem:[%s841 + $0x50] sm:$0xff]
          %v1976 = vld [vmem:[%s841 + $0x58] sm:$0xff]
          %v1977 = vld [vmem:[%s841 + $0x60] sm:$0xff]
          %v1978 = vld [vmem:[%s841 + $0x68] sm:$0xff]
          %v1979 = vld [vmem:[%s841 + $0x70] sm:$0xff]
          %v1980 = vld [vmem:[%s841 + $0x78] sm:$0xff]
          %v1981 = vld [vmem:[%s844] sm:$0x1]
          %v1983 = vlaneseq
          %v1984 = vshrl.u32 %v1983, 7
          %v1985 = vsub.s32 0, %v1984
          %v1986 = vrot.slane %v1981, %v1985
          %1988 = vmatprep.subr.mxu0 0.0
          %1989 = vmatpush1.msra.mxu0 %v1965
          %1990 = vmatprep.subr.mxu0 0.0
          %1991 = vmatpush1.msra.mxu0 %v1966
          %1992 = vmatprep.subr.mxu0 0.0
          %1993 = vmatpush1.msra.mxu0 %v1967
          %1994 = vmatprep.subr.mxu0 0.0
          %1995 = vmatpush1.msra.mxu0 %v1968
          %1996 = vmatprep.subr.mxu0 0.0
          %1997 = vmatpush1.msra.mxu0 %v1969
          %1998 = vmatprep.subr.mxu0 0.0
          %1999 = vmatpush1.msra.mxu0 %v1970
          %2000 = vmatprep.subr.mxu0 0.0
          %2001 = vmatpush1.msra.mxu0 %v1971
          %2002 = vmatprep.subr.mxu0 0.0
          %2003 = vmatpush1.msra.mxu0 %v1972
          %2004 = vmatprep.subr.mxu0 0.0
          %2005 = vmatpush1.msra.mxu0 %v1973
          %2006 = vmatprep.subr.mxu0 0.0
          %2007 = vmatpush1.msra.mxu0 %v1974
          %2008 = vmatprep.subr.mxu0 0.0
          %2009 = vmatpush1.msra.mxu0 %v1975
          %2010 = vmatprep.subr.mxu0 0.0
          %2011 = vmatpush1.msra.mxu0 %v1976
          %2012 = vmatprep.subr.mxu0 0.0
          %2013 = vmatpush1.msra.mxu0 %v1977
          %2014 = vmatprep.subr.mxu0 0.0
          %2015 = vmatpush1.msra.mxu0 %v1978
          %2016 = vmatprep.subr.mxu0 0.0
          %2017 = vmatpush1.msra.mxu0 %v1979
          %2018 = vmatprep.subr.mxu0 0.0
          %2019 = vmatpush1.msra.mxu0 %v1980
          %2020 = vmatprep.subr.mxu0 0.0
          %2021 = vmatpush1.msra.mxu0 0.0
          %2022 = vmatprep.subr.mxu0 0.0
          %2023 = vmatpush1.msra.mxu0 0.0
          %2024 = vmatprep.subr.mxu0 0.0
          %2025 = vmatpush1.msra.mxu0 0.0
          %2026 = vmatprep.subr.mxu0 0.0
          %2027 = vmatpush1.msra.mxu0 0.0
          %2028 = vmatprep.subr.mxu0 0.0
          %2029 = vmatpush1.msra.mxu0 0.0
          %2030 = vmatprep.subr.mxu0 0.0
          %2031 = vmatpush1.msra.mxu0 0.0
          %2032 = vmatprep.subr.mxu0 0.0
          %2033 = vmatpush1.msra.mxu0 0.0
          %2034 = vmatprep.subr.mxu0 0.0
          %2035 = vmatpush1.msra.mxu0 0.0
          %2036 = vmatprep.subr.mxu0 0.0
          %2037 = vmatpush1.msra.mxu0 0.0
          %2038 = vmatprep.subr.mxu0 0.0
          %2039 = vmatpush1.msra.mxu0 0.0
          %2040 = vmatprep.subr.mxu0 0.0
          %2041 = vmatpush1.msra.mxu0 0.0
          %2042 = vmatprep.subr.mxu0 0.0
          %2043 = vmatpush1.msra.mxu0 0.0
          %2044 = vmatprep.subr.mxu0 0.0
          %2045 = vmatpush1.msra.mxu0 0.0
          %2046 = vmatprep.subr.mxu0 0.0
          %2047 = vmatpush1.msra.mxu0 0.0
          %2048 = vmatprep.subr.mxu0 0.0
          %2049 = vmatpush1.msra.mxu0 0.0
          %2050 = vmatprep.subr.mxu0 0.0
          %2051 = vmatpush1.msra.mxu0 0.0
          %2052 = vmatprep.mubr.f32.mxu0 0.0
          %2053 = vmatmul.mubr.f32.gmra.mrb[0].mxu0 %v1949
          %v2054 = vpop.f32.mrb[0].mxu0
          %v2055 = vadd.f32 %v1986, %v2054
          %v2056 = vpop.f32.mrb[0].mxu0
          %2057 = vmatprep.mubr.f32.mxu0 0.0
          %2058 = vmatmul.mubr.f32.gmra.mrb[0].mxu0 %v1950
          %v2059 = vpop.f32.mrb[0].mxu0
          %v2060 = vadd.f32 %v1986, %v2059
          %v2061 = vpop.f32.mrb[0].mxu0
          %2062 = vmatprep.mubr.f32.mxu0 0.0
          %2063 = vmatmul.mubr.f32.gmra.mrb[0].mxu0 %v1951
          %v2064 = vpop.f32.mrb[0].mxu0
          %v2065 = vadd.f32 %v1986, %v2064
          %v2066 = vpop.f32.mrb[0].mxu0
          %2067 = vmatprep.mubr.f32.mxu0 0.0
          %2068 = vmatmul.mubr.f32.gmra.mrb[0].mxu0 %v1952
          %v2069 = vpop.f32.mrb[0].mxu0
          %v2070 = vadd.f32 %v1986, %v2069
          %v2071 = vpop.f32.mrb[0].mxu0
          %2072 = vmatprep.mubr.f32.mxu0 0.0
          %2073 = vmatmul.mubr.f32.gmra.mrb[0].mxu0 %v1953
          %v2074 = vpop.f32.mrb[0].mxu0
          %v2075 = vadd.f32 %v1986, %v2074
          %v2076 = vpop.f32.mrb[0].mxu0
          %2077 = vmatprep.mubr.f32.mxu0 0.0
          %2078 = vmatmul.mubr.f32.gmra.mrb[0].mxu0 %v1954
          %v2079 = vpop.f32.mrb[0].mxu0
          %v2080 = vadd.f32 %v1986, %v2079
          %v2081 = vpop.f32.mrb[0].mxu0
          %2082 = vmatprep.mubr.f32.mxu0 0.0
          %2083 = vmatmul.mubr.f32.gmra.mrb[0].mxu0 %v1955
          %v2084 = vpop.f32.mrb[0].mxu0
          %v2085 = vadd.f32 %v1986, %v2084
          %v2086 = vpop.f32.mrb[0].mxu0
          %2087 = vmatprep.mubr.f32.mxu0 0.0
          %2088 = vmatmul.mubr.f32.gmra.mrb[0].mxu0 %v1956
          %v2089 = vpop.f32.mrb[0].mxu0
          %v2090 = vadd.f32 %v1986, %v2089
          %v2091 = vpop.f32.mrb[0].mxu0
          %2092 = vmatprep.mubr.f32.mxu0 0.0
          %2093 = vmatmul.mubr.f32.gmra.mrb[0].mxu0 %v1957
          %v2094 = vpop.f32.mrb[0].mxu0
          %v2095 = vadd.f32 %v1986, %v2094
          %v2096 = vpop.f32.mrb[0].mxu0
          %2097 = vmatprep.mubr.f32.mxu0 0.0
          %2098 = vmatmul.mubr.f32.gmra.mrb[0].mxu0 %v1958
          %v2099 = vpop.f32.mrb[0].mxu0
          %v2100 = vadd.f32 %v1986, %v2099
          %v2101 = vpop.f32.mrb[0].mxu0
          %2102 = vmatprep.mubr.f32.mxu0 0.0
          %2103 = vmatmul.mubr.f32.gmra.mrb[0].mxu0 %v1959
          %v2104 = vpop.f32.mrb[0].mxu0
          %v2105 = vadd.f32 %v1986, %v2104
          %v2106 = vpop.f32.mrb[0].mxu0
          %2107 = vmatprep.mubr.f32.mxu0 0.0
          %2108 = vmatmul.mubr.f32.gmra.mrb[0].mxu0 %v1960
          %v2109 = vpop.f32.mrb[0].mxu0
          %v2110 = vadd.f32 %v1986, %v2109
          %v2111 = vpop.f32.mrb[0].mxu0
          %2112 = vmatprep.mubr.f32.mxu0 0.0
          %2113 = vmatmul.mubr.f32.gmra.mrb[0].mxu0 %v1961
          %v2114 = vpop.f32.mrb[0].mxu0
          %v2115 = vadd.f32 %v1986, %v2114
          %v2116 = vpop.f32.mrb[0].mxu0
          %2117 = vmatprep.mubr.f32.mxu0 0.0
          %2118 = vmatmul.mubr.f32.gmra.mrb[0].mxu0 %v1962
          %v2119 = vpop.f32.mrb[0].mxu0
          %v2120 = vadd.f32 %v1986, %v2119
          %v2121 = vpop.f32.mrb[0].mxu0
          %2122 = vmatprep.mubr.f32.mxu0 0.0
          %2123 = vmatmul.mubr.f32.gmra.mrb[0].mxu0 %v1963
          %v2124 = vpop.f32.mrb[0].mxu0
          %v2125 = vadd.f32 %v1986, %v2124
          %v2126 = vpop.f32.mrb[0].mxu0
          %2127 = vmatprep.mubr.f32.mxu0 0.0
          %2128 = vmatmul.mubr.f32.gmra.mrb[0].mxu0 %v1964
          %v2129 = vpop.f32.mrb[0].mxu0
          %v2130 = vadd.f32 %v1986, %v2129
          %v2131 = vpop.f32.mrb[0].mxu0
          %2132 = vdwg.mxu0
          %v2133 = vlaneseq
          %v2134 = vshrl.u32 %v2133, 7
          %v2135 = vadd.s32 %v2134, 8
          %v2136 = vadd.s32 %v2134, 16
          %v2137 = vadd.s32 %v2134, 24
          %v2138 = vadd.s32 %v2134, 32
          %v2139 = vadd.s32 %v2134, 40
          %v2140 = vadd.s32 %v2134, 48
          %v2141 = vadd.s32 %v2134, 56
          %v2142 = vadd.s32 %v2134, 64
          %v2143 = vadd.s32 %v2134, 72
          %v2144 = vadd.s32 %v2134, 80
          %v2145 = vadd.s32 %v2134, 88
          %v2146 = vadd.s32 %v2134, 96
          %v2147 = vadd.s32 %v2134, 104
          %v2148 = vadd.s32 %v2134, 112
          %v2149 = vadd.s32 %v2134, 120
          %v2150 = vstv %s880
          %v2151 = vadd.s32 %v2134, %v2150
          %v2152 = vadd.s32 %v2135, %v2150
          %v2153 = vadd.s32 %v2136, %v2150
          %v2154 = vadd.s32 %v2137, %v2150
          %v2155 = vadd.s32 %v2138, %v2150
          %v2156 = vadd.s32 %v2139, %v2150
          %v2157 = vadd.s32 %v2140, %v2150
          %v2158 = vadd.s32 %v2141, %v2150
          %v2159 = vadd.s32 %v2142, %v2150
          %v2160 = vadd.s32 %v2143, %v2150
          %v2161 = vadd.s32 %v2144, %v2150
          %v2162 = vadd.s32 %v2145, %v2150
          %v2163 = vadd.s32 %v2146, %v2150
          %v2164 = vadd.s32 %v2147, %v2150
          %v2165 = vadd.s32 %v2148, %v2150
          %v2166 = vadd.s32 %v2149, %v2150
          %vm2167 = vcmp.lt.s32.totalorder %v2151, 300
          %vm2168 = vcmp.lt.s32.totalorder %v2152, 300
          %vm2169 = vcmp.lt.s32.totalorder %v2153, 300
          %vm2170 = vcmp.lt.s32.totalorder %v2154, 300
          %vm2171 = vcmp.lt.s32.totalorder %v2155, 300
          %vm2172 = vcmp.lt.s32.totalorder %v2156, 300
          %vm2173 = vcmp.lt.s32.totalorder %v2157, 300
          %vm2174 = vcmp.lt.s32.totalorder %v2158, 300
          %vm2175 = vcmp.lt.s32.totalorder %v2159, 300
          %vm2176 = vcmp.lt.s32.totalorder %v2160, 300
          %vm2177 = vcmp.lt.s32.totalorder %v2161, 300
          %vm2178 = vcmp.lt.s32.totalorder %v2162, 300
          %vm2179 = vcmp.lt.s32.totalorder %v2163, 300
          %vm2180 = vcmp.lt.s32.totalorder %v2164, 300
          %vm2181 = vcmp.lt.s32.totalorder %v2165, 300
          %vm2182 = vcmp.lt.s32.totalorder %v2166, 300
          %v2183 = vsel %vm2167, 1, 0
          %v2184 = vsel %vm2168, 1, 0
          %v2185 = vsel %vm2169, 1, 0
          %v2186 = vsel %vm2170, 1, 0
          %v2187 = vsel %vm2171, 1, 0
          %v2188 = vsel %vm2172, 1, 0
          %v2189 = vsel %vm2173, 1, 0
          %v2190 = vsel %vm2174, 1, 0
          %v2191 = vsel %vm2175, 1, 0
          %v2192 = vsel %vm2176, 1, 0
          %v2193 = vsel %vm2177, 1, 0
          %v2194 = vsel %vm2178, 1, 0
          %v2195 = vsel %vm2179, 1, 0
          %v2196 = vsel %vm2180, 1, 0
          %v2197 = vsel %vm2181, 1, 0
          %v2198 = vsel %vm2182, 1, 0
          %v2199 = vcvt.s32.f32 %v2183
          %v2200 = vcvt.s32.f32 %v2184
          %v2201 = vcvt.s32.f32 %v2185
          %v2202 = vcvt.s32.f32 %v2186
          %v2203 = vcvt.s32.f32 %v2187
          %v2204 = vcvt.s32.f32 %v2188
          %v2205 = vcvt.s32.f32 %v2189
          %v2206 = vcvt.s32.f32 %v2190
          %v2207 = vcvt.s32.f32 %v2191
          %v2208 = vcvt.s32.f32 %v2192
          %v2209 = vcvt.s32.f32 %v2193
          %v2210 = vcvt.s32.f32 %v2194
          %v2211 = vcvt.s32.f32 %v2195
          %v2212 = vcvt.s32.f32 %v2196
          %v2213 = vcvt.s32.f32 %v2197
          %v2214 = vcvt.s32.f32 %v2198
          %v2215 = vmul.f32 %v2055, %v2199
          %v2216 = vmul.f32 %v2060, %v2200
          %v2217 = vmul.f32 %v2065, %v2201
          %v2218 = vmul.f32 %v2070, %v2202
          %v2219 = vmul.f32 %v2075, %v2203
          %v2220 = vmul.f32 %v2080, %v2204
          %v2221 = vmul.f32 %v2085, %v2205
          %v2222 = vmul.f32 %v2090, %v2206
          %v2223 = vmul.f32 %v2095, %v2207
          %v2224 = vmul.f32 %v2100, %v2208
          %v2225 = vmul.f32 %v2105, %v2209
          %v2226 = vmul.f32 %v2110, %v2210
          %v2227 = vmul.f32 %v2115, %v2211
          %v2228 = vmul.f32 %v2120, %v2212
          %v2229 = vmul.f32 %v2125, %v2213
          %v2230 = vmul.f32 %v2130, %v2214
          %v2231 = vld [vmem:[#allocation4] sm:$0x1]
          %v2232 = vadd.f32 %v2215, %v2216
          %v2233 = vadd.f32 %v2232, %v2217
          %v2234 = vadd.f32 %v2233, %v2218
          %v2235 = vadd.f32 %v2234, %v2219
          %v2236 = vadd.f32 %v2235, %v2220
          %v2237 = vadd.f32 %v2236, %v2221
          %v2238 = vadd.f32 %v2237, %v2222
          %v2239 = vadd.f32 %v2238, %v2223
          %v2240 = vadd.f32 %v2239, %v2224
          %v2241 = vadd.f32 %v2240, %v2225
          %v2242 = vadd.f32 %v2241, %v2226
          %v2243 = vadd.f32 %v2242, %v2227
          %v2244 = vadd.f32 %v2243, %v2228
          %v2245 = vadd.f32 %v2244, %v2229
          %v2246 = vadd.f32 %v2245, %v2230
          %v2247 = vrot.slane %v2246, 4
          %v2248 = vadd.f32 %v2246, %v2247
          %v2249 = vrot.slane %v2248, 2
          %v2250 = vadd.f32 %v2248, %v2249
          %v2251 = vrot.slane %v2250, 1
          %v2252 = vadd.f32 %v2250, %v2251
          %v2253 = vadd.f32 %v2231, %v2252
          %2254 = vst [vmem:[#allocation4] sm:$0x1] %v2253
          %v2255 = vld [vmem:[#allocation4 + $0x1] sm:$0x1]
          %v2256 = vmul.f32 %v2215, %v2055
          %v2257 = vmul.f32 %v2216, %v2060
          %v2258 = vmul.f32 %v2217, %v2065
          %v2259 = vmul.f32 %v2218, %v2070
          %v2260 = vmul.f32 %v2219, %v2075
          %v2261 = vmul.f32 %v2220, %v2080
          %v2262 = vmul.f32 %v2221, %v2085
          %v2263 = vmul.f32 %v2222, %v2090
          %v2264 = vmul.f32 %v2223, %v2095
          %v2265 = vmul.f32 %v2224, %v2100
          %v2266 = vmul.f32 %v2225, %v2105
          %v2267 = vmul.f32 %v2226, %v2110
          %v2268 = vmul.f32 %v2227, %v2115
          %v2269 = vmul.f32 %v2228, %v2120
          %v2270 = vmul.f32 %v2229, %v2125
          %v2271 = vmul.f32 %v2230, %v2130
          %v2272 = vadd.f32 %v2256, %v2257
          %v2273 = vadd.f32 %v2272, %v2258
          %v2274 = vadd.f32 %v2273, %v2259
          %v2275 = vadd.f32 %v2274, %v2260
          %v2276 = vadd.f32 %v2275, %v2261
          %v2277 = vadd.f32 %v2276, %v2262
          %v2278 = vadd.f32 %v2277, %v2263
          %v2279 = vadd.f32 %v2278, %v2264
          %v2280 = vadd.f32 %v2279, %v2265
          %v2281 = vadd.f32 %v2280, %v2266
          %v2282 = vadd.f32 %v2281, %v2267
          %v2283 = vadd.f32 %v2282, %v2268
          %v2284 = vadd.f32 %v2283, %v2269
          %v2285 = vadd.f32 %v2284, %v2270
          %v2286 = vadd.f32 %v2285, %v2271
          %v2287 = vrot.slane %v2286, 4
          %v2288 = vadd.f32 %v2286, %v2287
          %v2289 = vrot.slane %v2288, 2
          %v2290 = vadd.f32 %v2288, %v2289
          %v2291 = vrot.slane %v2290, 1
          %v2292 = vadd.f32 %v2290, %v2291
          %v2293 = vadd.f32 %v2255, %v2292
          %2294 = vst [vmem:[#allocation4 + $0x1] sm:$0x1] %v2293
          %v2295 = vpack.c.bf16 %v2060, %v2055
          %v2296 = vpack.c.bf16 %v2070, %v2065
          %v2297 = vpack.c.bf16 %v2080, %v2075
          %v2298 = vpack.c.bf16 %v2090, %v2085
          %v2299 = vpack.c.bf16 %v2100, %v2095
          %v2300 = vpack.c.bf16 %v2110, %v2105
          %v2301 = vpack.c.bf16 %v2120, %v2115
          %v2302 = vpack.c.bf16 %v2130, %v2125
          %s2303 = sadd.s32 %s878, %s880
          %s2304 = sshra.s32 %s2303, 4
          %s2305 = sand.u32 %s2303, 15
          %s2306 = smul.addr %s2304, 8
          %s2307 = scalar_lea.vmem [#allocation2], %s2306
          %2308 = vst [vmem:[%s2307] sm:$0xff] %v2295
          %2309 = vst [vmem:[%s2307 + $0x8] sm:$0xff] %v2296
          %2310 = vst [vmem:[%s2307 + $0x10] sm:$0xff] %v2297
          %2311 = vst [vmem:[%s2307 + $0x18] sm:$0xff] %v2298
          %2312 = vst [vmem:[%s2307 + $0x20] sm:$0xff] %v2299
          %2313 = vst [vmem:[%s2307 + $0x28] sm:$0xff] %v2300
          %2314 = vst [vmem:[%s2307 + $0x30] sm:$0xff] %v2301
          %2315 = vst [vmem:[%s2307 + $0x38] sm:$0xff] %v2302
          %p2316 = scmp.eq.s32.totalorder %s34, 1
          // Predicated region
          $region147: #{tpu_custom_call.1} parent=145 // pred_check
            %p2317 = pneg %p2316
          $region148: #{tpu_custom_call.1} parent=145 // pred_check_branch
            %2319 = sbr.rel (%p2317) target = $region150
          $region149: #{tpu_custom_call.1} parent=145 // pred_region
            %v2320 = vld [vmem:[#allocation6] sm:$0xff]
            %v2321 = vld [vmem:[%s821] sm:$0xff]
            %2322 = vmatprep.subr.mxu0 0.0
            %2323 = vmatpush1.msra.mxu0 %v2055
            %2324 = vmatprep.subr.mxu0 0.0
            %2325 = vmatpush1.msra.mxu0 %v2060
            %2326 = vmatprep.subr.mxu0 0.0
            %2327 = vmatpush1.msra.mxu0 %v2065
            %2328 = vmatprep.subr.mxu0 0.0
            %2329 = vmatpush1.msra.mxu0 %v2070
            %2330 = vmatprep.subr.mxu0 0.0
            %2331 = vmatpush1.msra.mxu0 %v2075
            %2332 = vmatprep.subr.mxu0 0.0
            %2333 = vmatpush1.msra.mxu0 %v2080
            %2334 = vmatprep.subr.mxu0 0.0
            %2335 = vmatpush1.msra.mxu0 %v2085
            %2336 = vmatprep.subr.mxu0 0.0
            %2337 = vmatpush1.msra.mxu0 %v2090
            %2338 = vmatprep.subr.mxu0 0.0
            %2339 = vmatpush1.msra.mxu0 %v2095
            %2340 = vmatprep.subr.mxu0 0.0
            %2341 = vmatpush1.msra.mxu0 %v2100
            %2342 = vmatprep.subr.mxu0 0.0
            %2343 = vmatpush1.msra.mxu0 %v2105
            %2344 = vmatprep.subr.mxu0 0.0
            %2345 = vmatpush1.msra.mxu0 %v2110
            %2346 = vmatprep.subr.mxu0 0.0
            %2347 = vmatpush1.msra.mxu0 %v2115
            %2348 = vmatprep.subr.mxu0 0.0
            %2349 = vmatpush1.msra.mxu0 %v2120
            %2350 = vmatprep.subr.mxu0 0.0
            %2351 = vmatpush1.msra.mxu0 %v2125
            %2352 = vmatprep.subr.mxu0 0.0
            %2353 = vmatpush1.msra.mxu0 %v2130
            %2354 = vmatprep.subr.mxu0 0.0
            %2355 = vmatpush1.msra.mxu0 0.0
            %2356 = vmatprep.subr.mxu0 0.0
            %2357 = vmatpush1.msra.mxu0 0.0
            %2358 = vmatprep.subr.mxu0 0.0
            %2359 = vmatpush1.msra.mxu0 0.0
            %2360 = vmatprep.subr.mxu0 0.0
            %2361 = vmatpush1.msra.mxu0 0.0
            %2362 = vmatprep.subr.mxu0 0.0
            %2363 = vmatpush1.msra.mxu0 0.0
            %2364 = vmatprep.subr.mxu0 0.0
            %2365 = vmatpush1.msra.mxu0 0.0
            %2366 = vmatprep.subr.mxu0 0.0
            %2367 = vmatpush1.msra.mxu0 0.0
            %2368 = vmatprep.subr.mxu0 0.0
            %2369 = vmatpush1.msra.mxu0 0.0
            %2370 = vmatprep.subr.mxu0 0.0
            %2371 = vmatpush1.msra.mxu0 0.0
            %2372 = vmatprep.subr.mxu0 0.0
            %2373 = vmatpush1.msra.mxu0 0.0
            %2374 = vmatprep.subr.mxu0 0.0
            %2375 = vmatpush1.msra.mxu0 0.0
            %2376 = vmatprep.subr.mxu0 0.0
            %2377 = vmatpush1.msra.mxu0 0.0
            %2378 = vmatprep.subr.mxu0 0.0
            %2379 = vmatpush1.msra.mxu0 0.0
            %2380 = vmatprep.subr.mxu0 0.0
            %2381 = vmatpush1.msra.mxu0 0.0
            %2382 = vmatprep.subr.mxu0 0.0
            %2383 = vmatpush1.msra.mxu0 0.0
            %2384 = vmatprep.subr.mxu0 0.0
            %2385 = vmatpush1.msra.mxu0 0.0
            %2386 = vmatprep.mubr.f32.mxu0 0.0
            %2387 = vmatmul.mubr.f32.gmra.mrb[0].mxu0 %v2321
            %v2388 = vpop.f32.mrb[0].mxu0
            %v2389 = vadd.f32 0.0, %v2388
            %v2390 = vpop.f32.mrb[0].mxu0
            %2391 = vdwg.mxu0
            %v2392 = vadd.f32 %v2320, %v2389
            %2393 = vst [vmem:[#allocation6] sm:$0xff] %v2392
          $region150: #{tpu_custom_call.1} parent=145 // pred_fallthru
            _
        $region146: #{tpu_custom_call.1} parent=121 // pred_fallthru
          _
        %p2394 = scmp.eq.s32.totalorder %s35, 2
        %p2395 = pnand %p2394, %p1761
        %p2396 = pneg %p2395
        // Predicated region
        $region151: #{tpu_custom_call.1} parent=121 // pred_check
          _
        $region152: #{tpu_custom_call.1} parent=121 // pred_check_branch
          %2398 = sbr.rel (%p2395) target = $region154
        $region153: #{tpu_custom_call.1} parent=121 // pred_region
          %v2399 = vld [vmem:[#allocation4] sm:$0x1]
          %v2400 = vmul.f32 %v2399, 0.0033333334
          %v2401 = vld [vmem:[#allocation4 + $0x1] sm:$0x1]
          %v2402 = vmul.f32 %v2401, 0.0033333334
          %v2403 = vmul.f32 %v2400, %v2400
          %v2404 = vsub.f32 %v2402, %v2403
          %v2405 = vadd.f32 %v2404, 1e-05
          %v2406 = vrsqrt.pop %v2405
          %v2407 = vld [vmem:[%s847] sm:$0x1]
          %v2408 = vmul.f32 %v2406, %v2407
          %v2409 = vld [vmem:[%s850] sm:$0x1]
          %v2410 = vmul.f32 %v2400, %v2408
          %v2411 = vsub.f32 %v2409, %v2410
          %2412 = vst [vmem:[#allocation5] sm:$0x1] %v2408
          %2413 = vst [vmem:[#allocation5 + $0x1] sm:$0x1] %v2411
          %2414 = vst [vmem:[#allocation4] sm:$0x3] 0.0
          %p2415 = scmp.eq.s32.totalorder %s34, 1
          // Predicated region
          $region155: #{tpu_custom_call.1} parent=153 // pred_check
            %p2416 = pneg %p2415
          $region156: #{tpu_custom_call.1} parent=153 // pred_check_branch
            %2418 = sbr.rel (%p2416) target = $region158
          $region157: #{tpu_custom_call.1} parent=153 // pred_region
            %v2419 = vld [vmem:[#allocation6] sm:$0xff]
            %v2420 = vlaneseq
            %v2421 = vshrl.u32 %v2420, 7
            %v2422 = vsub.s32 0, %v2421
            %v2423 = vrot.slane %v2408, %v2422
            %v2424 = vmul.f32 %v2419, %v2423
            %v2426 = vlaneseq
            %v2427 = vshrl.u32 %v2426, 7
            %v2428 = vsub.s32 0, %v2427
            %v2429 = vrot.slane %v2411, %v2428
            %v2431 = vadd.f32 %v2424, %v2429
            %v2432 = vld [vmem:[%s15] sm:$0xff]
            %v2433 = vld [vmem:[%s15 + $0x8] sm:$0xff]
            %v2434 = vld [vmem:[%s15 + $0x10] sm:$0xff]
            %v2435 = vld [vmem:[%s15 + $0x18] sm:$0xff]
            %v2436 = vld [vmem:[%s15 + $0x20] sm:$0xff]
            %v2437 = vld [vmem:[%s15 + $0x28] sm:$0xff]
            %v2438 = vld [vmem:[%s15 + $0x30] sm:$0xff]
            %v2439 = vld [vmem:[%s15 + $0x38] sm:$0xff]
            %v2440 = vld [vmem:[%s15 + $0x40] sm:$0xff]
            %v2441 = vld [vmem:[%s15 + $0x48] sm:$0xff]
            %v2442 = vld [vmem:[%s15 + $0x50] sm:$0xff]
            %v2443 = vld [vmem:[%s15 + $0x58] sm:$0xff]
            %v2444 = vld [vmem:[%s15 + $0x60] sm:$0xff]
            %v2445 = vld [vmem:[%s15 + $0x68] sm:$0xff]
            %v2446 = vld [vmem:[%s15 + $0x70] sm:$0xff]
            %v2447 = vld [vmem:[%s15 + $0x78] sm:$0xff]
            %v2448 = vld [vmem:[%s16] sm:$0x1]
            %v2450 = vlaneseq
            %v2451 = vshrl.u32 %v2450, 7
            %v2452 = vsub.s32 0, %v2451
            %v2453 = vrot.slane %v2448, %v2452
            %2455 = vmatprep.subr.mxu0 0.0
            %2456 = vmatpush1.msra.mxu0 %v2432
            %2457 = vmatprep.subr.mxu0 0.0
            %2458 = vmatpush1.msra.mxu0 %v2433
            %2459 = vmatprep.subr.mxu0 0.0
            %2460 = vmatpush1.msra.mxu0 %v2434
            %2461 = vmatprep.subr.mxu0 0.0
            %2462 = vmatpush1.msra.mxu0 %v2435
            %2463 = vmatprep.subr.mxu0 0.0
            %2464 = vmatpush1.msra.mxu0 %v2436
            %2465 = vmatprep.subr.mxu0 0.0
            %2466 = vmatpush1.msra.mxu0 %v2437
            %2467 = vmatprep.subr.mxu0 0.0
            %2468 = vmatpush1.msra.mxu0 %v2438
            %2469 = vmatprep.subr.mxu0 0.0
            %2470 = vmatpush1.msra.mxu0 %v2439
            %2471 = vmatprep.subr.mxu0 0.0
            %2472 = vmatpush1.msra.mxu0 %v2440
            %2473 = vmatprep.subr.mxu0 0.0
            %2474 = vmatpush1.msra.mxu0 %v2441
            %2475 = vmatprep.subr.mxu0 0.0
            %2476 = vmatpush1.msra.mxu0 %v2442
            %2477 = vmatprep.subr.mxu0 0.0
            %2478 = vmatpush1.msra.mxu0 %v2443
            %2479 = vmatprep.subr.mxu0 0.0
            %2480 = vmatpush1.msra.mxu0 %v2444
            %2481 = vmatprep.subr.mxu0 0.0
            %2482 = vmatpush1.msra.mxu0 %v2445
            %2483 = vmatprep.subr.mxu0 0.0
            %2484 = vmatpush1.msra.mxu0 %v2446
            %2485 = vmatprep.subr.mxu0 0.0
            %2486 = vmatpush1.msra.mxu0 %v2447
            %2487 = vmatprep.subr.mxu0 0.0
            %2488 = vmatpush1.msra.mxu0 0.0
            %2489 = vmatprep.subr.mxu0 0.0
            %2490 = vmatpush1.msra.mxu0 0.0
            %2491 = vmatprep.subr.mxu0 0.0
            %2492 = vmatpush1.msra.mxu0 0.0
            %2493 = vmatprep.subr.mxu0 0.0
            %2494 = vmatpush1.msra.mxu0 0.0
            %2495 = vmatprep.subr.mxu0 0.0
            %2496 = vmatpush1.msra.mxu0 0.0
            %2497 = vmatprep.subr.mxu0 0.0
            %2498 = vmatpush1.msra.mxu0 0.0
            %2499 = vmatprep.subr.mxu0 0.0
            %2500 = vmatpush1.msra.mxu0 0.0
            %2501 = vmatprep.subr.mxu0 0.0
            %2502 = vmatpush1.msra.mxu0 0.0
            %2503 = vmatprep.subr.mxu0 0.0
            %2504 = vmatpush1.msra.mxu0 0.0
            %2505 = vmatprep.subr.mxu0 0.0
            %2506 = vmatpush1.msra.mxu0 0.0
            %2507 = vmatprep.subr.mxu0 0.0
            %2508 = vmatpush1.msra.mxu0 0.0
            %2509 = vmatprep.subr.mxu0 0.0
            %2510 = vmatpush1.msra.mxu0 0.0
            %2511 = vmatprep.subr.mxu0 0.0
            %2512 = vmatpush1.msra.mxu0 0.0
            %2513 = vmatprep.subr.mxu0 0.0
            %2514 = vmatpush1.msra.mxu0 0.0
            %2515 = vmatprep.subr.mxu0 0.0
            %2516 = vmatpush1.msra.mxu0 0.0
            %2517 = vmatprep.subr.mxu0 0.0
            %2518 = vmatpush1.msra.mxu0 0.0
            %2519 = vmatprep.mubr.f32.mxu0 0.0
            %2520 = vmatmul.mubr.f32.gmra.mrb[0].mxu0 %v2431
            %v2521 = vpop.f32.mrb[0].mxu0
            %v2522 = vadd.f32 %v2453, %v2521
            %v2523 = vpop.f32.mrb[0].mxu0
            %2524 = vdwg.mxu0
            %2525 = vst [vmem:[#allocation8] sm:$0xff] %v2522
          $region158: #{tpu_custom_call.1} parent=153 // pred_fallthru
            _
        $region154: #{tpu_custom_call.1} parent=121 // pred_fallthru
          _
        // Predicated region
        $region159: #{tpu_custom_call.1} parent=121 // pred_check
          %p2526 = pneg %p495
        $region160: #{tpu_custom_call.1} parent=121 // pred_check_branch
          %2528 = sbr.rel (%p2526) target = $region162
        $region161: #{tpu_custom_call.1} parent=121 // pred_region
          %s2530 = ssub.s32 128, 128
          %2531 = vsyncadd [#allocation9], %s2530
          %s2533 = sshll.u32 [#allocation8], 4
          %s2534 = int_to_ptr.vmem [resolvable:$true] %s2533
          %2536 = dma.vmem_to_hbm [thread:$0]  %s2534, 128, %s17, [#allocation9]
        $region162: #{tpu_custom_call.1} parent=121 // pred_fallthru
          _
        // Predicated region
        $region163: #{tpu_custom_call.1} parent=121 // pred_check
          %p2537 = pneg %p495
        $region164: #{tpu_custom_call.1} parent=121 // pred_check_branch
          %2539 = sbr.rel (%p2537) target = $region166
        $region165: #{tpu_custom_call.1} parent=121 // pred_region
          %2540 = dma.done [#allocation9], 128
        $region166: #{tpu_custom_call.1} parent=121 // pred_fallthru
          _
      $region122: #{tpu_custom_call.1} parent=5 // pred_fallthru
        _
      %p2541 = scmp.le.s32.totalorder 2, %s24
      // Predicated region
      $region167: #{tpu_custom_call.1} parent=5 // pred_check
        %p2542 = pneg %p2541
      $region168: #{tpu_custom_call.1} parent=5 // pred_check_branch
        %2544 = sbr.rel (%p2542) target = $region170
      $region169: #{tpu_custom_call.1} parent=5 // pred_region
        %s2545 = ssub.s32 %s24, 2
      $region170: #{tpu_custom_call.1} parent=5 // pred_fallthru
        _
    $region6: #{tpu_custom_call.1} parent=1 // loop_footer
      %s28 = sadd.s32 1, %s24
    $region7: #{tpu_custom_call.1} parent=1 // loop_footer_branch
      %23 = sbr.rel target = $region3
    $region8: #{tpu_custom_call.1} parent=1 // loop_exit
      _
    %2546 = vsyncpa [#allocation9], 1
    %s2547 = scalar_lea.sflag [#allocation9], 1
    %2548 = vsyncpa %s2547, 1

</llo_original>
